<compile_context>
chip_gen: v7x
topology: tpu7x:2x2x1
jax: 0.10.0
libtpu: 0.0.40
codegen_flags: <defaults>
</compile_context>

<pallas_src>
import jax
import jax.numpy as jnp
from jax import lax
from jax.experimental import pallas as pl
from jax.experimental.pallas import tpu as pltpu

INPUT_SIZE = 50      # window_size in the PyTorch script
HIDDEN_SIZE = 64
OUTPUT_SIZE = 1
NUM_LAYERS = 2


# ---------------------------------------------------------------------------
# Fused kernel: LSTM layer 0 -> LSTM layer 1 -> Linear, all in one invocation
# ---------------------------------------------------------------------------
def _lstm_cell(gates_pre, h, c, whh, H):
    """One LSTM cell step. gates_pre already contains x@W_ih^T + (b_ih+b_hh)."""
    gates = gates_pre + jnp.dot(h, whh, preferred_element_type=jnp.float32)
    i_g = jax.nn.sigmoid(gates[:, 0 * H:1 * H])
    f_g = jax.nn.sigmoid(gates[:, 1 * H:2 * H])
    g_g = jnp.tanh(gates[:, 2 * H:3 * H])
    o_g = jax.nn.sigmoid(gates[:, 3 * H:4 * H])
    c_new = f_g * c + i_g * g_g
    h_new = o_g * jnp.tanh(c_new)
    return h_new, c_new


def _fused_lstm_fc_kernel(x_ref, wih0_ref, whh0_ref, b0_ref,
                          wih1_ref, whh1_ref, b1_ref,
                          wfc_ref, bfc_ref, out_ref):
    """
    x_ref   : (S, B, D)   full input sequence (time-major)
    wih*_ref: (Din, 4H)   W_ih^T   (gate order i, f, g, o — PyTorch convention)
    whh*_ref: (H, 4H)     W_hh^T
    b*_ref  : (1, 4H)     b_ih + b_hh
    wfc_ref : (H, O)      W_fc^T
    bfc_ref : (1, O)      b_fc
    out_ref : (S, B, O)   per-timestep FC output
    """
    S, B, _ = x_ref.shape
    H = whh0_ref.shape[0]

    # Read all operands once (weights/bias hoisted above the recurrence).
    x = x_ref[...]
    wih0, whh0, b0 = wih0_ref[...], whh0_ref[...], b0_ref[...]
    wih1, whh1, b1 = wih1_ref[...], whh1_ref[...], b1_ref[...]
    wfc, bfc = wfc_ref[...], bfc_ref[...]

    # ---- Layer 0: input projection for ALL timesteps in one MXU GEMM ----
    g0 = jnp.einsum('sbd,dg->sbg', x, wih0,
                    preferred_element_type=jnp.float32) + b0      # (S, B, 4H)

    h = jnp.zeros((B, H), jnp.float32)
    c = jnp.zeros((B, H), jnp.float32)
    h0_seq = []
    for t in range(S):                    # static unroll; S is small & known
        h, c = _lstm_cell(g0[t], h, c, whh0, H)
        h0_seq.append(h)
    h0_all = jnp.stack(h0_seq, axis=0)                            # (S, B, H)

    # ---- Layer 1: its input projection also runs in one shot ----
    g1 = jnp.einsum('sbh,hg->sbg', h0_all, wih1,
                    preferred_element_type=jnp.float32) + b1      # (S, B, 4H)

    h = jnp.zeros((B, H), jnp.float32)
    c = jnp.zeros((B, H), jnp.float32)
    h1_seq = []
    for t in range(S):
        h, c = _lstm_cell(g1[t], h, c, whh1, H)
        h1_seq.append(h)
    h1_all = jnp.stack(h1_seq, axis=0)                            # (S, B, H)

    # ---- FC epilogue (single small store at the end) ----
    y = jnp.einsum('sbh,ho->sbo', h1_all, wfc,
                   preferred_element_type=jnp.float32) + bfc      # (S, B, O)
    out_ref[...] = y.astype(out_ref.dtype)


# ---------------------------------------------------------------------------
# Wrapper
# ---------------------------------------------------------------------------
@jax.jit
def lstm_model_forward(x, params):
    """x: (B, S, input_size) float -> (B, S, 1). Matches the PyTorch module."""
    B, S, _ = x.shape
    H = HIDDEN_SIZE
    x_sbd = jnp.swapaxes(x, 0, 1).astype(jnp.float32)             # (S, B, D)

    def prep(l):
        wih = jnp.transpose(params[f"w_ih_l{l}"]).astype(jnp.float32)   # (Din, 4H)
        whh = jnp.transpose(params[f"w_hh_l{l}"]).astype(jnp.float32)   # (H, 4H)
        b = (params[f"b_ih_l{l}"] + params[f"b_hh_l{l}"]
             ).reshape(1, 4 * H).astype(jnp.float32)
        return wih, whh, b

    wih0, whh0, b0 = prep(0)
    wih1, whh1, b1 = prep(1)
    wfc = jnp.transpose(params["w_fc"]).astype(jnp.float32)       # (H, O)
    bfc = params["b_fc"].reshape(1, OUTPUT_SIZE).astype(jnp.float32)

    # Single kernel invocation, grid=(), whole arrays resident in VMEM
    # (total working set << VMEM on v5e/v6e/v7x).
    y_sbo = pl.pallas_call(
        _fused_lstm_fc_kernel,
        out_shape=jax.ShapeDtypeStruct((S, B, OUTPUT_SIZE), jnp.float32),
        compiler_params=pltpu.CompilerParams(
            vmem_limit_bytes=32 * 1024 * 1024),
    )(x_sbd, wih0, whh0, b0, wih1, whh1, b1, wfc, bfc)

    return jnp.swapaxes(y_sbo, 0, 1)                              # (B, S, O)


# ---------------------------------------------------------------------------
# Pure-JAX reference (for correctness check)
# ---------------------------------------------------------------------------
def _lstm_layer_ref(x_bsd, w_ih, w_hh, b_ih, b_hh):
    B = x_bsd.shape[0]
    H = w_hh.shape[1]

    def step(carry, x_t):
        h, c = carry
        g = x_t @ w_ih.T + h @ w_hh.T + b_ih + b_hh
        i, f, gg, o = jnp.split(g, 4, axis=-1)
        i, f, o = jax.nn.sigmoid(i), jax.nn.sigmoid(f), jax.nn.sigmoid(o)
        gg = jnp.tanh(gg)
        c = f * c + i * gg
        h = o * jnp.tanh(c)
        return (h, c), h

    x_sbd = jnp.swapaxes(x_bsd, 0, 1)
    (_, _), hs = lax.scan(step, (jnp.zeros((B, H)), jnp.zeros((B, H))), x_sbd)
    return jnp.swapaxes(hs, 0, 1)


def lstm_model_ref(x, params):
    h = x.astype(jnp.float32)
    for l in range(NUM_LAYERS):
        h = _lstm_layer_ref(h, params[f"w_ih_l{l}"], params[f"w_hh_l{l}"],
                            params[f"b_ih_l{l}"], params[f"b_hh_l{l}"])
    return h @ params["w_fc"].T + params["b_fc"]


# ---------------------------------------------------------------------------
# Parameter init (deterministic, PyTorch-style uniform(-1/sqrt(H), 1/sqrt(H)))
# ---------------------------------------------------------------------------
def init_params(key):
    k = 1.0 / jnp.sqrt(HIDDEN_SIZE)
    params = {}
    for l in range(NUM_LAYERS):
        in_dim = INPUT_SIZE if l == 0 else HIDDEN_SIZE
        key, k1, k2, k3, k4 = jax.random.split(key, 5)
        params[f"w_ih_l{l}"] = jax.random.uniform(
            k1, (4 * HIDDEN_SIZE, in_dim), jnp.float32, -k, k)
        params[f"w_hh_l{l}"] = jax.random.uniform(
            k2, (4 * HIDDEN_SIZE, HIDDEN_SIZE), jnp.float32, -k, k)
        params[f"b_ih_l{l}"] = jax.random.uniform(
            k3, (4 * HIDDEN_SIZE,), jnp.float32, -k, k)
        params[f"b_hh_l{l}"] = jax.random.uniform(
            k4, (4 * HIDDEN_SIZE,), jnp.float32, -k, k)
    key, k5, k6 = jax.random.split(key, 3)
    params["w_fc"] = jax.random.uniform(
        k5, (OUTPUT_SIZE, HIDDEN_SIZE), jnp.float32, -k, k)
    params["b_fc"] = jax.random.uniform(
        k6, (OUTPUT_SIZE,), jnp.float32, -k, k)
    return params


if __name__ == "__main__":
    key = jax.random.PRNGKey(0)
    key, pkey, xkey = jax.random.split(key, 3)
    params = init_params(pkey)

    batch, seq = 2, 8
    x = jax.random.normal(xkey, (batch, seq, INPUT_SIZE), jnp.float32)

    out = lstm_model_forward(x, params)
    out = jax.block_until_ready(out)

    ref = jax.block_until_ready(lstm_model_ref(x, params))
    assert out.shape == (batch, seq, OUTPUT_SIZE)
    assert jnp.max(jnp.abs(out - ref)) < 1e-4, "mismatch vs reference"

    print("KERNEL_OK")
</pallas_src>

<mosaic_0001>
module attributes {stable_mosaic.version = 11 : i64} {
  func.func @_fused_lstm_fc_kernel(%arg0: memref<8x2x50xf32, #tpu.memory_space<vmem>>, %arg1: memref<50x256xf32, #tpu.memory_space<vmem>>, %arg2: memref<64x256xf32, #tpu.memory_space<vmem>>, %arg3: memref<1x256xf32, #tpu.memory_space<vmem>>, %arg4: memref<64x256xf32, #tpu.memory_space<vmem>>, %arg5: memref<64x256xf32, #tpu.memory_space<vmem>>, %arg6: memref<1x256xf32, #tpu.memory_space<vmem>>, %arg7: memref<64x1xf32, #tpu.memory_space<vmem>>, %arg8: memref<1x1xf32, #tpu.memory_space<vmem>>, %arg9: memref<8x2x1xf32, #tpu.memory_space<vmem>>) attributes {dimension_semantics = [], scalar_prefetch = 0 : i64, scratch_operands = 0 : i64, tpu.core_type = #tpu.core_type<tc>} {
    %c0 = arith.constant 0 : index
    %c0_0 = arith.constant 0 : index
    %c0_1 = arith.constant 0 : index
    %0 = vector.load %arg0[%c0, %c0_0, %c0_1] : memref<8x2x50xf32, #tpu.memory_space<vmem>>, vector<8x2x50xf32>
    %c0_2 = arith.constant 0 : index
    %c0_3 = arith.constant 0 : index
    %1 = vector.load %arg1[%c0_2, %c0_3] : memref<50x256xf32, #tpu.memory_space<vmem>>, vector<50x256xf32>
    %c0_4 = arith.constant 0 : index
    %c0_5 = arith.constant 0 : index
    %2 = vector.load %arg2[%c0_4, %c0_5] : memref<64x256xf32, #tpu.memory_space<vmem>>, vector<64x256xf32>
    %c0_6 = arith.constant 0 : index
    %c0_7 = arith.constant 0 : index
    %3 = vector.load %arg3[%c0_6, %c0_7] : memref<1x256xf32, #tpu.memory_space<vmem>>, vector<1x256xf32>
    %c0_8 = arith.constant 0 : index
    %c0_9 = arith.constant 0 : index
    %4 = vector.load %arg4[%c0_8, %c0_9] : memref<64x256xf32, #tpu.memory_space<vmem>>, vector<64x256xf32>
    %c0_10 = arith.constant 0 : index
    %c0_11 = arith.constant 0 : index
    %5 = vector.load %arg5[%c0_10, %c0_11] : memref<64x256xf32, #tpu.memory_space<vmem>>, vector<64x256xf32>
    %c0_12 = arith.constant 0 : index
    %c0_13 = arith.constant 0 : index
    %6 = vector.load %arg6[%c0_12, %c0_13] : memref<1x256xf32, #tpu.memory_space<vmem>>, vector<1x256xf32>
    %c0_14 = arith.constant 0 : index
    %c0_15 = arith.constant 0 : index
    %7 = vector.load %arg7[%c0_14, %c0_15] : memref<64x1xf32, #tpu.memory_space<vmem>>, vector<64x1xf32>
    %c0_16 = arith.constant 0 : index
    %c0_17 = arith.constant 0 : index
    %8 = vector.load %arg8[%c0_16, %c0_17] : memref<1x1xf32, #tpu.memory_space<vmem>>, vector<1x1xf32>
    "tpu.trace_start"() <{level = 10 : i32, message = "sbd,dg->sbg"}> : () -> ()
    %cst = arith.constant dense<0.000000e+00> : vector<8x2x256xf32>
    %9 = tpu.matmul %0, %1, %cst {dimension_numbers = #tpu.dot_dimension_numbers<[2], [0], [0, 1], [1], [0, 0, 0, 1, 1, 1], [], []>} : vector<8x2x50xf32>, vector<50x256xf32>, vector<8x2x256xf32> -> vector<8x2x256xf32>
    "tpu.trace_stop"() : () -> ()
    %10 = vector.shape_cast %3 : vector<1x256xf32> to vector<1x1x256xf32>
    %11 = vector.broadcast %10 : vector<1x1x256xf32> to vector<8x2x256xf32>
    %12 = arith.addf %9, %11 : vector<8x2x256xf32>
    %cst_18 = arith.constant 0.000000e+00 : f32
    %13 = vector.broadcast %cst_18 : f32 to vector<2x64xf32>
    %cst_19 = arith.constant 0.000000e+00 : f32
    %14 = vector.broadcast %cst_19 : f32 to vector<2x64xf32>
    %15 = vector.extract_strided_slice %12 {offsets = [0, 0, 0], sizes = [1, 2, 256], strides = [1, 1, 1]} : vector<8x2x256xf32> to vector<1x2x256xf32>
    %16 = vector.shape_cast %15 : vector<1x2x256xf32> to vector<2x256xf32>
    %cst_20 = arith.constant dense<0.000000e+00> : vector<2x256xf32>
    %17 = tpu.matmul %13, %2, %cst_20 {dimension_numbers = #tpu.dot_dimension_numbers<[1], [0], [0], [1], [0, 0, 1, 1], [], []>} : vector<2x64xf32>, vector<64x256xf32>, vector<2x256xf32> -> vector<2x256xf32>
    %18 = arith.addf %16, %17 : vector<2x256xf32>
    %19 = vector.extract_strided_slice %18 {offsets = [0, 0], sizes = [2, 64], strides = [1, 1]} : vector<2x256xf32> to vector<2x64xf32>
    %20 = arith.negf %19 : vector<2x64xf32>
    %21 = math.exp %20 : vector<2x64xf32>
    %cst_21 = arith.constant 1.000000e+00 : f32
    %22 = vector.broadcast %cst_21 : f32 to vector<2x64xf32>
    %23 = arith.addf %22, %21 : vector<2x64xf32>
    %24 = arith.divf %22, %23 : vector<2x64xf32>
    %25 = vector.extract_strided_slice %18 {offsets = [0, 64], sizes = [2, 64], strides = [1, 1]} : vector<2x256xf32> to vector<2x64xf32>
    %26 = arith.negf %25 : vector<2x64xf32>
    %27 = math.exp %26 : vector<2x64xf32>
    %cst_22 = arith.constant 1.000000e+00 : f32
    %28 = vector.broadcast %cst_22 : f32 to vector<2x64xf32>
    %29 = arith.addf %28, %27 : vector<2x64xf32>
    %30 = arith.divf %28, %29 : vector<2x64xf32>
    %31 = vector.extract_strided_slice %18 {offsets = [0, 128], sizes = [2, 64], strides = [1, 1]} : vector<2x256xf32> to vector<2x64xf32>
    %32 = math.tanh %31 : vector<2x64xf32>
    %33 = vector.extract_strided_slice %18 {offsets = [0, 192], sizes = [2, 64], strides = [1, 1]} : vector<2x256xf32> to vector<2x64xf32>
    %34 = arith.negf %33 : vector<2x64xf32>
    %35 = math.exp %34 : vector<2x64xf32>
    %cst_23 = arith.constant 1.000000e+00 : f32
    %36 = vector.broadcast %cst_23 : f32 to vector<2x64xf32>
    %37 = arith.addf %36, %35 : vector<2x64xf32>
    %38 = arith.divf %36, %37 : vector<2x64xf32>
    %39 = arith.mulf %30, %14 : vector<2x64xf32>
    %40 = arith.mulf %24, %32 : vector<2x64xf32>
    %41 = arith.addf %39, %40 : vector<2x64xf32>
    %42 = math.tanh %41 : vector<2x64xf32>
    %43 = arith.mulf %38, %42 : vector<2x64xf32>
    %44 = vector.extract_strided_slice %12 {offsets = [1, 0, 0], sizes = [1, 2, 256], strides = [1, 1, 1]} : vector<8x2x256xf32> to vector<1x2x256xf32>
    %45 = vector.shape_cast %44 : vector<1x2x256xf32> to vector<2x256xf32>
    %cst_24 = arith.constant dense<0.000000e+00> : vector<2x256xf32>
    %46 = tpu.matmul %43, %2, %cst_24 {dimension_numbers = #tpu.dot_dimension_numbers<[1], [0], [0], [1], [0, 0, 1, 1], [], []>} : vector<2x64xf32>, vector<64x256xf32>, vector<2x256xf32> -> vector<2x256xf32>
    %47 = arith.addf %45, %46 : vector<2x256xf32>
    %48 = vector.extract_strided_slice %47 {offsets = [0, 0], sizes = [2, 64], strides = [1, 1]} : vector<2x256xf32> to vector<2x64xf32>
    %49 = arith.negf %48 : vector<2x64xf32>
    %50 = math.exp %49 : vector<2x64xf32>
    %cst_25 = arith.constant 1.000000e+00 : f32
    %51 = vector.broadcast %cst_25 : f32 to vector<2x64xf32>
    %52 = arith.addf %51, %50 : vector<2x64xf32>
    %53 = arith.divf %51, %52 : vector<2x64xf32>
    %54 = vector.extract_strided_slice %47 {offsets = [0, 64], sizes = [2, 64], strides = [1, 1]} : vector<2x256xf32> to vector<2x64xf32>
    %55 = arith.negf %54 : vector<2x64xf32>
    %56 = math.exp %55 : vector<2x64xf32>
    %cst_26 = arith.constant 1.000000e+00 : f32
    %57 = vector.broadcast %cst_26 : f32 to vector<2x64xf32>
    %58 = arith.addf %57, %56 : vector<2x64xf32>
    %59 = arith.divf %57, %58 : vector<2x64xf32>
    %60 = vector.extract_strided_slice %47 {offsets = [0, 128], sizes = [2, 64], strides = [1, 1]} : vector<2x256xf32> to vector<2x64xf32>
    %61 = math.tanh %60 : vector<2x64xf32>
    %62 = vector.extract_strided_slice %47 {offsets = [0, 192], sizes = [2, 64], strides = [1, 1]} : vector<2x256xf32> to vector<2x64xf32>
    %63 = arith.negf %62 : vector<2x64xf32>
    %64 = math.exp %63 : vector<2x64xf32>
    %cst_27 = arith.constant 1.000000e+00 : f32
    %65 = vector.broadcast %cst_27 : f32 to vector<2x64xf32>
    %66 = arith.addf %65, %64 : vector<2x64xf32>
    %67 = arith.divf %65, %66 : vector<2x64xf32>
    %68 = arith.mulf %59, %41 : vector<2x64xf32>
    %69 = arith.mulf %53, %61 : vector<2x64xf32>
    %70 = arith.addf %68, %69 : vector<2x64xf32>
    %71 = math.tanh %70 : vector<2x64xf32>
    %72 = arith.mulf %67, %71 : vector<2x64xf32>
    %73 = vector.extract_strided_slice %12 {offsets = [2, 0, 0], sizes = [1, 2, 256], strides = [1, 1, 1]} : vector<8x2x256xf32> to vector<1x2x256xf32>
    %74 = vector.shape_cast %73 : vector<1x2x256xf32> to vector<2x256xf32>
    %cst_28 = arith.constant dense<0.000000e+00> : vector<2x256xf32>
    %75 = tpu.matmul %72, %2, %cst_28 {dimension_numbers = #tpu.dot_dimension_numbers<[1], [0], [0], [1], [0, 0, 1, 1], [], []>} : vector<2x64xf32>, vector<64x256xf32>, vector<2x256xf32> -> vector<2x256xf32>
    %76 = arith.addf %74, %75 : vector<2x256xf32>
    %77 = vector.extract_strided_slice %76 {offsets = [0, 0], sizes = [2, 64], strides = [1, 1]} : vector<2x256xf32> to vector<2x64xf32>
    %78 = arith.negf %77 : vector<2x64xf32>
    %79 = math.exp %78 : vector<2x64xf32>
    %cst_29 = arith.constant 1.000000e+00 : f32
    %80 = vector.broadcast %cst_29 : f32 to vector<2x64xf32>
    %81 = arith.addf %80, %79 : vector<2x64xf32>
    %82 = arith.divf %80, %81 : vector<2x64xf32>
    %83 = vector.extract_strided_slice %76 {offsets = [0, 64], sizes = [2, 64], strides = [1, 1]} : vector<2x256xf32> to vector<2x64xf32>
    %84 = arith.negf %83 : vector<2x64xf32>
    %85 = math.exp %84 : vector<2x64xf32>
    %cst_30 = arith.constant 1.000000e+00 : f32
    %86 = vector.broadcast %cst_30 : f32 to vector<2x64xf32>
    %87 = arith.addf %86, %85 : vector<2x64xf32>
    %88 = arith.divf %86, %87 : vector<2x64xf32>
    %89 = vector.extract_strided_slice %76 {offsets = [0, 128], sizes = [2, 64], strides = [1, 1]} : vector<2x256xf32> to vector<2x64xf32>
    %90 = math.tanh %89 : vector<2x64xf32>
    %91 = vector.extract_strided_slice %76 {offsets = [0, 192], sizes = [2, 64], strides = [1, 1]} : vector<2x256xf32> to vector<2x64xf32>
    %92 = arith.negf %91 : vector<2x64xf32>
    %93 = math.exp %92 : vector<2x64xf32>
    %cst_31 = arith.constant 1.000000e+00 : f32
    %94 = vector.broadcast %cst_31 : f32 to vector<2x64xf32>
    %95 = arith.addf %94, %93 : vector<2x64xf32>
    %96 = arith.divf %94, %95 : vector<2x64xf32>
    %97 = arith.mulf %88, %70 : vector<2x64xf32>
    %98 = arith.mulf %82, %90 : vector<2x64xf32>
    %99 = arith.addf %97, %98 : vector<2x64xf32>
    %100 = math.tanh %99 : vector<2x64xf32>
    %101 = arith.mulf %96, %100 : vector<2x64xf32>
    %102 = vector.extract_strided_slice %12 {offsets = [3, 0, 0], sizes = [1, 2, 256], strides = [1, 1, 1]} : vector<8x2x256xf32> to vector<1x2x256xf32>
    %103 = vector.shape_cast %102 : vector<1x2x256xf32> to vector<2x256xf32>
    %cst_32 = arith.constant dense<0.000000e+00> : vector<2x256xf32>
    %104 = tpu.matmul %101, %2, %cst_32 {dimension_numbers = #tpu.dot_dimension_numbers<[1], [0], [0], [1], [0, 0, 1, 1], [], []>} : vector<2x64xf32>, vector<64x256xf32>, vector<2x256xf32> -> vector<2x256xf32>
    %105 = arith.addf %103, %104 : vector<2x256xf32>
    %106 = vector.extract_strided_slice %105 {offsets = [0, 0], sizes = [2, 64], strides = [1, 1]} : vector<2x256xf32> to vector<2x64xf32>
    %107 = arith.negf %106 : vector<2x64xf32>
    %108 = math.exp %107 : vector<2x64xf32>
    %cst_33 = arith.constant 1.000000e+00 : f32
    %109 = vector.broadcast %cst_33 : f32 to vector<2x64xf32>
    %110 = arith.addf %109, %108 : vector<2x64xf32>
    %111 = arith.divf %109, %110 : vector<2x64xf32>
    %112 = vector.extract_strided_slice %105 {offsets = [0, 64], sizes = [2, 64], strides = [1, 1]} : vector<2x256xf32> to vector<2x64xf32>
    %113 = arith.negf %112 : vector<2x64xf32>
    %114 = math.exp %113 : vector<2x64xf32>
    %cst_34 = arith.constant 1.000000e+00 : f32
    %115 = vector.broadcast %cst_34 : f32 to vector<2x64xf32>
    %116 = arith.addf %115, %114 : vector<2x64xf32>
    %117 = arith.divf %115, %116 : vector<2x64xf32>
    %118 = vector.extract_strided_slice %105 {offsets = [0, 128], sizes = [2, 64], strides = [1, 1]} : vector<2x256xf32> to vector<2x64xf32>
    %119 = math.tanh %118 : vector<2x64xf32>
    %120 = vector.extract_strided_slice %105 {offsets = [0, 192], sizes = [2, 64], strides = [1, 1]} : vector<2x256xf32> to vector<2x64xf32>
    %121 = arith.negf %120 : vector<2x64xf32>
    %122 = math.exp %121 : vector<2x64xf32>
    %cst_35 = arith.constant 1.000000e+00 : f32
    %123 = vector.broadcast %cst_35 : f32 to vector<2x64xf32>
    %124 = arith.addf %123, %122 : vector<2x64xf32>
    %125 = arith.divf %123, %124 : vector<2x64xf32>
    %126 = arith.mulf %117, %99 : vector<2x64xf32>
    %127 = arith.mulf %111, %119 : vector<2x64xf32>
    %128 = arith.addf %126, %127 : vector<2x64xf32>
    %129 = math.tanh %128 : vector<2x64xf32>
    %130 = arith.mulf %125, %129 : vector<2x64xf32>
    %131 = vector.extract_strided_slice %12 {offsets = [4, 0, 0], sizes = [1, 2, 256], strides = [1, 1, 1]} : vector<8x2x256xf32> to vector<1x2x256xf32>
    %132 = vector.shape_cast %131 : vector<1x2x256xf32> to vector<2x256xf32>
    %cst_36 = arith.constant dense<0.000000e+00> : vector<2x256xf32>
    %133 = tpu.matmul %130, %2, %cst_36 {dimension_numbers = #tpu.dot_dimension_numbers<[1], [0], [0], [1], [0, 0, 1, 1], [], []>} : vector<2x64xf32>, vector<64x256xf32>, vector<2x256xf32> -> vector<2x256xf32>
    %134 = arith.addf %132, %133 : vector<2x256xf32>
    %135 = vector.extract_strided_slice %134 {offsets = [0, 0], sizes = [2, 64], strides = [1, 1]} : vector<2x256xf32> to vector<2x64xf32>
    %136 = arith.negf %135 : vector<2x64xf32>
    %137 = math.exp %136 : vector<2x64xf32>
    %cst_37 = arith.constant 1.000000e+00 : f32
    %138 = vector.broadcast %cst_37 : f32 to vector<2x64xf32>
    %139 = arith.addf %138, %137 : vector<2x64xf32>
    %140 = arith.divf %138, %139 : vector<2x64xf32>
    %141 = vector.extract_strided_slice %134 {offsets = [0, 64], sizes = [2, 64], strides = [1, 1]} : vector<2x256xf32> to vector<2x64xf32>
    %142 = arith.negf %141 : vector<2x64xf32>
    %143 = math.exp %142 : vector<2x64xf32>
    %cst_38 = arith.constant 1.000000e+00 : f32
    %144 = vector.broadcast %cst_38 : f32 to vector<2x64xf32>
    %145 = arith.addf %144, %143 : vector<2x64xf32>
    %146 = arith.divf %144, %145 : vector<2x64xf32>
    %147 = vector.extract_strided_slice %134 {offsets = [0, 128], sizes = [2, 64], strides = [1, 1]} : vector<2x256xf32> to vector<2x64xf32>
    %148 = math.tanh %147 : vector<2x64xf32>
    %149 = vector.extract_strided_slice %134 {offsets = [0, 192], sizes = [2, 64], strides = [1, 1]} : vector<2x256xf32> to vector<2x64xf32>
    %150 = arith.negf %149 : vector<2x64xf32>
    %151 = math.exp %150 : vector<2x64xf32>
    %cst_39 = arith.constant 1.000000e+00 : f32
    %152 = vector.broadcast %cst_39 : f32 to vector<2x64xf32>
    %153 = arith.addf %152, %151 : vector<2x64xf32>
    %154 = arith.divf %152, %153 : vector<2x64xf32>
    %155 = arith.mulf %146, %128 : vector<2x64xf32>
    %156 = arith.mulf %140, %148 : vector<2x64xf32>
    %157 = arith.addf %155, %156 : vector<2x64xf32>
    %158 = math.tanh %157 : vector<2x64xf32>
    %159 = arith.mulf %154, %158 : vector<2x64xf32>
    %160 = vector.extract_strided_slice %12 {offsets = [5, 0, 0], sizes = [1, 2, 256], strides = [1, 1, 1]} : vector<8x2x256xf32> to vector<1x2x256xf32>
    %161 = vector.shape_cast %160 : vector<1x2x256xf32> to vector<2x256xf32>
    %cst_40 = arith.constant dense<0.000000e+00> : vector<2x256xf32>
    %162 = tpu.matmul %159, %2, %cst_40 {dimension_numbers = #tpu.dot_dimension_numbers<[1], [0], [0], [1], [0, 0, 1, 1], [], []>} : vector<2x64xf32>, vector<64x256xf32>, vector<2x256xf32> -> vector<2x256xf32>
    %163 = arith.addf %161, %162 : vector<2x256xf32>
    %164 = vector.extract_strided_slice %163 {offsets = [0, 0], sizes = [2, 64], strides = [1, 1]} : vector<2x256xf32> to vector<2x64xf32>
    %165 = arith.negf %164 : vector<2x64xf32>
    %166 = math.exp %165 : vector<2x64xf32>
    %cst_41 = arith.constant 1.000000e+00 : f32
    %167 = vector.broadcast %cst_41 : f32 to vector<2x64xf32>
    %168 = arith.addf %167, %166 : vector<2x64xf32>
    %169 = arith.divf %167, %168 : vector<2x64xf32>
    %170 = vector.extract_strided_slice %163 {offsets = [0, 64], sizes = [2, 64], strides = [1, 1]} : vector<2x256xf32> to vector<2x64xf32>
    %171 = arith.negf %170 : vector<2x64xf32>
    %172 = math.exp %171 : vector<2x64xf32>
    %cst_42 = arith.constant 1.000000e+00 : f32
    %173 = vector.broadcast %cst_42 : f32 to vector<2x64xf32>
    %174 = arith.addf %173, %172 : vector<2x64xf32>
    %175 = arith.divf %173, %174 : vector<2x64xf32>
    %176 = vector.extract_strided_slice %163 {offsets = [0, 128], sizes = [2, 64], strides = [1, 1]} : vector<2x256xf32> to vector<2x64xf32>
    %177 = math.tanh %176 : vector<2x64xf32>
    %178 = vector.extract_strided_slice %163 {offsets = [0, 192], sizes = [2, 64], strides = [1, 1]} : vector<2x256xf32> to vector<2x64xf32>
    %179 = arith.negf %178 : vector<2x64xf32>
    %180 = math.exp %179 : vector<2x64xf32>
    %cst_43 = arith.constant 1.000000e+00 : f32
    %181 = vector.broadcast %cst_43 : f32 to vector<2x64xf32>
    %182 = arith.addf %181, %180 : vector<2x64xf32>
    %183 = arith.divf %181, %182 : vector<2x64xf32>
    %184 = arith.mulf %175, %157 : vector<2x64xf32>
    %185 = arith.mulf %169, %177 : vector<2x64xf32>
    %186 = arith.addf %184, %185 : vector<2x64xf32>
    %187 = math.tanh %186 : vector<2x64xf32>
    %188 = arith.mulf %183, %187 : vector<2x64xf32>
    %189 = vector.extract_strided_slice %12 {offsets = [6, 0, 0], sizes = [1, 2, 256], strides = [1, 1, 1]} : vector<8x2x256xf32> to vector<1x2x256xf32>
    %190 = vector.shape_cast %189 : vector<1x2x256xf32> to vector<2x256xf32>
    %cst_44 = arith.constant dense<0.000000e+00> : vector<2x256xf32>
    %191 = tpu.matmul %188, %2, %cst_44 {dimension_numbers = #tpu.dot_dimension_numbers<[1], [0], [0], [1], [0, 0, 1, 1], [], []>} : vector<2x64xf32>, vector<64x256xf32>, vector<2x256xf32> -> vector<2x256xf32>
    %192 = arith.addf %190, %191 : vector<2x256xf32>
    %193 = vector.extract_strided_slice %192 {offsets = [0, 0], sizes = [2, 64], strides = [1, 1]} : vector<2x256xf32> to vector<2x64xf32>
    %194 = arith.negf %193 : vector<2x64xf32>
    %195 = math.exp %194 : vector<2x64xf32>
    %cst_45 = arith.constant 1.000000e+00 : f32
    %196 = vector.broadcast %cst_45 : f32 to vector<2x64xf32>
    %197 = arith.addf %196, %195 : vector<2x64xf32>
    %198 = arith.divf %196, %197 : vector<2x64xf32>
    %199 = vector.extract_strided_slice %192 {offsets = [0, 64], sizes = [2, 64], strides = [1, 1]} : vector<2x256xf32> to vector<2x64xf32>
    %200 = arith.negf %199 : vector<2x64xf32>
    %201 = math.exp %200 : vector<2x64xf32>
    %cst_46 = arith.constant 1.000000e+00 : f32
    %202 = vector.broadcast %cst_46 : f32 to vector<2x64xf32>
    %203 = arith.addf %202, %201 : vector<2x64xf32>
    %204 = arith.divf %202, %203 : vector<2x64xf32>
    %205 = vector.extract_strided_slice %192 {offsets = [0, 128], sizes = [2, 64], strides = [1, 1]} : vector<2x256xf32> to vector<2x64xf32>
    %206 = math.tanh %205 : vector<2x64xf32>
    %207 = vector.extract_strided_slice %192 {offsets = [0, 192], sizes = [2, 64], strides = [1, 1]} : vector<2x256xf32> to vector<2x64xf32>
    %208 = arith.negf %207 : vector<2x64xf32>
    %209 = math.exp %208 : vector<2x64xf32>
    %cst_47 = arith.constant 1.000000e+00 : f32
    %210 = vector.broadcast %cst_47 : f32 to vector<2x64xf32>
    %211 = arith.addf %210, %209 : vector<2x64xf32>
    %212 = arith.divf %210, %211 : vector<2x64xf32>
    %213 = arith.mulf %204, %186 : vector<2x64xf32>
    %214 = arith.mulf %198, %206 : vector<2x64xf32>
    %215 = arith.addf %213, %214 : vector<2x64xf32>
    %216 = math.tanh %215 : vector<2x64xf32>
    %217 = arith.mulf %212, %216 : vector<2x64xf32>
    %218 = vector.extract_strided_slice %12 {offsets = [7, 0, 0], sizes = [1, 2, 256], strides = [1, 1, 1]} : vector<8x2x256xf32> to vector<1x2x256xf32>
    %219 = vector.shape_cast %218 : vector<1x2x256xf32> to vector<2x256xf32>
    %cst_48 = arith.constant dense<0.000000e+00> : vector<2x256xf32>
    %220 = tpu.matmul %217, %2, %cst_48 {dimension_numbers = #tpu.dot_dimension_numbers<[1], [0], [0], [1], [0, 0, 1, 1], [], []>} : vector<2x64xf32>, vector<64x256xf32>, vector<2x256xf32> -> vector<2x256xf32>
    %221 = arith.addf %219, %220 : vector<2x256xf32>
    %222 = vector.extract_strided_slice %221 {offsets = [0, 0], sizes = [2, 64], strides = [1, 1]} : vector<2x256xf32> to vector<2x64xf32>
    %223 = arith.negf %222 : vector<2x64xf32>
    %224 = math.exp %223 : vector<2x64xf32>
    %cst_49 = arith.constant 1.000000e+00 : f32
    %225 = vector.broadcast %cst_49 : f32 to vector<2x64xf32>
    %226 = arith.addf %225, %224 : vector<2x64xf32>
    %227 = arith.divf %225, %226 : vector<2x64xf32>
    %228 = vector.extract_strided_slice %221 {offsets = [0, 64], sizes = [2, 64], strides = [1, 1]} : vector<2x256xf32> to vector<2x64xf32>
    %229 = arith.negf %228 : vector<2x64xf32>
    %230 = math.exp %229 : vector<2x64xf32>
    %cst_50 = arith.constant 1.000000e+00 : f32
    %231 = vector.broadcast %cst_50 : f32 to vector<2x64xf32>
    %232 = arith.addf %231, %230 : vector<2x64xf32>
    %233 = arith.divf %231, %232 : vector<2x64xf32>
    %234 = vector.extract_strided_slice %221 {offsets = [0, 128], sizes = [2, 64], strides = [1, 1]} : vector<2x256xf32> to vector<2x64xf32>
    %235 = math.tanh %234 : vector<2x64xf32>
    %236 = vector.extract_strided_slice %221 {offsets = [0, 192], sizes = [2, 64], strides = [1, 1]} : vector<2x256xf32> to vector<2x64xf32>
    %237 = arith.negf %236 : vector<2x64xf32>
    %238 = math.exp %237 : vector<2x64xf32>
    %cst_51 = arith.constant 1.000000e+00 : f32
    %239 = vector.broadcast %cst_51 : f32 to vector<2x64xf32>
    %240 = arith.addf %239, %238 : vector<2x64xf32>
    %241 = arith.divf %239, %240 : vector<2x64xf32>
    %242 = arith.mulf %233, %215 : vector<2x64xf32>
    %243 = arith.mulf %227, %235 : vector<2x64xf32>
    %244 = arith.addf %242, %243 : vector<2x64xf32>
    %245 = math.tanh %244 : vector<2x64xf32>
    %246 = arith.mulf %241, %245 : vector<2x64xf32>
    %247 = vector.shape_cast %43 : vector<2x64xf32> to vector<1x2x64xf32>
    %248 = vector.shape_cast %72 : vector<2x64xf32> to vector<1x2x64xf32>
    %249 = vector.shape_cast %101 : vector<2x64xf32> to vector<1x2x64xf32>
    %250 = vector.shape_cast %130 : vector<2x64xf32> to vector<1x2x64xf32>
    %251 = vector.shape_cast %159 : vector<2x64xf32> to vector<1x2x64xf32>
    %252 = vector.shape_cast %188 : vector<2x64xf32> to vector<1x2x64xf32>
    %253 = vector.shape_cast %217 : vector<2x64xf32> to vector<1x2x64xf32>
    %254 = vector.shape_cast %246 : vector<2x64xf32> to vector<1x2x64xf32>
    %255 = tpu.concatenate %247, %248, %249, %250, %251, %252, %253, %254 in 0 : vector<1x2x64xf32>, vector<1x2x64xf32>, vector<1x2x64xf32>, vector<1x2x64xf32>, vector<1x2x64xf32>, vector<1x2x64xf32>, vector<1x2x64xf32>, vector<1x2x64xf32> -> vector<8x2x64xf32>
    "tpu.trace_start"() <{level = 10 : i32, message = "sbh,hg->sbg"}> : () -> ()
    %cst_52 = arith.constant dense<0.000000e+00> : vector<8x2x256xf32>
    %256 = tpu.matmul %255, %4, %cst_52 {dimension_numbers = #tpu.dot_dimension_numbers<[2], [0], [0, 1], [1], [0, 0, 0, 1, 1, 1], [], []>} : vector<8x2x64xf32>, vector<64x256xf32>, vector<8x2x256xf32> -> vector<8x2x256xf32>
    "tpu.trace_stop"() : () -> ()
    %257 = vector.shape_cast %6 : vector<1x256xf32> to vector<1x1x256xf32>
    %258 = vector.broadcast %257 : vector<1x1x256xf32> to vector<8x2x256xf32>
    %259 = arith.addf %256, %258 : vector<8x2x256xf32>
    %cst_53 = arith.constant 0.000000e+00 : f32
    %260 = vector.broadcast %cst_53 : f32 to vector<2x64xf32>
    %cst_54 = arith.constant 0.000000e+00 : f32
    %261 = vector.broadcast %cst_54 : f32 to vector<2x64xf32>
    %262 = vector.extract_strided_slice %259 {offsets = [0, 0, 0], sizes = [1, 2, 256], strides = [1, 1, 1]} : vector<8x2x256xf32> to vector<1x2x256xf32>
    %263 = vector.shape_cast %262 : vector<1x2x256xf32> to vector<2x256xf32>
    %cst_55 = arith.constant dense<0.000000e+00> : vector<2x256xf32>
    %264 = tpu.matmul %260, %5, %cst_55 {dimension_numbers = #tpu.dot_dimension_numbers<[1], [0], [0], [1], [0, 0, 1, 1], [], []>} : vector<2x64xf32>, vector<64x256xf32>, vector<2x256xf32> -> vector<2x256xf32>
    %265 = arith.addf %263, %264 : vector<2x256xf32>
    %266 = vector.extract_strided_slice %265 {offsets = [0, 0], sizes = [2, 64], strides = [1, 1]} : vector<2x256xf32> to vector<2x64xf32>
    %267 = arith.negf %266 : vector<2x64xf32>
    %268 = math.exp %267 : vector<2x64xf32>
    %cst_56 = arith.constant 1.000000e+00 : f32
    %269 = vector.broadcast %cst_56 : f32 to vector<2x64xf32>
    %270 = arith.addf %269, %268 : vector<2x64xf32>
    %271 = arith.divf %269, %270 : vector<2x64xf32>
    %272 = vector.extract_strided_slice %265 {offsets = [0, 64], sizes = [2, 64], strides = [1, 1]} : vector<2x256xf32> to vector<2x64xf32>
    %273 = arith.negf %272 : vector<2x64xf32>
    %274 = math.exp %273 : vector<2x64xf32>
    %cst_57 = arith.constant 1.000000e+00 : f32
    %275 = vector.broadcast %cst_57 : f32 to vector<2x64xf32>
    %276 = arith.addf %275, %274 : vector<2x64xf32>
    %277 = arith.divf %275, %276 : vector<2x64xf32>
    %278 = vector.extract_strided_slice %265 {offsets = [0, 128], sizes = [2, 64], strides = [1, 1]} : vector<2x256xf32> to vector<2x64xf32>
    %279 = math.tanh %278 : vector<2x64xf32>
    %280 = vector.extract_strided_slice %265 {offsets = [0, 192], sizes = [2, 64], strides = [1, 1]} : vector<2x256xf32> to vector<2x64xf32>
    %281 = arith.negf %280 : vector<2x64xf32>
    %282 = math.exp %281 : vector<2x64xf32>
    %cst_58 = arith.constant 1.000000e+00 : f32
    %283 = vector.broadcast %cst_58 : f32 to vector<2x64xf32>
    %284 = arith.addf %283, %282 : vector<2x64xf32>
    %285 = arith.divf %283, %284 : vector<2x64xf32>
    %286 = arith.mulf %277, %261 : vector<2x64xf32>
    %287 = arith.mulf %271, %279 : vector<2x64xf32>
    %288 = arith.addf %286, %287 : vector<2x64xf32>
    %289 = math.tanh %288 : vector<2x64xf32>
    %290 = arith.mulf %285, %289 : vector<2x64xf32>
    %291 = vector.extract_strided_slice %259 {offsets = [1, 0, 0], sizes = [1, 2, 256], strides = [1, 1, 1]} : vector<8x2x256xf32> to vector<1x2x256xf32>
    %292 = vector.shape_cast %291 : vector<1x2x256xf32> to vector<2x256xf32>
    %cst_59 = arith.constant dense<0.000000e+00> : vector<2x256xf32>
    %293 = tpu.matmul %290, %5, %cst_59 {dimension_numbers = #tpu.dot_dimension_numbers<[1], [0], [0], [1], [0, 0, 1, 1], [], []>} : vector<2x64xf32>, vector<64x256xf32>, vector<2x256xf32> -> vector<2x256xf32>
    %294 = arith.addf %292, %293 : vector<2x256xf32>
    %295 = vector.extract_strided_slice %294 {offsets = [0, 0], sizes = [2, 64], strides = [1, 1]} : vector<2x256xf32> to vector<2x64xf32>
    %296 = arith.negf %295 : vector<2x64xf32>
    %297 = math.exp %296 : vector<2x64xf32>
    %cst_60 = arith.constant 1.000000e+00 : f32
    %298 = vector.broadcast %cst_60 : f32 to vector<2x64xf32>
    %299 = arith.addf %298, %297 : vector<2x64xf32>
    %300 = arith.divf %298, %299 : vector<2x64xf32>
    %301 = vector.extract_strided_slice %294 {offsets = [0, 64], sizes = [2, 64], strides = [1, 1]} : vector<2x256xf32> to vector<2x64xf32>
    %302 = arith.negf %301 : vector<2x64xf32>
    %303 = math.exp %302 : vector<2x64xf32>
    %cst_61 = arith.constant 1.000000e+00 : f32
    %304 = vector.broadcast %cst_61 : f32 to vector<2x64xf32>
    %305 = arith.addf %304, %303 : vector<2x64xf32>
    %306 = arith.divf %304, %305 : vector<2x64xf32>
    %307 = vector.extract_strided_slice %294 {offsets = [0, 128], sizes = [2, 64], strides = [1, 1]} : vector<2x256xf32> to vector<2x64xf32>
    %308 = math.tanh %307 : vector<2x64xf32>
    %309 = vector.extract_strided_slice %294 {offsets = [0, 192], sizes = [2, 64], strides = [1, 1]} : vector<2x256xf32> to vector<2x64xf32>
    %310 = arith.negf %309 : vector<2x64xf32>
    %311 = math.exp %310 : vector<2x64xf32>
    %cst_62 = arith.constant 1.000000e+00 : f32
    %312 = vector.broadcast %cst_62 : f32 to vector<2x64xf32>
    %313 = arith.addf %312, %311 : vector<2x64xf32>
    %314 = arith.divf %312, %313 : vector<2x64xf32>
    %315 = arith.mulf %306, %288 : vector<2x64xf32>
    %316 = arith.mulf %300, %308 : vector<2x64xf32>
    %317 = arith.addf %315, %316 : vector<2x64xf32>
    %318 = math.tanh %317 : vector<2x64xf32>
    %319 = arith.mulf %314, %318 : vector<2x64xf32>
    %320 = vector.extract_strided_slice %259 {offsets = [2, 0, 0], sizes = [1, 2, 256], strides = [1, 1, 1]} : vector<8x2x256xf32> to vector<1x2x256xf32>
    %321 = vector.shape_cast %320 : vector<1x2x256xf32> to vector<2x256xf32>
    %cst_63 = arith.constant dense<0.000000e+00> : vector<2x256xf32>
    %322 = tpu.matmul %319, %5, %cst_63 {dimension_numbers = #tpu.dot_dimension_numbers<[1], [0], [0], [1], [0, 0, 1, 1], [], []>} : vector<2x64xf32>, vector<64x256xf32>, vector<2x256xf32> -> vector<2x256xf32>
    %323 = arith.addf %321, %322 : vector<2x256xf32>
    %324 = vector.extract_strided_slice %323 {offsets = [0, 0], sizes = [2, 64], strides = [1, 1]} : vector<2x256xf32> to vector<2x64xf32>
    %325 = arith.negf %324 : vector<2x64xf32>
    %326 = math.exp %325 : vector<2x64xf32>
    %cst_64 = arith.constant 1.000000e+00 : f32
    %327 = vector.broadcast %cst_64 : f32 to vector<2x64xf32>
    %328 = arith.addf %327, %326 : vector<2x64xf32>
    %329 = arith.divf %327, %328 : vector<2x64xf32>
    %330 = vector.extract_strided_slice %323 {offsets = [0, 64], sizes = [2, 64], strides = [1, 1]} : vector<2x256xf32> to vector<2x64xf32>
    %331 = arith.negf %330 : vector<2x64xf32>
    %332 = math.exp %331 : vector<2x64xf32>
    %cst_65 = arith.constant 1.000000e+00 : f32
    %333 = vector.broadcast %cst_65 : f32 to vector<2x64xf32>
    %334 = arith.addf %333, %332 : vector<2x64xf32>
    %335 = arith.divf %333, %334 : vector<2x64xf32>
    %336 = vector.extract_strided_slice %323 {offsets = [0, 128], sizes = [2, 64], strides = [1, 1]} : vector<2x256xf32> to vector<2x64xf32>
    %337 = math.tanh %336 : vector<2x64xf32>
    %338 = vector.extract_strided_slice %323 {offsets = [0, 192], sizes = [2, 64], strides = [1, 1]} : vector<2x256xf32> to vector<2x64xf32>
    %339 = arith.negf %338 : vector<2x64xf32>
    %340 = math.exp %339 : vector<2x64xf32>
    %cst_66 = arith.constant 1.000000e+00 : f32
    %341 = vector.broadcast %cst_66 : f32 to vector<2x64xf32>
    %342 = arith.addf %341, %340 : vector<2x64xf32>
    %343 = arith.divf %341, %342 : vector<2x64xf32>
    %344 = arith.mulf %335, %317 : vector<2x64xf32>
    %345 = arith.mulf %329, %337 : vector<2x64xf32>
    %346 = arith.addf %344, %345 : vector<2x64xf32>
    %347 = math.tanh %346 : vector<2x64xf32>
    %348 = arith.mulf %343, %347 : vector<2x64xf32>
    %349 = vector.extract_strided_slice %259 {offsets = [3, 0, 0], sizes = [1, 2, 256], strides = [1, 1, 1]} : vector<8x2x256xf32> to vector<1x2x256xf32>
    %350 = vector.shape_cast %349 : vector<1x2x256xf32> to vector<2x256xf32>
    %cst_67 = arith.constant dense<0.000000e+00> : vector<2x256xf32>
    %351 = tpu.matmul %348, %5, %cst_67 {dimension_numbers = #tpu.dot_dimension_numbers<[1], [0], [0], [1], [0, 0, 1, 1], [], []>} : vector<2x64xf32>, vector<64x256xf32>, vector<2x256xf32> -> vector<2x256xf32>
    %352 = arith.addf %350, %351 : vector<2x256xf32>
    %353 = vector.extract_strided_slice %352 {offsets = [0, 0], sizes = [2, 64], strides = [1, 1]} : vector<2x256xf32> to vector<2x64xf32>
    %354 = arith.negf %353 : vector<2x64xf32>
    %355 = math.exp %354 : vector<2x64xf32>
    %cst_68 = arith.constant 1.000000e+00 : f32
    %356 = vector.broadcast %cst_68 : f32 to vector<2x64xf32>
    %357 = arith.addf %356, %355 : vector<2x64xf32>
    %358 = arith.divf %356, %357 : vector<2x64xf32>
    %359 = vector.extract_strided_slice %352 {offsets = [0, 64], sizes = [2, 64], strides = [1, 1]} : vector<2x256xf32> to vector<2x64xf32>
    %360 = arith.negf %359 : vector<2x64xf32>
    %361 = math.exp %360 : vector<2x64xf32>
    %cst_69 = arith.constant 1.000000e+00 : f32
    %362 = vector.broadcast %cst_69 : f32 to vector<2x64xf32>
    %363 = arith.addf %362, %361 : vector<2x64xf32>
    %364 = arith.divf %362, %363 : vector<2x64xf32>
    %365 = vector.extract_strided_slice %352 {offsets = [0, 128], sizes = [2, 64], strides = [1, 1]} : vector<2x256xf32> to vector<2x64xf32>
    %366 = math.tanh %365 : vector<2x64xf32>
    %367 = vector.extract_strided_slice %352 {offsets = [0, 192], sizes = [2, 64], strides = [1, 1]} : vector<2x256xf32> to vector<2x64xf32>
    %368 = arith.negf %367 : vector<2x64xf32>
    %369 = math.exp %368 : vector<2x64xf32>
    %cst_70 = arith.constant 1.000000e+00 : f32
    %370 = vector.broadcast %cst_70 : f32 to vector<2x64xf32>
    %371 = arith.addf %370, %369 : vector<2x64xf32>
    %372 = arith.divf %370, %371 : vector<2x64xf32>
    %373 = arith.mulf %364, %346 : vector<2x64xf32>
    %374 = arith.mulf %358, %366 : vector<2x64xf32>
    %375 = arith.addf %373, %374 : vector<2x64xf32>
    %376 = math.tanh %375 : vector<2x64xf32>
    %377 = arith.mulf %372, %376 : vector<2x64xf32>
    %378 = vector.extract_strided_slice %259 {offsets = [4, 0, 0], sizes = [1, 2, 256], strides = [1, 1, 1]} : vector<8x2x256xf32> to vector<1x2x256xf32>
    %379 = vector.shape_cast %378 : vector<1x2x256xf32> to vector<2x256xf32>
    %cst_71 = arith.constant dense<0.000000e+00> : vector<2x256xf32>
    %380 = tpu.matmul %377, %5, %cst_71 {dimension_numbers = #tpu.dot_dimension_numbers<[1], [0], [0], [1], [0, 0, 1, 1], [], []>} : vector<2x64xf32>, vector<64x256xf32>, vector<2x256xf32> -> vector<2x256xf32>
    %381 = arith.addf %379, %380 : vector<2x256xf32>
    %382 = vector.extract_strided_slice %381 {offsets = [0, 0], sizes = [2, 64], strides = [1, 1]} : vector<2x256xf32> to vector<2x64xf32>
    %383 = arith.negf %382 : vector<2x64xf32>
    %384 = math.exp %383 : vector<2x64xf32>
    %cst_72 = arith.constant 1.000000e+00 : f32
    %385 = vector.broadcast %cst_72 : f32 to vector<2x64xf32>
    %386 = arith.addf %385, %384 : vector<2x64xf32>
    %387 = arith.divf %385, %386 : vector<2x64xf32>
    %388 = vector.extract_strided_slice %381 {offsets = [0, 64], sizes = [2, 64], strides = [1, 1]} : vector<2x256xf32> to vector<2x64xf32>
    %389 = arith.negf %388 : vector<2x64xf32>
    %390 = math.exp %389 : vector<2x64xf32>
    %cst_73 = arith.constant 1.000000e+00 : f32
    %391 = vector.broadcast %cst_73 : f32 to vector<2x64xf32>
    %392 = arith.addf %391, %390 : vector<2x64xf32>
    %393 = arith.divf %391, %392 : vector<2x64xf32>
    %394 = vector.extract_strided_slice %381 {offsets = [0, 128], sizes = [2, 64], strides = [1, 1]} : vector<2x256xf32> to vector<2x64xf32>
    %395 = math.tanh %394 : vector<2x64xf32>
    %396 = vector.extract_strided_slice %381 {offsets = [0, 192], sizes = [2, 64], strides = [1, 1]} : vector<2x256xf32> to vector<2x64xf32>
    %397 = arith.negf %396 : vector<2x64xf32>
    %398 = math.exp %397 : vector<2x64xf32>
    %cst_74 = arith.constant 1.000000e+00 : f32
    %399 = vector.broadcast %cst_74 : f32 to vector<2x64xf32>
    %400 = arith.addf %399, %398 : vector<2x64xf32>
    %401 = arith.divf %399, %400 : vector<2x64xf32>
    %402 = arith.mulf %393, %375 : vector<2x64xf32>
    %403 = arith.mulf %387, %395 : vector<2x64xf32>
    %404 = arith.addf %402, %403 : vector<2x64xf32>
    %405 = math.tanh %404 : vector<2x64xf32>
    %406 = arith.mulf %401, %405 : vector<2x64xf32>
    %407 = vector.extract_strided_slice %259 {offsets = [5, 0, 0], sizes = [1, 2, 256], strides = [1, 1, 1]} : vector<8x2x256xf32> to vector<1x2x256xf32>
    %408 = vector.shape_cast %407 : vector<1x2x256xf32> to vector<2x256xf32>
    %cst_75 = arith.constant dense<0.000000e+00> : vector<2x256xf32>
    %409 = tpu.matmul %406, %5, %cst_75 {dimension_numbers = #tpu.dot_dimension_numbers<[1], [0], [0], [1], [0, 0, 1, 1], [], []>} : vector<2x64xf32>, vector<64x256xf32>, vector<2x256xf32> -> vector<2x256xf32>
    %410 = arith.addf %408, %409 : vector<2x256xf32>
    %411 = vector.extract_strided_slice %410 {offsets = [0, 0], sizes = [2, 64], strides = [1, 1]} : vector<2x256xf32> to vector<2x64xf32>
    %412 = arith.negf %411 : vector<2x64xf32>
    %413 = math.exp %412 : vector<2x64xf32>
    %cst_76 = arith.constant 1.000000e+00 : f32
    %414 = vector.broadcast %cst_76 : f32 to vector<2x64xf32>
    %415 = arith.addf %414, %413 : vector<2x64xf32>
    %416 = arith.divf %414, %415 : vector<2x64xf32>
    %417 = vector.extract_strided_slice %410 {offsets = [0, 64], sizes = [2, 64], strides = [1, 1]} : vector<2x256xf32> to vector<2x64xf32>
    %418 = arith.negf %417 : vector<2x64xf32>
    %419 = math.exp %418 : vector<2x64xf32>
    %cst_77 = arith.constant 1.000000e+00 : f32
    %420 = vector.broadcast %cst_77 : f32 to vector<2x64xf32>
    %421 = arith.addf %420, %419 : vector<2x64xf32>
    %422 = arith.divf %420, %421 : vector<2x64xf32>
    %423 = vector.extract_strided_slice %410 {offsets = [0, 128], sizes = [2, 64], strides = [1, 1]} : vector<2x256xf32> to vector<2x64xf32>
    %424 = math.tanh %423 : vector<2x64xf32>
    %425 = vector.extract_strided_slice %410 {offsets = [0, 192], sizes = [2, 64], strides = [1, 1]} : vector<2x256xf32> to vector<2x64xf32>
    %426 = arith.negf %425 : vector<2x64xf32>
    %427 = math.exp %426 : vector<2x64xf32>
    %cst_78 = arith.constant 1.000000e+00 : f32
    %428 = vector.broadcast %cst_78 : f32 to vector<2x64xf32>
    %429 = arith.addf %428, %427 : vector<2x64xf32>
    %430 = arith.divf %428, %429 : vector<2x64xf32>
    %431 = arith.mulf %422, %404 : vector<2x64xf32>
    %432 = arith.mulf %416, %424 : vector<2x64xf32>
    %433 = arith.addf %431, %432 : vector<2x64xf32>
    %434 = math.tanh %433 : vector<2x64xf32>
    %435 = arith.mulf %430, %434 : vector<2x64xf32>
    %436 = vector.extract_strided_slice %259 {offsets = [6, 0, 0], sizes = [1, 2, 256], strides = [1, 1, 1]} : vector<8x2x256xf32> to vector<1x2x256xf32>
    %437 = vector.shape_cast %436 : vector<1x2x256xf32> to vector<2x256xf32>
    %cst_79 = arith.constant dense<0.000000e+00> : vector<2x256xf32>
    %438 = tpu.matmul %435, %5, %cst_79 {dimension_numbers = #tpu.dot_dimension_numbers<[1], [0], [0], [1], [0, 0, 1, 1], [], []>} : vector<2x64xf32>, vector<64x256xf32>, vector<2x256xf32> -> vector<2x256xf32>
    %439 = arith.addf %437, %438 : vector<2x256xf32>
    %440 = vector.extract_strided_slice %439 {offsets = [0, 0], sizes = [2, 64], strides = [1, 1]} : vector<2x256xf32> to vector<2x64xf32>
    %441 = arith.negf %440 : vector<2x64xf32>
    %442 = math.exp %441 : vector<2x64xf32>
    %cst_80 = arith.constant 1.000000e+00 : f32
    %443 = vector.broadcast %cst_80 : f32 to vector<2x64xf32>
    %444 = arith.addf %443, %442 : vector<2x64xf32>
    %445 = arith.divf %443, %444 : vector<2x64xf32>
    %446 = vector.extract_strided_slice %439 {offsets = [0, 64], sizes = [2, 64], strides = [1, 1]} : vector<2x256xf32> to vector<2x64xf32>
    %447 = arith.negf %446 : vector<2x64xf32>
    %448 = math.exp %447 : vector<2x64xf32>
    %cst_81 = arith.constant 1.000000e+00 : f32
    %449 = vector.broadcast %cst_81 : f32 to vector<2x64xf32>
    %450 = arith.addf %449, %448 : vector<2x64xf32>
    %451 = arith.divf %449, %450 : vector<2x64xf32>
    %452 = vector.extract_strided_slice %439 {offsets = [0, 128], sizes = [2, 64], strides = [1, 1]} : vector<2x256xf32> to vector<2x64xf32>
    %453 = math.tanh %452 : vector<2x64xf32>
    %454 = vector.extract_strided_slice %439 {offsets = [0, 192], sizes = [2, 64], strides = [1, 1]} : vector<2x256xf32> to vector<2x64xf32>
    %455 = arith.negf %454 : vector<2x64xf32>
    %456 = math.exp %455 : vector<2x64xf32>
    %cst_82 = arith.constant 1.000000e+00 : f32
    %457 = vector.broadcast %cst_82 : f32 to vector<2x64xf32>
    %458 = arith.addf %457, %456 : vector<2x64xf32>
    %459 = arith.divf %457, %458 : vector<2x64xf32>
    %460 = arith.mulf %451, %433 : vector<2x64xf32>
    %461 = arith.mulf %445, %453 : vector<2x64xf32>
    %462 = arith.addf %460, %461 : vector<2x64xf32>
    %463 = math.tanh %462 : vector<2x64xf32>
    %464 = arith.mulf %459, %463 : vector<2x64xf32>
    %465 = vector.extract_strided_slice %259 {offsets = [7, 0, 0], sizes = [1, 2, 256], strides = [1, 1, 1]} : vector<8x2x256xf32> to vector<1x2x256xf32>
    %466 = vector.shape_cast %465 : vector<1x2x256xf32> to vector<2x256xf32>
    %cst_83 = arith.constant dense<0.000000e+00> : vector<2x256xf32>
    %467 = tpu.matmul %464, %5, %cst_83 {dimension_numbers = #tpu.dot_dimension_numbers<[1], [0], [0], [1], [0, 0, 1, 1], [], []>} : vector<2x64xf32>, vector<64x256xf32>, vector<2x256xf32> -> vector<2x256xf32>
    %468 = arith.addf %466, %467 : vector<2x256xf32>
    %469 = vector.extract_strided_slice %468 {offsets = [0, 0], sizes = [2, 64], strides = [1, 1]} : vector<2x256xf32> to vector<2x64xf32>
    %470 = arith.negf %469 : vector<2x64xf32>
    %471 = math.exp %470 : vector<2x64xf32>
    %cst_84 = arith.constant 1.000000e+00 : f32
    %472 = vector.broadcast %cst_84 : f32 to vector<2x64xf32>
    %473 = arith.addf %472, %471 : vector<2x64xf32>
    %474 = arith.divf %472, %473 : vector<2x64xf32>
    %475 = vector.extract_strided_slice %468 {offsets = [0, 64], sizes = [2, 64], strides = [1, 1]} : vector<2x256xf32> to vector<2x64xf32>
    %476 = arith.negf %475 : vector<2x64xf32>
    %477 = math.exp %476 : vector<2x64xf32>
    %cst_85 = arith.constant 1.000000e+00 : f32
    %478 = vector.broadcast %cst_85 : f32 to vector<2x64xf32>
    %479 = arith.addf %478, %477 : vector<2x64xf32>
    %480 = arith.divf %478, %479 : vector<2x64xf32>
    %481 = vector.extract_strided_slice %468 {offsets = [0, 128], sizes = [2, 64], strides = [1, 1]} : vector<2x256xf32> to vector<2x64xf32>
    %482 = math.tanh %481 : vector<2x64xf32>
    %483 = vector.extract_strided_slice %468 {offsets = [0, 192], sizes = [2, 64], strides = [1, 1]} : vector<2x256xf32> to vector<2x64xf32>
    %484 = arith.negf %483 : vector<2x64xf32>
    %485 = math.exp %484 : vector<2x64xf32>
    %cst_86 = arith.constant 1.000000e+00 : f32
    %486 = vector.broadcast %cst_86 : f32 to vector<2x64xf32>
    %487 = arith.addf %486, %485 : vector<2x64xf32>
    %488 = arith.divf %486, %487 : vector<2x64xf32>
    %489 = arith.mulf %480, %462 : vector<2x64xf32>
    %490 = arith.mulf %474, %482 : vector<2x64xf32>
    %491 = arith.addf %489, %490 : vector<2x64xf32>
    %492 = math.tanh %491 : vector<2x64xf32>
    %493 = arith.mulf %488, %492 : vector<2x64xf32>
    %494 = vector.shape_cast %290 : vector<2x64xf32> to vector<1x2x64xf32>
    %495 = vector.shape_cast %319 : vector<2x64xf32> to vector<1x2x64xf32>
    %496 = vector.shape_cast %348 : vector<2x64xf32> to vector<1x2x64xf32>
    %497 = vector.shape_cast %377 : vector<2x64xf32> to vector<1x2x64xf32>
    %498 = vector.shape_cast %406 : vector<2x64xf32> to vector<1x2x64xf32>
    %499 = vector.shape_cast %435 : vector<2x64xf32> to vector<1x2x64xf32>
    %500 = vector.shape_cast %464 : vector<2x64xf32> to vector<1x2x64xf32>
    %501 = vector.shape_cast %493 : vector<2x64xf32> to vector<1x2x64xf32>
    %502 = tpu.concatenate %494, %495, %496, %497, %498, %499, %500, %501 in 0 : vector<1x2x64xf32>, vector<1x2x64xf32>, vector<1x2x64xf32>, vector<1x2x64xf32>, vector<1x2x64xf32>, vector<1x2x64xf32>, vector<1x2x64xf32>, vector<1x2x64xf32> -> vector<8x2x64xf32>
    "tpu.trace_start"() <{level = 10 : i32, message = "sbh,ho->sbo"}> : () -> ()
    %cst_87 = arith.constant dense<0.000000e+00> : vector<8x2x1xf32>
    %503 = tpu.matmul %502, %7, %cst_87 {dimension_numbers = #tpu.dot_dimension_numbers<[2], [0], [0, 1], [1], [0, 0, 0, 1, 1, 1], [], []>} : vector<8x2x64xf32>, vector<64x1xf32>, vector<8x2x1xf32> -> vector<8x2x1xf32>
    "tpu.trace_stop"() : () -> ()
    %504 = vector.shape_cast %8 : vector<1x1xf32> to vector<1x1x1xf32>
    %505 = vector.broadcast %504 : vector<1x1x1xf32> to vector<8x2x1xf32>
    %506 = arith.addf %503, %505 : vector<8x2x1xf32>
    %c0_88 = arith.constant 0 : index
    %c0_89 = arith.constant 0 : index
    %c0_90 = arith.constant 0 : index
    %507 = vector.load %arg9[%c0_88, %c0_89, %c0_90] : memref<8x2x1xf32, #tpu.memory_space<vmem>>, vector<8x2x1xf32>
    tpu.vector_store %arg9[%c0_88, %c0_89, %c0_90], %506 {strides = array<i32>} : memref<8x2x1xf32, #tpu.memory_space<vmem>>, vector<8x2x1xf32>,
    return
  }
}

</mosaic_0001>

<llo_original>
// kernel: lstm_model_forward.1
$region0: #{lstm_model_forward.1}
  #allocation0 [shape = 'u32[]', space=smem, size = 0x4, offset = 0x4, fixed_abs, tag = 'smem constant byte address 0x4 - core index']
  #allocation1 [shape = 'u32[144,128]{1,0:T(1,128)}', space=vmem, size = 0x12000, scoped, tag = 'internal scratch']
  #allocation2 [shape = 'f32[1,1]{1,0:T(1,128)S(1)}', space=vmem, size = 0x200, scoped, tag = 'scoped memory for lstm_model_forward.1']
  %s0 = inlined_call_operand.vmem [shape: f32[8,2,50], index: 0, kind: input, shape index: {}]
  %s1 = inlined_call_operand.hbm [shape: f32[50,256], index: 1, kind: input, shape index: {}]
  %s2 = inlined_call_operand.vmem [shape: f32[64,256], index: 2, kind: input, shape index: {}]
  %s3 = inlined_call_operand.vmem [shape: f32[1,256], index: 3, kind: input, shape index: {}]
  %s4 = inlined_call_operand.hbm [shape: f32[64,256], index: 4, kind: input, shape index: {}]
  %s5 = inlined_call_operand.hbm [shape: f32[64,256], index: 5, kind: input, shape index: {}]
  %s6 = inlined_call_operand.vmem [shape: f32[1,256], index: 6, kind: input, shape index: {}]
  %s7 = inlined_call_operand.vmem [shape: f32[64,1], index: 7, kind: input, shape index: {}]
  %s8 = inlined_call_operand.<no memory space> [shape: f32[1,1], index: 8, kind: input, shape index: {}]
  %s9 = inlined_call_operand.vmem [shape: f32[8,2,1], index: 9, kind: output, shape index: {}]
  %s10 = sld [smem:[#allocation0]]
  $region58: #{lstm_model_forward.1} parent=0
    _
  %s12 = ssub.s32 1, %s10
  %s13 = scalar_select 0, %s12, %s10
  %v14 = vstv %s8
  %15 = vst [vmem:[#allocation2] sm:$0x1] %v14
  $region1: #{lstm_model_forward.1} parent=0
    #allocation3 [shape = 'u8[57344]{0}', space=vmem, size = 0xe000, scoped, tag = 'input window, operand 1, single buffered']
    #allocation4 [shape = 's32[1]{0}', space=sflag, size = 0x4, scoped, tag = 'scoped memory for lstm_model_forward.1']
    #allocation5 [shape = 'u8[65536]{0}', space=vmem, size = 0x10000, scoped, tag = 'input window, operand 4, single buffered']
    #allocation6 [shape = 's32[1]{0}', space=sflag, size = 0x4, scoped, tag = 'scoped memory for lstm_model_forward.1']
    #allocation7 [shape = 'u8[65536]{0}', space=vmem, size = 0x10000, scoped, tag = 'input window, operand 5, single buffered']
    %16 = vsyncpa [#allocation4], 0
    %17 = vsyncpa [#allocation6], 0
    // Predicated region
    $region2: #{lstm_model_forward.1} parent=1 // pred_check
      _
    $region3: #{lstm_model_forward.1} parent=1 // pred_check_branch
      %19 = sbr.rel (0) target = $region5
    $region4: #{lstm_model_forward.1} parent=1 // pred_region
      _
    $region5: #{lstm_model_forward.1} parent=1 // pred_fallthru
      _
    // Predicated region
    $region6: #{lstm_model_forward.1} parent=1 // pred_check
      _
    $region7: #{lstm_model_forward.1} parent=1 // pred_check_branch
      %21 = sbr.rel (0) target = $region9
    $region8: #{lstm_model_forward.1} parent=1 // pred_region
      %s23 = ssub.s32 1792, 1792
      %24 = vsyncadd [#allocation4], %s23
      %s25 = sshll.u32 [#allocation3], 4
      %s26 = int_to_ptr.vmem [resolvable:$true] %s25
      %31 = dma.hbm_to_vmem [thread:$0]  %s1, 1792, %s26, [#allocation4], 256, 256, 16
    $region9: #{lstm_model_forward.1} parent=1 // pred_fallthru
      _
    // Predicated region
    $region10: #{lstm_model_forward.1} parent=1 // pred_check
      _
    $region11: #{lstm_model_forward.1} parent=1 // pred_check_branch
      %33 = sbr.rel (0) target = $region13
    $region12: #{lstm_model_forward.1} parent=1 // pred_region
      _
    $region13: #{lstm_model_forward.1} parent=1 // pred_fallthru
      _
    // Predicated region
    $region14: #{lstm_model_forward.1} parent=1 // pred_check
      _
    $region15: #{lstm_model_forward.1} parent=1 // pred_check_branch
      %35 = sbr.rel (0) target = $region17
    $region16: #{lstm_model_forward.1} parent=1 // pred_region
      _
    $region17: #{lstm_model_forward.1} parent=1 // pred_fallthru
      _
    // Predicated region
    $region18: #{lstm_model_forward.1} parent=1 // pred_check
      _
    $region19: #{lstm_model_forward.1} parent=1 // pred_check_branch
      %37 = sbr.rel (0) target = $region21
    $region20: #{lstm_model_forward.1} parent=1 // pred_region
      %s39 = ssub.s32 2048, 2048
      %40 = vsyncadd [#allocation6], %s39
      %s41 = sshll.u32 [#allocation5], 4
      %s42 = int_to_ptr.vmem [resolvable:$true] %s41
      %47 = dma.hbm_to_vmem [thread:$0]  %s4, 2048, %s42, [#allocation6], 256, 256, 16
    $region21: #{lstm_model_forward.1} parent=1 // pred_fallthru
      _
    // Predicated region
    $region22: #{lstm_model_forward.1} parent=1 // pred_check
      _
    $region23: #{lstm_model_forward.1} parent=1 // pred_check_branch
      %49 = sbr.rel (0) target = $region25
    $region24: #{lstm_model_forward.1} parent=1 // pred_region
      %s51 = ssub.s32 2048, 2048
      %52 = vsyncadd [#allocation6], %s51
      %s53 = sshll.u32 [#allocation7], 4
      %s54 = int_to_ptr.vmem [resolvable:$true] %s53
      %59 = dma.hbm_to_vmem [thread:$0]  %s5, 2048, %s54, [#allocation6], 256, 256, 16
    $region25: #{lstm_model_forward.1} parent=1 // pred_fallthru
      _
    // Predicated region
    $region26: #{lstm_model_forward.1} parent=1 // pred_check
      _
    $region27: #{lstm_model_forward.1} parent=1 // pred_check_branch
      %61 = sbr.rel (0) target = $region29
    $region28: #{lstm_model_forward.1} parent=1 // pred_region
      _
    $region29: #{lstm_model_forward.1} parent=1 // pred_fallthru
      _
    // Predicated region
    $region30: #{lstm_model_forward.1} parent=1 // pred_check
      _
    $region31: #{lstm_model_forward.1} parent=1 // pred_check_branch
      %63 = sbr.rel (0) target = $region33
    $region32: #{lstm_model_forward.1} parent=1 // pred_region
      _
    $region33: #{lstm_model_forward.1} parent=1 // pred_fallthru
      _
    // Predicated region
    $region34: #{lstm_model_forward.1} parent=1 // pred_check
      _
    $region35: #{lstm_model_forward.1} parent=1 // pred_check_branch
      %65 = sbr.rel (0) target = $region37
    $region36: #{lstm_model_forward.1} parent=1 // pred_region
      _
    $region37: #{lstm_model_forward.1} parent=1 // pred_fallthru
      _
    // Predicated region
    $region38: #{lstm_model_forward.1} parent=1 // pred_check
      _
    $region39: #{lstm_model_forward.1} parent=1 // pred_check_branch
      %67 = sbr.rel (0) target = $region41
    $region40: #{lstm_model_forward.1} parent=1 // pred_region
      %68 = dma.done [#allocation4], 1792
    $region41: #{lstm_model_forward.1} parent=1 // pred_fallthru
      _
    // Predicated region
    $region42: #{lstm_model_forward.1} parent=1 // pred_check
      _
    $region43: #{lstm_model_forward.1} parent=1 // pred_check_branch
      %70 = sbr.rel (0) target = $region45
    $region44: #{lstm_model_forward.1} parent=1 // pred_region
      %71 = dma.done [#allocation6], 2048
    $region45: #{lstm_model_forward.1} parent=1 // pred_fallthru
      _
    // Predicated region
    $region46: #{lstm_model_forward.1} parent=1 // pred_check
      _
    $region47: #{lstm_model_forward.1} parent=1 // pred_check_branch
      %73 = sbr.rel (0) target = $region49
    $region48: #{lstm_model_forward.1} parent=1 // pred_region
      %74 = dma.done [#allocation6], 2048
    $region49: #{lstm_model_forward.1} parent=1 // pred_fallthru
      _
    %v75 = vld [vmem:[%s0] sm:$0x3]
    %v76 = vld [vmem:[%s0 + $0x2] sm:$0x3]
    %v77 = vld [vmem:[%s0 + $0x4] sm:$0x3]
    %v78 = vld [vmem:[%s0 + $0x6] sm:$0x3]
    %v79 = vld [vmem:[%s0 + $0x8] sm:$0x3]
    %v80 = vld [vmem:[%s0 + $0xa] sm:$0x3]
    %v81 = vld [vmem:[%s0 + $0xc] sm:$0x3]
    %v82 = vld [vmem:[%s0 + $0xe] sm:$0x3]
    %v83 = vld [vmem:[#allocation3] sm:$0xff]
    %v84 = vld [vmem:[#allocation3 + $0x8] sm:$0xff]
    %v85 = vld [vmem:[#allocation3 + $0x10] sm:$0xff]
    %v86 = vld [vmem:[#allocation3 + $0x18] sm:$0xff]
    %v87 = vld [vmem:[#allocation3 + $0x20] sm:$0xff]
    %v88 = vld [vmem:[#allocation3 + $0x28] sm:$0xff]
    %v89 = vld [vmem:[#allocation3 + $0x30] sm:$0xff]
    %v90 = vld [vmem:[#allocation3 + $0x38] sm:$0xff]
    %v91 = vld [vmem:[#allocation3 + $0x40] sm:$0xff]
    %v92 = vld [vmem:[#allocation3 + $0x48] sm:$0xff]
    %v93 = vld [vmem:[#allocation3 + $0x50] sm:$0xff]
    %v94 = vld [vmem:[#allocation3 + $0x58] sm:$0xff]
    %v95 = vld [vmem:[#allocation3 + $0x60] sm:$0x3]
    %v96 = vld [vmem:[#allocation3 + $0x68] sm:$0x3]
    %v97 = vld [vmem:[%s2] sm:$0xff]
    %v98 = vld [vmem:[%s2 + $0x8] sm:$0xff]
    %v99 = vld [vmem:[%s2 + $0x10] sm:$0xff]
    %v100 = vld [vmem:[%s2 + $0x18] sm:$0xff]
    %v101 = vld [vmem:[%s2 + $0x20] sm:$0xff]
    %v102 = vld [vmem:[%s2 + $0x28] sm:$0xff]
    %v103 = vld [vmem:[%s2 + $0x30] sm:$0xff]
    %v104 = vld [vmem:[%s2 + $0x38] sm:$0xff]
    %v105 = vld [vmem:[%s2 + $0x40] sm:$0xff]
    %v106 = vld [vmem:[%s2 + $0x48] sm:$0xff]
    %v107 = vld [vmem:[%s2 + $0x50] sm:$0xff]
    %v108 = vld [vmem:[%s2 + $0x58] sm:$0xff]
    %v109 = vld [vmem:[%s2 + $0x60] sm:$0xff]
    %v110 = vld [vmem:[%s2 + $0x68] sm:$0xff]
    %v111 = vld [vmem:[%s2 + $0x70] sm:$0xff]
    %v112 = vld [vmem:[%s2 + $0x78] sm:$0xff]
    %v113 = vld [vmem:[%s3] sm:$0x3]
    %v114 = vld [vmem:[#allocation5] sm:$0xff]
    %v115 = vld [vmem:[#allocation5 + $0x8] sm:$0xff]
    %v116 = vld [vmem:[#allocation5 + $0x10] sm:$0xff]
    %v117 = vld [vmem:[#allocation5 + $0x18] sm:$0xff]
    %v118 = vld [vmem:[#allocation5 + $0x20] sm:$0xff]
    %v119 = vld [vmem:[#allocation5 + $0x28] sm:$0xff]
    %v120 = vld [vmem:[#allocation5 + $0x30] sm:$0xff]
    %v121 = vld [vmem:[#allocation5 + $0x38] sm:$0xff]
    %v122 = vld [vmem:[#allocation5 + $0x40] sm:$0xff]
    %v123 = vld [vmem:[#allocation5 + $0x48] sm:$0xff]
    %v124 = vld [vmem:[#allocation5 + $0x50] sm:$0xff]
    %v125 = vld [vmem:[#allocation5 + $0x58] sm:$0xff]
    %v126 = vld [vmem:[#allocation5 + $0x60] sm:$0xff]
    %v127 = vld [vmem:[#allocation5 + $0x68] sm:$0xff]
    %v128 = vld [vmem:[#allocation5 + $0x70] sm:$0xff]
    %v129 = vld [vmem:[#allocation5 + $0x78] sm:$0xff]
    %v130 = vld [vmem:[#allocation7] sm:$0xff]
    %v131 = vld [vmem:[#allocation7 + $0x8] sm:$0xff]
    %v132 = vld [vmem:[#allocation7 + $0x10] sm:$0xff]
    %v133 = vld [vmem:[#allocation7 + $0x18] sm:$0xff]
    %v134 = vld [vmem:[#allocation7 + $0x20] sm:$0xff]
    %v135 = vld [vmem:[#allocation7 + $0x28] sm:$0xff]
    %v136 = vld [vmem:[#allocation7 + $0x30] sm:$0xff]
    %v137 = vld [vmem:[#allocation7 + $0x38] sm:$0xff]
    %v138 = vld [vmem:[#allocation7 + $0x40] sm:$0xff]
    %v139 = vld [vmem:[#allocation7 + $0x48] sm:$0xff]
    %v140 = vld [vmem:[#allocation7 + $0x50] sm:$0xff]
    %v141 = vld [vmem:[#allocation7 + $0x58] sm:$0xff]
    %v142 = vld [vmem:[#allocation7 + $0x60] sm:$0xff]
    %v143 = vld [vmem:[#allocation7 + $0x68] sm:$0xff]
    %v144 = vld [vmem:[#allocation7 + $0x70] sm:$0xff]
    %v145 = vld [vmem:[#allocation7 + $0x78] sm:$0xff]
    %v146 = vld [vmem:[%s6] sm:$0x3]
    %v147 = vld [vmem:[%s7] sm:$0xff]
    %v148 = vld [vmem:[%s7 + $0x8] sm:$0xff]
    %v149 = vld [vmem:[%s7 + $0x10] sm:$0xff]
    %v150 = vld [vmem:[%s7 + $0x18] sm:$0xff]
    %v151 = vld [vmem:[%s7 + $0x20] sm:$0xff]
    %v152 = vld [vmem:[%s7 + $0x28] sm:$0xff]
    %v153 = vld [vmem:[%s7 + $0x30] sm:$0xff]
    %v154 = vld [vmem:[%s7 + $0x38] sm:$0xff]
    %v155 = vld [vmem:[#allocation2] sm:$0x1]
    %v157 = vlaneseq
    %v158 = vshrl.u32 %v157, 7
    %v159 = vsub.s32 0, %v158
    %v160 = vrot.slane %v113, %v159
    %v161 = vlaneseq
    %v162 = vshrl.u32 %v161, 7
    %v163 = vsub.s32 1, %v162
    %v164 = vrot.slane %v113, %v163
    %v165 = vcombine.low %v160, %v164
    %v167 = vunpack.c.l.s4 1983009808
    %v168 = vunpack.c.0.s8 %v167
    %v169 = vlaneseq
    %v170 = vshrl.u32 %v169, 7
    %v171 = vsub.s32 %v168, %v170
    %v172 = vrot.slane %v165, %v171
    %v181 = vcombine.low %v75, %v76
    %v182 = vcombine.low %v77, %v78
    %v184 = vunpack.c.l.s4 1983009808
    %v185 = vunpack.c.0.s8 %v184
    %v186 = vlaneseq
    %v187 = vshrl.u32 %v186, 7
    %v188 = vsub.s32 %v185, %v187
    %v189 = vrot.slane %v181, %v188
    %v191 = vunpack.c.l.s4 1983009808
    %v192 = vunpack.c.0.s8 %v191
    %v193 = vlaneseq
    %v194 = vshrl.u32 %v193, 7
    %v195 = vsub.s32 %v192, %v194
    %v196 = vrot.slane %v182, %v195
    %v197 = vcombine.low %v189, %v196
    %v198 = vcombine.low %v79, %v80
    %v199 = vcombine.low %v81, %v82
    %v201 = vunpack.c.l.s4 1983009808
    %v202 = vunpack.c.0.s8 %v201
    %v203 = vlaneseq
    %v204 = vshrl.u32 %v203, 7
    %v205 = vsub.s32 %v202, %v204
    %v206 = vrot.slane %v198, %v205
    %v208 = vunpack.c.l.s4 1983009808
    %v209 = vunpack.c.0.s8 %v208
    %v210 = vlaneseq
    %v211 = vshrl.u32 %v210, 7
    %v212 = vsub.s32 %v209, %v211
    %v213 = vrot.slane %v199, %v212
    %v214 = vcombine.low %v206, %v213
    %v215 = vcombine.low %v172, %v172
    %v217 = vunpack.c.l.s4 1983009808
    %v218 = vunpack.c.0.s8 %v217
    %v219 = vlaneseq
    %v220 = vshrl.u32 %v219, 7
    %v221 = vsub.s32 %v218, %v220
    %v222 = vrot.slane %v215, %v221
    %v223 = vcombine.low %v222, %v222
    %v224 = vcombine.high %v222, %v222
    %vm227 = vcmask 408576
    %v228 = vsel %vm227, %v197, 0
    %v230 = vsel %vm227, %v214, 0
    %vm232 = vcmask 1041408
    %v234 = vsel %vm232, %v95, 0
    %v237 = vsel %vm232, %v96, 0
    %239 = vmatprep.subr.mxu0 %v84
    %240 = vmatpush1.msra.mxu0 %v83
    %241 = vmatprep.subr.mxu0 %v86
    %242 = vmatpush1.msra.mxu0 %v85
    %243 = vmatprep.subr.mxu0 %v88
    %244 = vmatpush1.msra.mxu0 %v87
    %245 = vmatprep.subr.mxu0 %v90
    %246 = vmatpush1.msra.mxu0 %v89
    %247 = vmatprep.subr.mxu0 %v92
    %248 = vmatpush1.msra.mxu0 %v91
    %249 = vmatprep.subr.mxu0 %v94
    %250 = vmatpush1.msra.mxu0 %v93
    %251 = vmatprep.subr.mxu0 %v237
    %252 = vmatpush1.msra.mxu0 %v234
    %253 = vmatprep.subr.mxu0 0.0
    %254 = vmatpush1.msra.mxu0 0.0
    %255 = vmatprep.subr.mxu0 0.0
    %256 = vmatpush1.msra.mxu0 0.0
    %257 = vmatprep.subr.mxu0 0.0
    %258 = vmatpush1.msra.mxu0 0.0
    %259 = vmatprep.subr.mxu0 0.0
    %260 = vmatpush1.msra.mxu0 0.0
    %261 = vmatprep.subr.mxu0 0.0
    %262 = vmatpush1.msra.mxu0 0.0
    %263 = vmatprep.subr.mxu0 0.0
    %264 = vmatpush1.msra.mxu0 0.0
    %265 = vmatprep.subr.mxu0 0.0
    %266 = vmatpush1.msra.mxu0 0.0
    %267 = vmatprep.subr.mxu0 0.0
    %268 = vmatpush1.msra.mxu0 0.0
    %269 = vmatprep.subr.mxu0 0.0
    %270 = vmatpush1.msra.mxu0 0.0
    %271 = vmatprep.subr.mxu0 0.0
    %272 = vmatpush1.msra.mxu0 0.0
    %273 = vmatprep.subr.mxu0 0.0
    %274 = vmatpush1.msra.mxu0 0.0
    %275 = vmatprep.subr.mxu0 0.0
    %276 = vmatpush1.msra.mxu0 0.0
    %277 = vmatprep.subr.mxu0 0.0
    %278 = vmatpush1.msra.mxu0 0.0
    %279 = vmatprep.subr.mxu0 0.0
    %280 = vmatpush1.msra.mxu0 0.0
    %281 = vmatprep.subr.mxu0 0.0
    %282 = vmatpush1.msra.mxu0 0.0
    %283 = vmatprep.subr.mxu0 0.0
    %284 = vmatpush1.msra.mxu0 0.0
    %285 = vmatprep.subr.mxu0 0.0
    %286 = vmatpush1.msra.mxu0 0.0
    %287 = vmatprep.subr.mxu0 0.0
    %288 = vmatpush1.msra.mxu0 0.0
    %289 = vmatprep.subr.mxu0 0.0
    %290 = vmatpush1.msra.mxu0 0.0
    %291 = vmatprep.subr.mxu0 0.0
    %292 = vmatpush1.msra.mxu0 0.0
    %293 = vmatprep.subr.mxu0 0.0
    %294 = vmatpush1.msra.mxu0 0.0
    %295 = vmatprep.subr.mxu0 0.0
    %296 = vmatpush1.msra.mxu0 0.0
    %297 = vmatprep.subr.mxu0 0.0
    %298 = vmatpush1.msra.mxu0 0.0
    %299 = vmatprep.subr.mxu0 0.0
    %300 = vmatpush1.msra.mxu0 0.0
    %301 = vmatprep.subr.mxu0 0.0
    %302 = vmatpush1.msra.mxu0 0.0
    %303 = vmatprep.mubr.f32.mxu0 0.0
    %304 = vmatmul.mubr.f32.gmra.mrb[0].mxu0 %v228
    %v305 = vpop.f32.mrb[0].mxu0
    %v306 = vadd.f32 %v223, %v305
    %v307 = vpop.f32.mrb[0].mxu0
    %v308 = vadd.f32 %v224, %v307
    %309 = vmatprep.mubr.f32.mxu0 0.0
    %310 = vmatmul.mubr.f32.gmra.mrb[0].mxu0 %v230
    %v311 = vpop.f32.mrb[0].mxu0
    %v312 = vadd.f32 %v223, %v311
    %v313 = vpop.f32.mrb[0].mxu0
    %v314 = vadd.f32 %v224, %v313
    %315 = vdwg.mxu0
    %v320 = vcombine.low %v306, %v308
    %v321 = vcombine.high %v306, %v308
    %v323 = vunpack.c.l.s4 1983009808
    %v324 = vunpack.c.0.s8 %v323
    %v325 = vlaneseq
    %v326 = vshrl.u32 %v325, 7
    %v327 = vsub.s32 %v324, %v326
    %v328 = vrot.slane %v320, %v327
    %v330 = vunpack.c.l.s4 1983009808
    %v331 = vunpack.c.0.s8 %v330
    %v332 = vlaneseq
    %v333 = vshrl.u32 %v332, 7
    %v334 = vsub.s32 %v331, %v333
    %v335 = vrot.slane %v321, %v334
    %v336 = vcombine.high %v328, %v328
    %v337 = vcombine.high %v335, %v335
    %v338 = vcombine.low %v312, %v314
    %v339 = vcombine.high %v312, %v314
    %v341 = vunpack.c.l.s4 1983009808
    %v342 = vunpack.c.0.s8 %v341
    %v343 = vlaneseq
    %v344 = vshrl.u32 %v343, 7
    %v345 = vsub.s32 %v342, %v344
    %v346 = vrot.slane %v338, %v345
    %v348 = vunpack.c.l.s4 1983009808
    %v349 = vunpack.c.0.s8 %v348
    %v350 = vlaneseq
    %v351 = vshrl.u32 %v350, 7
    %v352 = vsub.s32 %v349, %v351
    %v353 = vrot.slane %v339, %v352
    %v354 = vcombine.high %v346, %v346
    %v355 = vcombine.high %v353, %v353
    %vm364 = vcmask 523264
    %v366 = vsel %vm364, 0.0, 0
    %368 = vmatprep.subr.mxu0 %v98
    %369 = vmatpush1.msra.mxu0 %v97
    %370 = vmatprep.subr.mxu0 %v100
    %371 = vmatpush1.msra.mxu0 %v99
    %372 = vmatprep.subr.mxu0 %v102
    %373 = vmatpush1.msra.mxu0 %v101
    %374 = vmatprep.subr.mxu0 %v104
    %375 = vmatpush1.msra.mxu0 %v103
    %376 = vmatprep.subr.mxu0 %v106
    %377 = vmatpush1.msra.mxu0 %v105
    %378 = vmatprep.subr.mxu0 %v108
    %379 = vmatpush1.msra.mxu0 %v107
    %380 = vmatprep.subr.mxu0 %v110
    %381 = vmatpush1.msra.mxu0 %v109
    %382 = vmatprep.subr.mxu0 %v112
    %383 = vmatpush1.msra.mxu0 %v111
    %384 = vmatprep.subr.mxu0 0.0
    %385 = vmatpush1.msra.mxu0 0.0
    %386 = vmatprep.subr.mxu0 0.0
    %387 = vmatpush1.msra.mxu0 0.0
    %388 = vmatprep.subr.mxu0 0.0
    %389 = vmatpush1.msra.mxu0 0.0
    %390 = vmatprep.subr.mxu0 0.0
    %391 = vmatpush1.msra.mxu0 0.0
    %392 = vmatprep.subr.mxu0 0.0
    %393 = vmatpush1.msra.mxu0 0.0
    %394 = vmatprep.subr.mxu0 0.0
    %395 = vmatpush1.msra.mxu0 0.0
    %396 = vmatprep.subr.mxu0 0.0
    %397 = vmatpush1.msra.mxu0 0.0
    %398 = vmatprep.subr.mxu0 0.0
    %399 = vmatpush1.msra.mxu0 0.0
    %400 = vmatprep.subr.mxu0 0.0
    %401 = vmatpush1.msra.mxu0 0.0
    %402 = vmatprep.subr.mxu0 0.0
    %403 = vmatpush1.msra.mxu0 0.0
    %404 = vmatprep.subr.mxu0 0.0
    %405 = vmatpush1.msra.mxu0 0.0
    %406 = vmatprep.subr.mxu0 0.0
    %407 = vmatpush1.msra.mxu0 0.0
    %408 = vmatprep.subr.mxu0 0.0
    %409 = vmatpush1.msra.mxu0 0.0
    %410 = vmatprep.subr.mxu0 0.0
    %411 = vmatpush1.msra.mxu0 0.0
    %412 = vmatprep.subr.mxu0 0.0
    %413 = vmatpush1.msra.mxu0 0.0
    %414 = vmatprep.subr.mxu0 0.0
    %415 = vmatpush1.msra.mxu0 0.0
    %416 = vmatprep.subr.mxu0 0.0
    %417 = vmatpush1.msra.mxu0 0.0
    %418 = vmatprep.subr.mxu0 0.0
    %419 = vmatpush1.msra.mxu0 0.0
    %420 = vmatprep.subr.mxu0 0.0
    %421 = vmatpush1.msra.mxu0 0.0
    %422 = vmatprep.subr.mxu0 0.0
    %423 = vmatpush1.msra.mxu0 0.0
    %424 = vmatprep.subr.mxu0 0.0
    %425 = vmatpush1.msra.mxu0 0.0
    %426 = vmatprep.subr.mxu0 0.0
    %427 = vmatpush1.msra.mxu0 0.0
    %428 = vmatprep.subr.mxu0 0.0
    %429 = vmatpush1.msra.mxu0 0.0
    %430 = vmatprep.subr.mxu0 0.0
    %431 = vmatpush1.msra.mxu0 0.0
    %432 = vmatprep.mubr.f32.mxu0 0.0
    %433 = vmatmul.mubr.f32.gmra.mrb[0].mxu0 %v366
    %v434 = vpop.f32.mrb[0].mxu0
    %v435 = vadd.f32 0.0, %v434
    %v436 = vpop.f32.mrb[0].mxu0
    %v437 = vadd.f32 0.0, %v436
    %438 = vdwg.mxu0
    %v441 = vcombine.low %v435, %v437
    %v443 = vunpack.c.l.s4 1983009808
    %v444 = vunpack.c.0.s8 %v443
    %v445 = vlaneseq
    %v446 = vshrl.u32 %v445, 7
    %v447 = vsub.s32 %v444, %v446
    %v448 = vrot.slane %v441, %v447
    %v450 = vadd.f32 %v328, %v448
    %v451 = vxor.u32 %v450, 2147483648
    %v452 = vmul.f32 %v451, 1.442695
    %v453 = vpow.pop %v452
    %v454 = vadd.f32 %v453, 1.0
    %v455 = vrcp.pop %v454
    %v456 = vmul.f32 1.0, %v455
    %v458 = vrot.slane %v450, 2
    %v460 = vtanh.pop %v458
    %461 = vrot.lane.b32.xlu0 %v450, 64
    %v462 = vpop.permute.xlu0 %461
    %v463 = vrot.slane %v462, 2
    %v465 = vxor.u32 %v463, 2147483648
    %v466 = vmul.f32 %v465, 1.442695
    %v467 = vpow.pop %v466
    %v468 = vadd.f32 %v467, 1.0
    %v469 = vrcp.pop %v468
    %v470 = vmul.f32 1.0, %v469
    %v471 = vmul.f32 %v456, 0.0
    %v472 = vmul.f32 %v456, %v460
    %474 = vrot.lane.b32.xlu0 %v472, 64
    %v475 = vpop.permute.xlu0 %474
    %v477 = vadd.f32 %v471, %v475
    %v478 = vtanh.pop %v477
    %480 = vrot.lane.b32.xlu0 %v478, 64
    %v481 = vpop.permute.xlu0 %480
    %v483 = vmul.f32 %v470, %v481
    %v485 = vsel %vm364, %v483, 0
    %487 = vmatprep.subr.mxu0 %v98
    %488 = vmatpush1.msra.mxu0 %v97
    %489 = vmatprep.subr.mxu0 %v100
    %490 = vmatpush1.msra.mxu0 %v99
    %491 = vmatprep.subr.mxu0 %v102
    %492 = vmatpush1.msra.mxu0 %v101
    %493 = vmatprep.subr.mxu0 %v104
    %494 = vmatpush1.msra.mxu0 %v103
    %495 = vmatprep.subr.mxu0 %v106
    %496 = vmatpush1.msra.mxu0 %v105
    %497 = vmatprep.subr.mxu0 %v108
    %498 = vmatpush1.msra.mxu0 %v107
    %499 = vmatprep.subr.mxu0 %v110
    %500 = vmatpush1.msra.mxu0 %v109
    %501 = vmatprep.subr.mxu0 %v112
    %502 = vmatpush1.msra.mxu0 %v111
    %503 = vmatprep.subr.mxu0 0.0
    %504 = vmatpush1.msra.mxu0 0.0
    %505 = vmatprep.subr.mxu0 0.0
    %506 = vmatpush1.msra.mxu0 0.0
    %507 = vmatprep.subr.mxu0 0.0
    %508 = vmatpush1.msra.mxu0 0.0
    %509 = vmatprep.subr.mxu0 0.0
    %510 = vmatpush1.msra.mxu0 0.0
    %511 = vmatprep.subr.mxu0 0.0
    %512 = vmatpush1.msra.mxu0 0.0
    %513 = vmatprep.subr.mxu0 0.0
    %514 = vmatpush1.msra.mxu0 0.0
    %515 = vmatprep.subr.mxu0 0.0
    %516 = vmatpush1.msra.mxu0 0.0
    %517 = vmatprep.subr.mxu0 0.0
    %518 = vmatpush1.msra.mxu0 0.0
    %519 = vmatprep.subr.mxu0 0.0
    %520 = vmatpush1.msra.mxu0 0.0
    %521 = vmatprep.subr.mxu0 0.0
    %522 = vmatpush1.msra.mxu0 0.0
    %523 = vmatprep.subr.mxu0 0.0
    %524 = vmatpush1.msra.mxu0 0.0
    %525 = vmatprep.subr.mxu0 0.0
    %526 = vmatpush1.msra.mxu0 0.0
    %527 = vmatprep.subr.mxu0 0.0
    %528 = vmatpush1.msra.mxu0 0.0
    %529 = vmatprep.subr.mxu0 0.0
    %530 = vmatpush1.msra.mxu0 0.0
    %531 = vmatprep.subr.mxu0 0.0
    %532 = vmatpush1.msra.mxu0 0.0
    %533 = vmatprep.subr.mxu0 0.0
    %534 = vmatpush1.msra.mxu0 0.0
    %535 = vmatprep.subr.mxu0 0.0
    %536 = vmatpush1.msra.mxu0 0.0
    %537 = vmatprep.subr.mxu0 0.0
    %538 = vmatpush1.msra.mxu0 0.0
    %539 = vmatprep.subr.mxu0 0.0
    %540 = vmatpush1.msra.mxu0 0.0
    %541 = vmatprep.subr.mxu0 0.0
    %542 = vmatpush1.msra.mxu0 0.0
    %543 = vmatprep.subr.mxu0 0.0
    %544 = vmatpush1.msra.mxu0 0.0
    %545 = vmatprep.subr.mxu0 0.0
    %546 = vmatpush1.msra.mxu0 0.0
    %547 = vmatprep.subr.mxu0 0.0
    %548 = vmatpush1.msra.mxu0 0.0
    %549 = vmatprep.subr.mxu0 0.0
    %550 = vmatpush1.msra.mxu0 0.0
    %551 = vmatprep.mubr.f32.mxu0 0.0
    %552 = vmatmul.mubr.f32.gmra.mrb[0].mxu0 %v485
    %v553 = vpop.f32.mrb[0].mxu0
    %v554 = vadd.f32 0.0, %v553
    %v555 = vpop.f32.mrb[0].mxu0
    %v556 = vadd.f32 0.0, %v555
    %557 = vdwg.mxu0
    %v560 = vcombine.low %v554, %v556
    %v562 = vunpack.c.l.s4 1983009808
    %v563 = vunpack.c.0.s8 %v562
    %v564 = vlaneseq
    %v565 = vshrl.u32 %v564, 7
    %v566 = vsub.s32 %v563, %v565
    %v567 = vrot.slane %v560, %v566
    %v569 = vadd.f32 %v336, %v567
    %v570 = vxor.u32 %v569, 2147483648
    %v571 = vmul.f32 %v570, 1.442695
    %v572 = vpow.pop %v571
    %v573 = vadd.f32 %v572, 1.0
    %v574 = vrcp.pop %v573
    %v575 = vmul.f32 1.0, %v574
    %v577 = vrot.slane %v569, 2
    %v579 = vtanh.pop %v577
    %580 = vrot.lane.b32.xlu0 %v569, 64
    %v581 = vpop.permute.xlu0 %580
    %v582 = vrot.slane %v581, 2
    %v584 = vxor.u32 %v582, 2147483648
    %v585 = vmul.f32 %v584, 1.442695
    %v586 = vpow.pop %v585
    %v587 = vadd.f32 %v586, 1.0
    %v588 = vrcp.pop %v587
    %v589 = vmul.f32 1.0, %v588
    %v590 = vmul.f32 %v575, %v477
    %v591 = vmul.f32 %v575, %v579
    %593 = vrot.lane.b32.xlu0 %v591, 64
    %v594 = vpop.permute.xlu0 %593
    %v596 = vadd.f32 %v590, %v594
    %v597 = vtanh.pop %v596
    %599 = vrot.lane.b32.xlu0 %v597, 64
    %v600 = vpop.permute.xlu0 %599
    %v602 = vmul.f32 %v589, %v600
    %v604 = vsel %vm364, %v602, 0
    %606 = vmatprep.subr.mxu0 %v98
    %607 = vmatpush1.msra.mxu0 %v97
    %608 = vmatprep.subr.mxu0 %v100
    %609 = vmatpush1.msra.mxu0 %v99
    %610 = vmatprep.subr.mxu0 %v102
    %611 = vmatpush1.msra.mxu0 %v101
    %612 = vmatprep.subr.mxu0 %v104
    %613 = vmatpush1.msra.mxu0 %v103
    %614 = vmatprep.subr.mxu0 %v106
    %615 = vmatpush1.msra.mxu0 %v105
    %616 = vmatprep.subr.mxu0 %v108
    %617 = vmatpush1.msra.mxu0 %v107
    %618 = vmatprep.subr.mxu0 %v110
    %619 = vmatpush1.msra.mxu0 %v109
    %620 = vmatprep.subr.mxu0 %v112
    %621 = vmatpush1.msra.mxu0 %v111
    %622 = vmatprep.subr.mxu0 0.0
    %623 = vmatpush1.msra.mxu0 0.0
    %624 = vmatprep.subr.mxu0 0.0
    %625 = vmatpush1.msra.mxu0 0.0
    %626 = vmatprep.subr.mxu0 0.0
    %627 = vmatpush1.msra.mxu0 0.0
    %628 = vmatprep.subr.mxu0 0.0
    %629 = vmatpush1.msra.mxu0 0.0
    %630 = vmatprep.subr.mxu0 0.0
    %631 = vmatpush1.msra.mxu0 0.0
    %632 = vmatprep.subr.mxu0 0.0
    %633 = vmatpush1.msra.mxu0 0.0
    %634 = vmatprep.subr.mxu0 0.0
    %635 = vmatpush1.msra.mxu0 0.0
    %636 = vmatprep.subr.mxu0 0.0
    %637 = vmatpush1.msra.mxu0 0.0
    %638 = vmatprep.subr.mxu0 0.0
    %639 = vmatpush1.msra.mxu0 0.0
    %640 = vmatprep.subr.mxu0 0.0
    %641 = vmatpush1.msra.mxu0 0.0
    %642 = vmatprep.subr.mxu0 0.0
    %643 = vmatpush1.msra.mxu0 0.0
    %644 = vmatprep.subr.mxu0 0.0
    %645 = vmatpush1.msra.mxu0 0.0
    %646 = vmatprep.subr.mxu0 0.0
    %647 = vmatpush1.msra.mxu0 0.0
    %648 = vmatprep.subr.mxu0 0.0
    %649 = vmatpush1.msra.mxu0 0.0
    %650 = vmatprep.subr.mxu0 0.0
    %651 = vmatpush1.msra.mxu0 0.0
    %652 = vmatprep.subr.mxu0 0.0
    %653 = vmatpush1.msra.mxu0 0.0
    %654 = vmatprep.subr.mxu0 0.0
    %655 = vmatpush1.msra.mxu0 0.0
    %656 = vmatprep.subr.mxu0 0.0
    %657 = vmatpush1.msra.mxu0 0.0
    %658 = vmatprep.subr.mxu0 0.0
    %659 = vmatpush1.msra.mxu0 0.0
    %660 = vmatprep.subr.mxu0 0.0
    %661 = vmatpush1.msra.mxu0 0.0
    %662 = vmatprep.subr.mxu0 0.0
    %663 = vmatpush1.msra.mxu0 0.0
    %664 = vmatprep.subr.mxu0 0.0
    %665 = vmatpush1.msra.mxu0 0.0
    %666 = vmatprep.subr.mxu0 0.0
    %667 = vmatpush1.msra.mxu0 0.0
    %668 = vmatprep.subr.mxu0 0.0
    %669 = vmatpush1.msra.mxu0 0.0
    %670 = vmatprep.mubr.f32.mxu0 0.0
    %671 = vmatmul.mubr.f32.gmra.mrb[0].mxu0 %v604
    %v672 = vpop.f32.mrb[0].mxu0
    %v673 = vadd.f32 0.0, %v672
    %v674 = vpop.f32.mrb[0].mxu0
    %v675 = vadd.f32 0.0, %v674
    %676 = vdwg.mxu0
    %v679 = vcombine.low %v673, %v675
    %v681 = vunpack.c.l.s4 1983009808
    %v682 = vunpack.c.0.s8 %v681
    %v683 = vlaneseq
    %v684 = vshrl.u32 %v683, 7
    %v685 = vsub.s32 %v682, %v684
    %v686 = vrot.slane %v679, %v685
    %v688 = vadd.f32 %v335, %v686
    %v689 = vxor.u32 %v688, 2147483648
    %v690 = vmul.f32 %v689, 1.442695
    %v691 = vpow.pop %v690
    %v692 = vadd.f32 %v691, 1.0
    %v693 = vrcp.pop %v692
    %v694 = vmul.f32 1.0, %v693
    %v696 = vrot.slane %v688, 2
    %v698 = vtanh.pop %v696
    %699 = vrot.lane.b32.xlu0 %v688, 64
    %v700 = vpop.permute.xlu0 %699
    %v701 = vrot.slane %v700, 2
    %v703 = vxor.u32 %v701, 2147483648
    %v704 = vmul.f32 %v703, 1.442695
    %v705 = vpow.pop %v704
    %v706 = vadd.f32 %v705, 1.0
    %v707 = vrcp.pop %v706
    %v708 = vmul.f32 1.0, %v707
    %v709 = vmul.f32 %v694, %v596
    %v710 = vmul.f32 %v694, %v698
    %712 = vrot.lane.b32.xlu0 %v710, 64
    %v713 = vpop.permute.xlu0 %712
    %v715 = vadd.f32 %v709, %v713
    %v716 = vtanh.pop %v715
    %718 = vrot.lane.b32.xlu0 %v716, 64
    %v719 = vpop.permute.xlu0 %718
    %v721 = vmul.f32 %v708, %v719
    %v723 = vsel %vm364, %v721, 0
    %725 = vmatprep.subr.mxu0 %v98
    %726 = vmatpush1.msra.mxu0 %v97
    %727 = vmatprep.subr.mxu0 %v100
    %728 = vmatpush1.msra.mxu0 %v99
    %729 = vmatprep.subr.mxu0 %v102
    %730 = vmatpush1.msra.mxu0 %v101
    %731 = vmatprep.subr.mxu0 %v104
    %732 = vmatpush1.msra.mxu0 %v103
    %733 = vmatprep.subr.mxu0 %v106
    %734 = vmatpush1.msra.mxu0 %v105
    %735 = vmatprep.subr.mxu0 %v108
    %736 = vmatpush1.msra.mxu0 %v107
    %737 = vmatprep.subr.mxu0 %v110
    %738 = vmatpush1.msra.mxu0 %v109
    %739 = vmatprep.subr.mxu0 %v112
    %740 = vmatpush1.msra.mxu0 %v111
    %741 = vmatprep.subr.mxu0 0.0
    %742 = vmatpush1.msra.mxu0 0.0
    %743 = vmatprep.subr.mxu0 0.0
    %744 = vmatpush1.msra.mxu0 0.0
    %745 = vmatprep.subr.mxu0 0.0
    %746 = vmatpush1.msra.mxu0 0.0
    %747 = vmatprep.subr.mxu0 0.0
    %748 = vmatpush1.msra.mxu0 0.0
    %749 = vmatprep.subr.mxu0 0.0
    %750 = vmatpush1.msra.mxu0 0.0
    %751 = vmatprep.subr.mxu0 0.0
    %752 = vmatpush1.msra.mxu0 0.0
    %753 = vmatprep.subr.mxu0 0.0
    %754 = vmatpush1.msra.mxu0 0.0
    %755 = vmatprep.subr.mxu0 0.0
    %756 = vmatpush1.msra.mxu0 0.0
    %757 = vmatprep.subr.mxu0 0.0
    %758 = vmatpush1.msra.mxu0 0.0
    %759 = vmatprep.subr.mxu0 0.0
    %760 = vmatpush1.msra.mxu0 0.0
    %761 = vmatprep.subr.mxu0 0.0
    %762 = vmatpush1.msra.mxu0 0.0
    %763 = vmatprep.subr.mxu0 0.0
    %764 = vmatpush1.msra.mxu0 0.0
    %765 = vmatprep.subr.mxu0 0.0
    %766 = vmatpush1.msra.mxu0 0.0
    %767 = vmatprep.subr.mxu0 0.0
    %768 = vmatpush1.msra.mxu0 0.0
    %769 = vmatprep.subr.mxu0 0.0
    %770 = vmatpush1.msra.mxu0 0.0
    %771 = vmatprep.subr.mxu0 0.0
    %772 = vmatpush1.msra.mxu0 0.0
    %773 = vmatprep.subr.mxu0 0.0
    %774 = vmatpush1.msra.mxu0 0.0
    %775 = vmatprep.subr.mxu0 0.0
    %776 = vmatpush1.msra.mxu0 0.0
    %777 = vmatprep.subr.mxu0 0.0
    %778 = vmatpush1.msra.mxu0 0.0
    %779 = vmatprep.subr.mxu0 0.0
    %780 = vmatpush1.msra.mxu0 0.0
    %781 = vmatprep.subr.mxu0 0.0
    %782 = vmatpush1.msra.mxu0 0.0
    %783 = vmatprep.subr.mxu0 0.0
    %784 = vmatpush1.msra.mxu0 0.0
    %785 = vmatprep.subr.mxu0 0.0
    %786 = vmatpush1.msra.mxu0 0.0
    %787 = vmatprep.subr.mxu0 0.0
    %788 = vmatpush1.msra.mxu0 0.0
    %789 = vmatprep.mubr.f32.mxu0 0.0
    %790 = vmatmul.mubr.f32.gmra.mrb[0].mxu0 %v723
    %v791 = vpop.f32.mrb[0].mxu0
    %v792 = vadd.f32 0.0, %v791
    %v793 = vpop.f32.mrb[0].mxu0
    %v794 = vadd.f32 0.0, %v793
    %795 = vdwg.mxu0
    %v798 = vcombine.low %v792, %v794
    %v800 = vunpack.c.l.s4 1983009808
    %v801 = vunpack.c.0.s8 %v800
    %v802 = vlaneseq
    %v803 = vshrl.u32 %v802, 7
    %v804 = vsub.s32 %v801, %v803
    %v805 = vrot.slane %v798, %v804
    %v807 = vadd.f32 %v337, %v805
    %v808 = vxor.u32 %v807, 2147483648
    %v809 = vmul.f32 %v808, 1.442695
    %v810 = vpow.pop %v809
    %v811 = vadd.f32 %v810, 1.0
    %v812 = vrcp.pop %v811
    %v813 = vmul.f32 1.0, %v812
    %v815 = vrot.slane %v807, 2
    %v817 = vtanh.pop %v815
    %818 = vrot.lane.b32.xlu0 %v807, 64
    %v819 = vpop.permute.xlu0 %818
    %v820 = vrot.slane %v819, 2
    %v822 = vxor.u32 %v820, 2147483648
    %v823 = vmul.f32 %v822, 1.442695
    %v824 = vpow.pop %v823
    %v825 = vadd.f32 %v824, 1.0
    %v826 = vrcp.pop %v825
    %v827 = vmul.f32 1.0, %v826
    %v828 = vmul.f32 %v813, %v715
    %v829 = vmul.f32 %v813, %v817
    %831 = vrot.lane.b32.xlu0 %v829, 64
    %v832 = vpop.permute.xlu0 %831
    %v834 = vadd.f32 %v828, %v832
    %v835 = vtanh.pop %v834
    %837 = vrot.lane.b32.xlu0 %v835, 64
    %v838 = vpop.permute.xlu0 %837
    %v840 = vmul.f32 %v827, %v838
    %v842 = vsel %vm364, %v840, 0
    %844 = vmatprep.subr.mxu0 %v98
    %845 = vmatpush1.msra.mxu0 %v97
    %846 = vmatprep.subr.mxu0 %v100
    %847 = vmatpush1.msra.mxu0 %v99
    %848 = vmatprep.subr.mxu0 %v102
    %849 = vmatpush1.msra.mxu0 %v101
    %850 = vmatprep.subr.mxu0 %v104
    %851 = vmatpush1.msra.mxu0 %v103
    %852 = vmatprep.subr.mxu0 %v106
    %853 = vmatpush1.msra.mxu0 %v105
    %854 = vmatprep.subr.mxu0 %v108
    %855 = vmatpush1.msra.mxu0 %v107
    %856 = vmatprep.subr.mxu0 %v110
    %857 = vmatpush1.msra.mxu0 %v109
    %858 = vmatprep.subr.mxu0 %v112
    %859 = vmatpush1.msra.mxu0 %v111
    %860 = vmatprep.subr.mxu0 0.0
    %861 = vmatpush1.msra.mxu0 0.0
    %862 = vmatprep.subr.mxu0 0.0
    %863 = vmatpush1.msra.mxu0 0.0
    %864 = vmatprep.subr.mxu0 0.0
    %865 = vmatpush1.msra.mxu0 0.0
    %866 = vmatprep.subr.mxu0 0.0
    %867 = vmatpush1.msra.mxu0 0.0
    %868 = vmatprep.subr.mxu0 0.0
    %869 = vmatpush1.msra.mxu0 0.0
    %870 = vmatprep.subr.mxu0 0.0
    %871 = vmatpush1.msra.mxu0 0.0
    %872 = vmatprep.subr.mxu0 0.0
    %873 = vmatpush1.msra.mxu0 0.0
    %874 = vmatprep.subr.mxu0 0.0
    %875 = vmatpush1.msra.mxu0 0.0
    %876 = vmatprep.subr.mxu0 0.0
    %877 = vmatpush1.msra.mxu0 0.0
    %878 = vmatprep.subr.mxu0 0.0
    %879 = vmatpush1.msra.mxu0 0.0
    %880 = vmatprep.subr.mxu0 0.0
    %881 = vmatpush1.msra.mxu0 0.0
    %882 = vmatprep.subr.mxu0 0.0
    %883 = vmatpush1.msra.mxu0 0.0
    %884 = vmatprep.subr.mxu0 0.0
    %885 = vmatpush1.msra.mxu0 0.0
    %886 = vmatprep.subr.mxu0 0.0
    %887 = vmatpush1.msra.mxu0 0.0
    %888 = vmatprep.subr.mxu0 0.0
    %889 = vmatpush1.msra.mxu0 0.0
    %890 = vmatprep.subr.mxu0 0.0
    %891 = vmatpush1.msra.mxu0 0.0
    %892 = vmatprep.subr.mxu0 0.0
    %893 = vmatpush1.msra.mxu0 0.0
    %894 = vmatprep.subr.mxu0 0.0
    %895 = vmatpush1.msra.mxu0 0.0
    %896 = vmatprep.subr.mxu0 0.0
    %897 = vmatpush1.msra.mxu0 0.0
    %898 = vmatprep.subr.mxu0 0.0
    %899 = vmatpush1.msra.mxu0 0.0
    %900 = vmatprep.subr.mxu0 0.0
    %901 = vmatpush1.msra.mxu0 0.0
    %902 = vmatprep.subr.mxu0 0.0
    %903 = vmatpush1.msra.mxu0 0.0
    %904 = vmatprep.subr.mxu0 0.0
    %905 = vmatpush1.msra.mxu0 0.0
    %906 = vmatprep.subr.mxu0 0.0
    %907 = vmatpush1.msra.mxu0 0.0
    %908 = vmatprep.mubr.f32.mxu0 0.0
    %909 = vmatmul.mubr.f32.gmra.mrb[0].mxu0 %v842
    %v910 = vpop.f32.mrb[0].mxu0
    %v911 = vadd.f32 0.0, %v910
    %v912 = vpop.f32.mrb[0].mxu0
    %v913 = vadd.f32 0.0, %v912
    %914 = vdwg.mxu0
    %v917 = vcombine.low %v911, %v913
    %v919 = vunpack.c.l.s4 1983009808
    %v920 = vunpack.c.0.s8 %v919
    %v921 = vlaneseq
    %v922 = vshrl.u32 %v921, 7
    %v923 = vsub.s32 %v920, %v922
    %v924 = vrot.slane %v917, %v923
    %v926 = vadd.f32 %v346, %v924
    %v927 = vxor.u32 %v926, 2147483648
    %v928 = vmul.f32 %v927, 1.442695
    %v929 = vpow.pop %v928
    %v930 = vadd.f32 %v929, 1.0
    %v931 = vrcp.pop %v930
    %v932 = vmul.f32 1.0, %v931
    %v934 = vrot.slane %v926, 2
    %v936 = vtanh.pop %v934
    %937 = vrot.lane.b32.xlu0 %v926, 64
    %v938 = vpop.permute.xlu0 %937
    %v939 = vrot.slane %v938, 2
    %v941 = vxor.u32 %v939, 2147483648
    %v942 = vmul.f32 %v941, 1.442695
    %v943 = vpow.pop %v942
    %v944 = vadd.f32 %v943, 1.0
    %v945 = vrcp.pop %v944
    %v946 = vmul.f32 1.0, %v945
    %v947 = vmul.f32 %v932, %v834
    %v948 = vmul.f32 %v932, %v936
    %950 = vrot.lane.b32.xlu0 %v948, 64
    %v951 = vpop.permute.xlu0 %950
    %v953 = vadd.f32 %v947, %v951
    %v954 = vtanh.pop %v953
    %956 = vrot.lane.b32.xlu0 %v954, 64
    %v957 = vpop.permute.xlu0 %956
    %v959 = vmul.f32 %v946, %v957
    %v961 = vsel %vm364, %v959, 0
    %963 = vmatprep.subr.mxu0 %v98
    %964 = vmatpush1.msra.mxu0 %v97
    %965 = vmatprep.subr.mxu0 %v100
    %966 = vmatpush1.msra.mxu0 %v99
    %967 = vmatprep.subr.mxu0 %v102
    %968 = vmatpush1.msra.mxu0 %v101
    %969 = vmatprep.subr.mxu0 %v104
    %970 = vmatpush1.msra.mxu0 %v103
    %971 = vmatprep.subr.mxu0 %v106
    %972 = vmatpush1.msra.mxu0 %v105
    %973 = vmatprep.subr.mxu0 %v108
    %974 = vmatpush1.msra.mxu0 %v107
    %975 = vmatprep.subr.mxu0 %v110
    %976 = vmatpush1.msra.mxu0 %v109
    %977 = vmatprep.subr.mxu0 %v112
    %978 = vmatpush1.msra.mxu0 %v111
    %979 = vmatprep.subr.mxu0 0.0
    %980 = vmatpush1.msra.mxu0 0.0
    %981 = vmatprep.subr.mxu0 0.0
    %982 = vmatpush1.msra.mxu0 0.0
    %983 = vmatprep.subr.mxu0 0.0
    %984 = vmatpush1.msra.mxu0 0.0
    %985 = vmatprep.subr.mxu0 0.0
    %986 = vmatpush1.msra.mxu0 0.0
    %987 = vmatprep.subr.mxu0 0.0
    %988 = vmatpush1.msra.mxu0 0.0
    %989 = vmatprep.subr.mxu0 0.0
    %990 = vmatpush1.msra.mxu0 0.0
    %991 = vmatprep.subr.mxu0 0.0
    %992 = vmatpush1.msra.mxu0 0.0
    %993 = vmatprep.subr.mxu0 0.0
    %994 = vmatpush1.msra.mxu0 0.0
    %995 = vmatprep.subr.mxu0 0.0
    %996 = vmatpush1.msra.mxu0 0.0
    %997 = vmatprep.subr.mxu0 0.0
    %998 = vmatpush1.msra.mxu0 0.0
    %999 = vmatprep.subr.mxu0 0.0
    %1000 = vmatpush1.msra.mxu0 0.0
    %1001 = vmatprep.subr.mxu0 0.0
    %1002 = vmatpush1.msra.mxu0 0.0
    %1003 = vmatprep.subr.mxu0 0.0
    %1004 = vmatpush1.msra.mxu0 0.0
    %1005 = vmatprep.subr.mxu0 0.0
    %1006 = vmatpush1.msra.mxu0 0.0
    %1007 = vmatprep.subr.mxu0 0.0
    %1008 = vmatpush1.msra.mxu0 0.0
    %1009 = vmatprep.subr.mxu0 0.0
    %1010 = vmatpush1.msra.mxu0 0.0
    %1011 = vmatprep.subr.mxu0 0.0
    %1012 = vmatpush1.msra.mxu0 0.0
    %1013 = vmatprep.subr.mxu0 0.0
    %1014 = vmatpush1.msra.mxu0 0.0
    %1015 = vmatprep.subr.mxu0 0.0
    %1016 = vmatpush1.msra.mxu0 0.0
    %1017 = vmatprep.subr.mxu0 0.0
    %1018 = vmatpush1.msra.mxu0 0.0
    %1019 = vmatprep.subr.mxu0 0.0
    %1020 = vmatpush1.msra.mxu0 0.0
    %1021 = vmatprep.subr.mxu0 0.0
    %1022 = vmatpush1.msra.mxu0 0.0
    %1023 = vmatprep.subr.mxu0 0.0
    %1024 = vmatpush1.msra.mxu0 0.0
    %1025 = vmatprep.subr.mxu0 0.0
    %1026 = vmatpush1.msra.mxu0 0.0
    %1027 = vmatprep.mubr.f32.mxu0 0.0
    %1028 = vmatmul.mubr.f32.gmra.mrb[0].mxu0 %v961
    %v1029 = vpop.f32.mrb[0].mxu0
    %v1030 = vadd.f32 0.0, %v1029
    %v1031 = vpop.f32.mrb[0].mxu0
    %v1032 = vadd.f32 0.0, %v1031
    %1033 = vdwg.mxu0
    %v1036 = vcombine.low %v1030, %v1032
    %v1038 = vunpack.c.l.s4 1983009808
    %v1039 = vunpack.c.0.s8 %v1038
    %v1040 = vlaneseq
    %v1041 = vshrl.u32 %v1040, 7
    %v1042 = vsub.s32 %v1039, %v1041
    %v1043 = vrot.slane %v1036, %v1042
    %v1045 = vadd.f32 %v354, %v1043
    %v1046 = vxor.u32 %v1045, 2147483648
    %v1047 = vmul.f32 %v1046, 1.442695
    %v1048 = vpow.pop %v1047
    %v1049 = vadd.f32 %v1048, 1.0
    %v1050 = vrcp.pop %v1049
    %v1051 = vmul.f32 1.0, %v1050
    %v1053 = vrot.slane %v1045, 2
    %v1055 = vtanh.pop %v1053
    %1056 = vrot.lane.b32.xlu0 %v1045, 64
    %v1057 = vpop.permute.xlu0 %1056
    %v1058 = vrot.slane %v1057, 2
    %v1060 = vxor.u32 %v1058, 2147483648
    %v1061 = vmul.f32 %v1060, 1.442695
    %v1062 = vpow.pop %v1061
    %v1063 = vadd.f32 %v1062, 1.0
    %v1064 = vrcp.pop %v1063
    %v1065 = vmul.f32 1.0, %v1064
    %v1066 = vmul.f32 %v1051, %v953
    %v1067 = vmul.f32 %v1051, %v1055
    %1069 = vrot.lane.b32.xlu0 %v1067, 64
    %v1070 = vpop.permute.xlu0 %1069
    %v1072 = vadd.f32 %v1066, %v1070
    %v1073 = vtanh.pop %v1072
    %1075 = vrot.lane.b32.xlu0 %v1073, 64
    %v1076 = vpop.permute.xlu0 %1075
    %v1078 = vmul.f32 %v1065, %v1076
    %v1080 = vsel %vm364, %v1078, 0
    %1082 = vmatprep.subr.mxu0 %v98
    %1083 = vmatpush1.msra.mxu0 %v97
    %1084 = vmatprep.subr.mxu0 %v100
    %1085 = vmatpush1.msra.mxu0 %v99
    %1086 = vmatprep.subr.mxu0 %v102
    %1087 = vmatpush1.msra.mxu0 %v101
    %1088 = vmatprep.subr.mxu0 %v104
    %1089 = vmatpush1.msra.mxu0 %v103
    %1090 = vmatprep.subr.mxu0 %v106
    %1091 = vmatpush1.msra.mxu0 %v105
    %1092 = vmatprep.subr.mxu0 %v108
    %1093 = vmatpush1.msra.mxu0 %v107
    %1094 = vmatprep.subr.mxu0 %v110
    %1095 = vmatpush1.msra.mxu0 %v109
    %1096 = vmatprep.subr.mxu0 %v112
    %1097 = vmatpush1.msra.mxu0 %v111
    %1098 = vmatprep.subr.mxu0 0.0
    %1099 = vmatpush1.msra.mxu0 0.0
    %1100 = vmatprep.subr.mxu0 0.0
    %1101 = vmatpush1.msra.mxu0 0.0
    %1102 = vmatprep.subr.mxu0 0.0
    %1103 = vmatpush1.msra.mxu0 0.0
    %1104 = vmatprep.subr.mxu0 0.0
    %1105 = vmatpush1.msra.mxu0 0.0
    %1106 = vmatprep.subr.mxu0 0.0
    %1107 = vmatpush1.msra.mxu0 0.0
    %1108 = vmatprep.subr.mxu0 0.0
    %1109 = vmatpush1.msra.mxu0 0.0
    %1110 = vmatprep.subr.mxu0 0.0
    %1111 = vmatpush1.msra.mxu0 0.0
    %1112 = vmatprep.subr.mxu0 0.0
    %1113 = vmatpush1.msra.mxu0 0.0
    %1114 = vmatprep.subr.mxu0 0.0
    %1115 = vmatpush1.msra.mxu0 0.0
    %1116 = vmatprep.subr.mxu0 0.0
    %1117 = vmatpush1.msra.mxu0 0.0
    %1118 = vmatprep.subr.mxu0 0.0
    %1119 = vmatpush1.msra.mxu0 0.0
    %1120 = vmatprep.subr.mxu0 0.0
    %1121 = vmatpush1.msra.mxu0 0.0
    %1122 = vmatprep.subr.mxu0 0.0
    %1123 = vmatpush1.msra.mxu0 0.0
    %1124 = vmatprep.subr.mxu0 0.0
    %1125 = vmatpush1.msra.mxu0 0.0
    %1126 = vmatprep.subr.mxu0 0.0
    %1127 = vmatpush1.msra.mxu0 0.0
    %1128 = vmatprep.subr.mxu0 0.0
    %1129 = vmatpush1.msra.mxu0 0.0
    %1130 = vmatprep.subr.mxu0 0.0
    %1131 = vmatpush1.msra.mxu0 0.0
    %1132 = vmatprep.subr.mxu0 0.0
    %1133 = vmatpush1.msra.mxu0 0.0
    %1134 = vmatprep.subr.mxu0 0.0
    %1135 = vmatpush1.msra.mxu0 0.0
    %1136 = vmatprep.subr.mxu0 0.0
    %1137 = vmatpush1.msra.mxu0 0.0
    %1138 = vmatprep.subr.mxu0 0.0
    %1139 = vmatpush1.msra.mxu0 0.0
    %1140 = vmatprep.subr.mxu0 0.0
    %1141 = vmatpush1.msra.mxu0 0.0
    %1142 = vmatprep.subr.mxu0 0.0
    %1143 = vmatpush1.msra.mxu0 0.0
    %1144 = vmatprep.subr.mxu0 0.0
    %1145 = vmatpush1.msra.mxu0 0.0
    %1146 = vmatprep.mubr.f32.mxu0 0.0
    %1147 = vmatmul.mubr.f32.gmra.mrb[0].mxu0 %v1080
    %v1148 = vpop.f32.mrb[0].mxu0
    %v1149 = vadd.f32 0.0, %v1148
    %v1150 = vpop.f32.mrb[0].mxu0
    %v1151 = vadd.f32 0.0, %v1150
    %1152 = vdwg.mxu0
    %v1155 = vcombine.low %v1149, %v1151
    %v1157 = vunpack.c.l.s4 1983009808
    %v1158 = vunpack.c.0.s8 %v1157
    %v1159 = vlaneseq
    %v1160 = vshrl.u32 %v1159, 7
    %v1161 = vsub.s32 %v1158, %v1160
    %v1162 = vrot.slane %v1155, %v1161
    %v1164 = vadd.f32 %v353, %v1162
    %v1165 = vxor.u32 %v1164, 2147483648
    %v1166 = vmul.f32 %v1165, 1.442695
    %v1167 = vpow.pop %v1166
    %v1168 = vadd.f32 %v1167, 1.0
    %v1169 = vrcp.pop %v1168
    %v1170 = vmul.f32 1.0, %v1169
    %v1172 = vrot.slane %v1164, 2
    %v1174 = vtanh.pop %v1172
    %1175 = vrot.lane.b32.xlu0 %v1164, 64
    %v1176 = vpop.permute.xlu0 %1175
    %v1177 = vrot.slane %v1176, 2
    %v1179 = vxor.u32 %v1177, 2147483648
    %v1180 = vmul.f32 %v1179, 1.442695
    %v1181 = vpow.pop %v1180
    %v1182 = vadd.f32 %v1181, 1.0
    %v1183 = vrcp.pop %v1182
    %v1184 = vmul.f32 1.0, %v1183
    %v1185 = vmul.f32 %v1170, %v1072
    %v1186 = vmul.f32 %v1170, %v1174
    %1188 = vrot.lane.b32.xlu0 %v1186, 64
    %v1189 = vpop.permute.xlu0 %1188
    %v1191 = vadd.f32 %v1185, %v1189
    %v1192 = vtanh.pop %v1191
    %1194 = vrot.lane.b32.xlu0 %v1192, 64
    %v1195 = vpop.permute.xlu0 %1194
    %v1197 = vmul.f32 %v1184, %v1195
    %v1199 = vsel %vm364, %v1197, 0
    %1201 = vmatprep.subr.mxu0 %v98
    %1202 = vmatpush1.msra.mxu0 %v97
    %1203 = vmatprep.subr.mxu0 %v100
    %1204 = vmatpush1.msra.mxu0 %v99
    %1205 = vmatprep.subr.mxu0 %v102
    %1206 = vmatpush1.msra.mxu0 %v101
    %1207 = vmatprep.subr.mxu0 %v104
    %1208 = vmatpush1.msra.mxu0 %v103
    %1209 = vmatprep.subr.mxu0 %v106
    %1210 = vmatpush1.msra.mxu0 %v105
    %1211 = vmatprep.subr.mxu0 %v108
    %1212 = vmatpush1.msra.mxu0 %v107
    %1213 = vmatprep.subr.mxu0 %v110
    %1214 = vmatpush1.msra.mxu0 %v109
    %1215 = vmatprep.subr.mxu0 %v112
    %1216 = vmatpush1.msra.mxu0 %v111
    %1217 = vmatprep.subr.mxu0 0.0
    %1218 = vmatpush1.msra.mxu0 0.0
    %1219 = vmatprep.subr.mxu0 0.0
    %1220 = vmatpush1.msra.mxu0 0.0
    %1221 = vmatprep.subr.mxu0 0.0
    %1222 = vmatpush1.msra.mxu0 0.0
    %1223 = vmatprep.subr.mxu0 0.0
    %1224 = vmatpush1.msra.mxu0 0.0
    %1225 = vmatprep.subr.mxu0 0.0
    %1226 = vmatpush1.msra.mxu0 0.0
    %1227 = vmatprep.subr.mxu0 0.0
    %1228 = vmatpush1.msra.mxu0 0.0
    %1229 = vmatprep.subr.mxu0 0.0
    %1230 = vmatpush1.msra.mxu0 0.0
    %1231 = vmatprep.subr.mxu0 0.0
    %1232 = vmatpush1.msra.mxu0 0.0
    %1233 = vmatprep.subr.mxu0 0.0
    %1234 = vmatpush1.msra.mxu0 0.0
    %1235 = vmatprep.subr.mxu0 0.0
    %1236 = vmatpush1.msra.mxu0 0.0
    %1237 = vmatprep.subr.mxu0 0.0
    %1238 = vmatpush1.msra.mxu0 0.0
    %1239 = vmatprep.subr.mxu0 0.0
    %1240 = vmatpush1.msra.mxu0 0.0
    %1241 = vmatprep.subr.mxu0 0.0
    %1242 = vmatpush1.msra.mxu0 0.0
    %1243 = vmatprep.subr.mxu0 0.0
    %1244 = vmatpush1.msra.mxu0 0.0
    %1245 = vmatprep.subr.mxu0 0.0
    %1246 = vmatpush1.msra.mxu0 0.0
    %1247 = vmatprep.subr.mxu0 0.0
    %1248 = vmatpush1.msra.mxu0 0.0
    %1249 = vmatprep.subr.mxu0 0.0
    %1250 = vmatpush1.msra.mxu0 0.0
    %1251 = vmatprep.subr.mxu0 0.0
    %1252 = vmatpush1.msra.mxu0 0.0
    %1253 = vmatprep.subr.mxu0 0.0
    %1254 = vmatpush1.msra.mxu0 0.0
    %1255 = vmatprep.subr.mxu0 0.0
    %1256 = vmatpush1.msra.mxu0 0.0
    %1257 = vmatprep.subr.mxu0 0.0
    %1258 = vmatpush1.msra.mxu0 0.0
    %1259 = vmatprep.subr.mxu0 0.0
    %1260 = vmatpush1.msra.mxu0 0.0
    %1261 = vmatprep.subr.mxu0 0.0
    %1262 = vmatpush1.msra.mxu0 0.0
    %1263 = vmatprep.subr.mxu0 0.0
    %1264 = vmatpush1.msra.mxu0 0.0
    %1265 = vmatprep.mubr.f32.mxu0 0.0
    %1266 = vmatmul.mubr.f32.gmra.mrb[0].mxu0 %v1199
    %v1267 = vpop.f32.mrb[0].mxu0
    %v1268 = vadd.f32 0.0, %v1267
    %v1269 = vpop.f32.mrb[0].mxu0
    %v1270 = vadd.f32 0.0, %v1269
    %1271 = vdwg.mxu0
    %v1274 = vcombine.low %v1268, %v1270
    %v1276 = vunpack.c.l.s4 1983009808
    %v1277 = vunpack.c.0.s8 %v1276
    %v1278 = vlaneseq
    %v1279 = vshrl.u32 %v1278, 7
    %v1280 = vsub.s32 %v1277, %v1279
    %v1281 = vrot.slane %v1274, %v1280
    %v1283 = vadd.f32 %v355, %v1281
    %v1284 = vxor.u32 %v1283, 2147483648
    %v1285 = vmul.f32 %v1284, 1.442695
    %v1286 = vpow.pop %v1285
    %v1287 = vadd.f32 %v1286, 1.0
    %v1288 = vrcp.pop %v1287
    %v1289 = vmul.f32 1.0, %v1288
    %v1291 = vrot.slane %v1283, 2
    %v1293 = vtanh.pop %v1291
    %1294 = vrot.lane.b32.xlu0 %v1283, 64
    %v1295 = vpop.permute.xlu0 %1294
    %v1296 = vrot.slane %v1295, 2
    %v1298 = vxor.u32 %v1296, 2147483648
    %v1299 = vmul.f32 %v1298, 1.442695
    %v1300 = vpow.pop %v1299
    %v1301 = vadd.f32 %v1300, 1.0
    %v1302 = vrcp.pop %v1301
    %v1303 = vmul.f32 1.0, %v1302
    %v1304 = vmul.f32 %v1289, %v1191
    %v1305 = vmul.f32 %v1289, %v1293
    %1307 = vrot.lane.b32.xlu0 %v1305, 64
    %v1308 = vpop.permute.xlu0 %1307
    %v1310 = vadd.f32 %v1304, %v1308
    %v1311 = vtanh.pop %v1310
    %1313 = vrot.lane.b32.xlu0 %v1311, 64
    %v1314 = vpop.permute.xlu0 %1313
    %v1316 = vmul.f32 %v1303, %v1314
    %v1318 = vlaneseq
    %v1319 = vshrl.u32 %v1318, 7
    %v1320 = vsub.s32 0, %v1319
    %v1321 = vrot.slane %v146, %v1320
    %v1322 = vlaneseq
    %v1323 = vshrl.u32 %v1322, 7
    %v1324 = vsub.s32 1, %v1323
    %v1325 = vrot.slane %v146, %v1324
    %v1326 = vcombine.low %v1321, %v1325
    %v1328 = vunpack.c.l.s4 1983009808
    %v1329 = vunpack.c.0.s8 %v1328
    %v1330 = vlaneseq
    %v1331 = vshrl.u32 %v1330, 7
    %v1332 = vsub.s32 %v1329, %v1331
    %v1333 = vrot.slane %v1326, %v1332
    %v1335 = vcombine.low %v483, %v602
    %v1336 = vcombine.low %v721, %v840
    %v1338 = vunpack.c.l.s4 1983009808
    %v1339 = vunpack.c.0.s8 %v1338
    %v1340 = vlaneseq
    %v1341 = vshrl.u32 %v1340, 7
    %v1342 = vsub.s32 %v1339, %v1341
    %v1343 = vrot.slane %v1335, %v1342
    %v1345 = vunpack.c.l.s4 1983009808
    %v1346 = vunpack.c.0.s8 %v1345
    %v1347 = vlaneseq
    %v1348 = vshrl.u32 %v1347, 7
    %v1349 = vsub.s32 %v1346, %v1348
    %v1350 = vrot.slane %v1336, %v1349
    %v1351 = vcombine.low %v1343, %v1350
    %v1352 = vcombine.low %v959, %v1078
    %v1353 = vcombine.low %v1197, %v1316
    %v1355 = vunpack.c.l.s4 1983009808
    %v1356 = vunpack.c.0.s8 %v1355
    %v1357 = vlaneseq
    %v1358 = vshrl.u32 %v1357, 7
    %v1359 = vsub.s32 %v1356, %v1358
    %v1360 = vrot.slane %v1352, %v1359
    %v1362 = vunpack.c.l.s4 1983009808
    %v1363 = vunpack.c.0.s8 %v1362
    %v1364 = vlaneseq
    %v1365 = vshrl.u32 %v1364, 7
    %v1366 = vsub.s32 %v1363, %v1365
    %v1367 = vrot.slane %v1353, %v1366
    %v1368 = vcombine.low %v1360, %v1367
    %v1369 = vcombine.low %v1333, %v1333
    %v1371 = vunpack.c.l.s4 1983009808
    %v1372 = vunpack.c.0.s8 %v1371
    %v1373 = vlaneseq
    %v1374 = vshrl.u32 %v1373, 7
    %v1375 = vsub.s32 %v1372, %v1374
    %v1376 = vrot.slane %v1369, %v1375
    %v1377 = vcombine.low %v1376, %v1376
    %v1378 = vcombine.high %v1376, %v1376
    %v1381 = vsel %vm364, %v1351, 0
    %v1383 = vsel %vm364, %v1368, 0
    %1385 = vmatprep.subr.mxu0 %v115
    %1386 = vmatpush1.msra.mxu0 %v114
    %1387 = vmatprep.subr.mxu0 %v117
    %1388 = vmatpush1.msra.mxu0 %v116
    %1389 = vmatprep.subr.mxu0 %v119
    %1390 = vmatpush1.msra.mxu0 %v118
    %1391 = vmatprep.subr.mxu0 %v121
    %1392 = vmatpush1.msra.mxu0 %v120
    %1393 = vmatprep.subr.mxu0 %v123
    %1394 = vmatpush1.msra.mxu0 %v122
    %1395 = vmatprep.subr.mxu0 %v125
    %1396 = vmatpush1.msra.mxu0 %v124
    %1397 = vmatprep.subr.mxu0 %v127
    %1398 = vmatpush1.msra.mxu0 %v126
    %1399 = vmatprep.subr.mxu0 %v129
    %1400 = vmatpush1.msra.mxu0 %v128
    %1401 = vmatprep.subr.mxu0 0.0
    %1402 = vmatpush1.msra.mxu0 0.0
    %1403 = vmatprep.subr.mxu0 0.0
    %1404 = vmatpush1.msra.mxu0 0.0
    %1405 = vmatprep.subr.mxu0 0.0
    %1406 = vmatpush1.msra.mxu0 0.0
    %1407 = vmatprep.subr.mxu0 0.0
    %1408 = vmatpush1.msra.mxu0 0.0
    %1409 = vmatprep.subr.mxu0 0.0
    %1410 = vmatpush1.msra.mxu0 0.0
    %1411 = vmatprep.subr.mxu0 0.0
    %1412 = vmatpush1.msra.mxu0 0.0
    %1413 = vmatprep.subr.mxu0 0.0
    %1414 = vmatpush1.msra.mxu0 0.0
    %1415 = vmatprep.subr.mxu0 0.0
    %1416 = vmatpush1.msra.mxu0 0.0
    %1417 = vmatprep.subr.mxu0 0.0
    %1418 = vmatpush1.msra.mxu0 0.0
    %1419 = vmatprep.subr.mxu0 0.0
    %1420 = vmatpush1.msra.mxu0 0.0
    %1421 = vmatprep.subr.mxu0 0.0
    %1422 = vmatpush1.msra.mxu0 0.0
    %1423 = vmatprep.subr.mxu0 0.0
    %1424 = vmatpush1.msra.mxu0 0.0
    %1425 = vmatprep.subr.mxu0 0.0
    %1426 = vmatpush1.msra.mxu0 0.0
    %1427 = vmatprep.subr.mxu0 0.0
    %1428 = vmatpush1.msra.mxu0 0.0
    %1429 = vmatprep.subr.mxu0 0.0
    %1430 = vmatpush1.msra.mxu0 0.0
    %1431 = vmatprep.subr.mxu0 0.0
    %1432 = vmatpush1.msra.mxu0 0.0
    %1433 = vmatprep.subr.mxu0 0.0
    %1434 = vmatpush1.msra.mxu0 0.0
    %1435 = vmatprep.subr.mxu0 0.0
    %1436 = vmatpush1.msra.mxu0 0.0
    %1437 = vmatprep.subr.mxu0 0.0
    %1438 = vmatpush1.msra.mxu0 0.0
    %1439 = vmatprep.subr.mxu0 0.0
    %1440 = vmatpush1.msra.mxu0 0.0
    %1441 = vmatprep.subr.mxu0 0.0
    %1442 = vmatpush1.msra.mxu0 0.0
    %1443 = vmatprep.subr.mxu0 0.0
    %1444 = vmatpush1.msra.mxu0 0.0
    %1445 = vmatprep.subr.mxu0 0.0
    %1446 = vmatpush1.msra.mxu0 0.0
    %1447 = vmatprep.subr.mxu0 0.0
    %1448 = vmatpush1.msra.mxu0 0.0
    %1449 = vmatprep.mubr.f32.mxu0 0.0
    %1450 = vmatmul.mubr.f32.gmra.mrb[0].mxu0 %v1381
    %v1451 = vpop.f32.mrb[0].mxu0
    %v1452 = vadd.f32 %v1377, %v1451
    %v1453 = vpop.f32.mrb[0].mxu0
    %v1454 = vadd.f32 %v1378, %v1453
    %1455 = vmatprep.mubr.f32.mxu0 0.0
    %1456 = vmatmul.mubr.f32.gmra.mrb[0].mxu0 %v1383
    %v1457 = vpop.f32.mrb[0].mxu0
    %v1458 = vadd.f32 %v1377, %v1457
    %v1459 = vpop.f32.mrb[0].mxu0
    %v1460 = vadd.f32 %v1378, %v1459
    %1461 = vdwg.mxu0
    %v1466 = vcombine.low %v1452, %v1454
    %v1467 = vcombine.high %v1452, %v1454
    %v1469 = vunpack.c.l.s4 1983009808
    %v1470 = vunpack.c.0.s8 %v1469
    %v1471 = vlaneseq
    %v1472 = vshrl.u32 %v1471, 7
    %v1473 = vsub.s32 %v1470, %v1472
    %v1474 = vrot.slane %v1466, %v1473
    %v1476 = vunpack.c.l.s4 1983009808
    %v1477 = vunpack.c.0.s8 %v1476
    %v1478 = vlaneseq
    %v1479 = vshrl.u32 %v1478, 7
    %v1480 = vsub.s32 %v1477, %v1479
    %v1481 = vrot.slane %v1467, %v1480
    %v1482 = vcombine.high %v1474, %v1474
    %v1483 = vcombine.high %v1481, %v1481
    %v1484 = vcombine.low %v1458, %v1460
    %v1485 = vcombine.high %v1458, %v1460
    %v1487 = vunpack.c.l.s4 1983009808
    %v1488 = vunpack.c.0.s8 %v1487
    %v1489 = vlaneseq
    %v1490 = vshrl.u32 %v1489, 7
    %v1491 = vsub.s32 %v1488, %v1490
    %v1492 = vrot.slane %v1484, %v1491
    %v1494 = vunpack.c.l.s4 1983009808
    %v1495 = vunpack.c.0.s8 %v1494
    %v1496 = vlaneseq
    %v1497 = vshrl.u32 %v1496, 7
    %v1498 = vsub.s32 %v1495, %v1497
    %v1499 = vrot.slane %v1485, %v1498
    %v1500 = vcombine.high %v1492, %v1492
    %v1501 = vcombine.high %v1499, %v1499
    %1510 = vmatprep.subr.mxu0 %v131
    %1511 = vmatpush1.msra.mxu0 %v130
    %1512 = vmatprep.subr.mxu0 %v133
    %1513 = vmatpush1.msra.mxu0 %v132
    %1514 = vmatprep.subr.mxu0 %v135
    %1515 = vmatpush1.msra.mxu0 %v134
    %1516 = vmatprep.subr.mxu0 %v137
    %1517 = vmatpush1.msra.mxu0 %v136
    %1518 = vmatprep.subr.mxu0 %v139
    %1519 = vmatpush1.msra.mxu0 %v138
    %1520 = vmatprep.subr.mxu0 %v141
    %1521 = vmatpush1.msra.mxu0 %v140
    %1522 = vmatprep.subr.mxu0 %v143
    %1523 = vmatpush1.msra.mxu0 %v142
    %1524 = vmatprep.subr.mxu0 %v145
    %1525 = vmatpush1.msra.mxu0 %v144
    %1526 = vmatprep.subr.mxu0 0.0
    %1527 = vmatpush1.msra.mxu0 0.0
    %1528 = vmatprep.subr.mxu0 0.0
    %1529 = vmatpush1.msra.mxu0 0.0
    %1530 = vmatprep.subr.mxu0 0.0
    %1531 = vmatpush1.msra.mxu0 0.0
    %1532 = vmatprep.subr.mxu0 0.0
    %1533 = vmatpush1.msra.mxu0 0.0
    %1534 = vmatprep.subr.mxu0 0.0
    %1535 = vmatpush1.msra.mxu0 0.0
    %1536 = vmatprep.subr.mxu0 0.0
    %1537 = vmatpush1.msra.mxu0 0.0
    %1538 = vmatprep.subr.mxu0 0.0
    %1539 = vmatpush1.msra.mxu0 0.0
    %1540 = vmatprep.subr.mxu0 0.0
    %1541 = vmatpush1.msra.mxu0 0.0
    %1542 = vmatprep.subr.mxu0 0.0
    %1543 = vmatpush1.msra.mxu0 0.0
    %1544 = vmatprep.subr.mxu0 0.0
    %1545 = vmatpush1.msra.mxu0 0.0
    %1546 = vmatprep.subr.mxu0 0.0
    %1547 = vmatpush1.msra.mxu0 0.0
    %1548 = vmatprep.subr.mxu0 0.0
    %1549 = vmatpush1.msra.mxu0 0.0
    %1550 = vmatprep.subr.mxu0 0.0
    %1551 = vmatpush1.msra.mxu0 0.0
    %1552 = vmatprep.subr.mxu0 0.0
    %1553 = vmatpush1.msra.mxu0 0.0
    %1554 = vmatprep.subr.mxu0 0.0
    %1555 = vmatpush1.msra.mxu0 0.0
    %1556 = vmatprep.subr.mxu0 0.0
    %1557 = vmatpush1.msra.mxu0 0.0
    %1558 = vmatprep.subr.mxu0 0.0
    %1559 = vmatpush1.msra.mxu0 0.0
    %1560 = vmatprep.subr.mxu0 0.0
    %1561 = vmatpush1.msra.mxu0 0.0
    %1562 = vmatprep.subr.mxu0 0.0
    %1563 = vmatpush1.msra.mxu0 0.0
    %1564 = vmatprep.subr.mxu0 0.0
    %1565 = vmatpush1.msra.mxu0 0.0
    %1566 = vmatprep.subr.mxu0 0.0
    %1567 = vmatpush1.msra.mxu0 0.0
    %1568 = vmatprep.subr.mxu0 0.0
    %1569 = vmatpush1.msra.mxu0 0.0
    %1570 = vmatprep.subr.mxu0 0.0
    %1571 = vmatpush1.msra.mxu0 0.0
    %1572 = vmatprep.subr.mxu0 0.0
    %1573 = vmatpush1.msra.mxu0 0.0
    %1574 = vmatprep.mubr.f32.mxu0 0.0
    %1575 = vmatmul.mubr.f32.gmra.mrb[0].mxu0 %v366
    %v1576 = vpop.f32.mrb[0].mxu0
    %v1577 = vadd.f32 0.0, %v1576
    %v1578 = vpop.f32.mrb[0].mxu0
    %v1579 = vadd.f32 0.0, %v1578
    %1580 = vdwg.mxu0
    %v1583 = vcombine.low %v1577, %v1579
    %v1585 = vunpack.c.l.s4 1983009808
    %v1586 = vunpack.c.0.s8 %v1585
    %v1587 = vlaneseq
    %v1588 = vshrl.u32 %v1587, 7
    %v1589 = vsub.s32 %v1586, %v1588
    %v1590 = vrot.slane %v1583, %v1589
    %v1592 = vadd.f32 %v1474, %v1590
    %v1593 = vxor.u32 %v1592, 2147483648
    %v1594 = vmul.f32 %v1593, 1.442695
    %v1595 = vpow.pop %v1594
    %v1596 = vadd.f32 %v1595, 1.0
    %v1597 = vrcp.pop %v1596
    %v1598 = vmul.f32 1.0, %v1597
    %v1600 = vrot.slane %v1592, 2
    %v1602 = vtanh.pop %v1600
    %1603 = vrot.lane.b32.xlu0 %v1592, 64
    %v1604 = vpop.permute.xlu0 %1603
    %v1605 = vrot.slane %v1604, 2
    %v1607 = vxor.u32 %v1605, 2147483648
    %v1608 = vmul.f32 %v1607, 1.442695
    %v1609 = vpow.pop %v1608
    %v1610 = vadd.f32 %v1609, 1.0
    %v1611 = vrcp.pop %v1610
    %v1612 = vmul.f32 1.0, %v1611
    %v1613 = vmul.f32 %v1598, 0.0
    %v1614 = vmul.f32 %v1598, %v1602
    %1616 = vrot.lane.b32.xlu0 %v1614, 64
    %v1617 = vpop.permute.xlu0 %1616
    %v1619 = vadd.f32 %v1613, %v1617
    %v1620 = vtanh.pop %v1619
    %1622 = vrot.lane.b32.xlu0 %v1620, 64
    %v1623 = vpop.permute.xlu0 %1622
    %v1625 = vmul.f32 %v1612, %v1623
    %v1627 = vsel %vm364, %v1625, 0
    %1629 = vmatprep.subr.mxu0 %v131
    %1630 = vmatpush1.msra.mxu0 %v130
    %1631 = vmatprep.subr.mxu0 %v133
    %1632 = vmatpush1.msra.mxu0 %v132
    %1633 = vmatprep.subr.mxu0 %v135
    %1634 = vmatpush1.msra.mxu0 %v134
    %1635 = vmatprep.subr.mxu0 %v137
    %1636 = vmatpush1.msra.mxu0 %v136
    %1637 = vmatprep.subr.mxu0 %v139
    %1638 = vmatpush1.msra.mxu0 %v138
    %1639 = vmatprep.subr.mxu0 %v141
    %1640 = vmatpush1.msra.mxu0 %v140
    %1641 = vmatprep.subr.mxu0 %v143
    %1642 = vmatpush1.msra.mxu0 %v142
    %1643 = vmatprep.subr.mxu0 %v145
    %1644 = vmatpush1.msra.mxu0 %v144
    %1645 = vmatprep.subr.mxu0 0.0
    %1646 = vmatpush1.msra.mxu0 0.0
    %1647 = vmatprep.subr.mxu0 0.0
    %1648 = vmatpush1.msra.mxu0 0.0
    %1649 = vmatprep.subr.mxu0 0.0
    %1650 = vmatpush1.msra.mxu0 0.0
    %1651 = vmatprep.subr.mxu0 0.0
    %1652 = vmatpush1.msra.mxu0 0.0
    %1653 = vmatprep.subr.mxu0 0.0
    %1654 = vmatpush1.msra.mxu0 0.0
    %1655 = vmatprep.subr.mxu0 0.0
    %1656 = vmatpush1.msra.mxu0 0.0
    %1657 = vmatprep.subr.mxu0 0.0
    %1658 = vmatpush1.msra.mxu0 0.0
    %1659 = vmatprep.subr.mxu0 0.0
    %1660 = vmatpush1.msra.mxu0 0.0
    %1661 = vmatprep.subr.mxu0 0.0
    %1662 = vmatpush1.msra.mxu0 0.0
    %1663 = vmatprep.subr.mxu0 0.0
    %1664 = vmatpush1.msra.mxu0 0.0
    %1665 = vmatprep.subr.mxu0 0.0
    %1666 = vmatpush1.msra.mxu0 0.0
    %1667 = vmatprep.subr.mxu0 0.0
    %1668 = vmatpush1.msra.mxu0 0.0
    %1669 = vmatprep.subr.mxu0 0.0
    %1670 = vmatpush1.msra.mxu0 0.0
    %1671 = vmatprep.subr.mxu0 0.0
    %1672 = vmatpush1.msra.mxu0 0.0
    %1673 = vmatprep.subr.mxu0 0.0
    %1674 = vmatpush1.msra.mxu0 0.0
    %1675 = vmatprep.subr.mxu0 0.0
    %1676 = vmatpush1.msra.mxu0 0.0
    %1677 = vmatprep.subr.mxu0 0.0
    %1678 = vmatpush1.msra.mxu0 0.0
    %1679 = vmatprep.subr.mxu0 0.0
    %1680 = vmatpush1.msra.mxu0 0.0
    %1681 = vmatprep.subr.mxu0 0.0
    %1682 = vmatpush1.msra.mxu0 0.0
    %1683 = vmatprep.subr.mxu0 0.0
    %1684 = vmatpush1.msra.mxu0 0.0
    %1685 = vmatprep.subr.mxu0 0.0
    %1686 = vmatpush1.msra.mxu0 0.0
    %1687 = vmatprep.subr.mxu0 0.0
    %1688 = vmatpush1.msra.mxu0 0.0
    %1689 = vmatprep.subr.mxu0 0.0
    %1690 = vmatpush1.msra.mxu0 0.0
    %1691 = vmatprep.subr.mxu0 0.0
    %1692 = vmatpush1.msra.mxu0 0.0
    %1693 = vmatprep.mubr.f32.mxu0 0.0
    %1694 = vmatmul.mubr.f32.gmra.mrb[0].mxu0 %v1627
    %v1695 = vpop.f32.mrb[0].mxu0
    %v1696 = vadd.f32 0.0, %v1695
    %v1697 = vpop.f32.mrb[0].mxu0
    %v1698 = vadd.f32 0.0, %v1697
    %1699 = vdwg.mxu0
    %v1702 = vcombine.low %v1696, %v1698
    %v1704 = vunpack.c.l.s4 1983009808
    %v1705 = vunpack.c.0.s8 %v1704
    %v1706 = vlaneseq
    %v1707 = vshrl.u32 %v1706, 7
    %v1708 = vsub.s32 %v1705, %v1707
    %v1709 = vrot.slane %v1702, %v1708
    %v1711 = vadd.f32 %v1482, %v1709
    %v1712 = vxor.u32 %v1711, 2147483648
    %v1713 = vmul.f32 %v1712, 1.442695
    %v1714 = vpow.pop %v1713
    %v1715 = vadd.f32 %v1714, 1.0
    %v1716 = vrcp.pop %v1715
    %v1717 = vmul.f32 1.0, %v1716
    %v1719 = vrot.slane %v1711, 2
    %v1721 = vtanh.pop %v1719
    %1722 = vrot.lane.b32.xlu0 %v1711, 64
    %v1723 = vpop.permute.xlu0 %1722
    %v1724 = vrot.slane %v1723, 2
    %v1726 = vxor.u32 %v1724, 2147483648
    %v1727 = vmul.f32 %v1726, 1.442695
    %v1728 = vpow.pop %v1727
    %v1729 = vadd.f32 %v1728, 1.0
    %v1730 = vrcp.pop %v1729
    %v1731 = vmul.f32 1.0, %v1730
    %v1732 = vmul.f32 %v1717, %v1619
    %v1733 = vmul.f32 %v1717, %v1721
    %1735 = vrot.lane.b32.xlu0 %v1733, 64
    %v1736 = vpop.permute.xlu0 %1735
    %v1738 = vadd.f32 %v1732, %v1736
    %v1739 = vtanh.pop %v1738
    %1741 = vrot.lane.b32.xlu0 %v1739, 64
    %v1742 = vpop.permute.xlu0 %1741
    %v1744 = vmul.f32 %v1731, %v1742
    %v1746 = vsel %vm364, %v1744, 0
    %1748 = vmatprep.subr.mxu0 %v131
    %1749 = vmatpush1.msra.mxu0 %v130
    %1750 = vmatprep.subr.mxu0 %v133
    %1751 = vmatpush1.msra.mxu0 %v132
    %1752 = vmatprep.subr.mxu0 %v135
    %1753 = vmatpush1.msra.mxu0 %v134
    %1754 = vmatprep.subr.mxu0 %v137
    %1755 = vmatpush1.msra.mxu0 %v136
    %1756 = vmatprep.subr.mxu0 %v139
    %1757 = vmatpush1.msra.mxu0 %v138
    %1758 = vmatprep.subr.mxu0 %v141
    %1759 = vmatpush1.msra.mxu0 %v140
    %1760 = vmatprep.subr.mxu0 %v143
    %1761 = vmatpush1.msra.mxu0 %v142
    %1762 = vmatprep.subr.mxu0 %v145
    %1763 = vmatpush1.msra.mxu0 %v144
    %1764 = vmatprep.subr.mxu0 0.0
    %1765 = vmatpush1.msra.mxu0 0.0
    %1766 = vmatprep.subr.mxu0 0.0
    %1767 = vmatpush1.msra.mxu0 0.0
    %1768 = vmatprep.subr.mxu0 0.0
    %1769 = vmatpush1.msra.mxu0 0.0
    %1770 = vmatprep.subr.mxu0 0.0
    %1771 = vmatpush1.msra.mxu0 0.0
    %1772 = vmatprep.subr.mxu0 0.0
    %1773 = vmatpush1.msra.mxu0 0.0
    %1774 = vmatprep.subr.mxu0 0.0
    %1775 = vmatpush1.msra.mxu0 0.0
    %1776 = vmatprep.subr.mxu0 0.0
    %1777 = vmatpush1.msra.mxu0 0.0
    %1778 = vmatprep.subr.mxu0 0.0
    %1779 = vmatpush1.msra.mxu0 0.0
    %1780 = vmatprep.subr.mxu0 0.0
    %1781 = vmatpush1.msra.mxu0 0.0
    %1782 = vmatprep.subr.mxu0 0.0
    %1783 = vmatpush1.msra.mxu0 0.0
    %1784 = vmatprep.subr.mxu0 0.0
    %1785 = vmatpush1.msra.mxu0 0.0
    %1786 = vmatprep.subr.mxu0 0.0
    %1787 = vmatpush1.msra.mxu0 0.0
    %1788 = vmatprep.subr.mxu0 0.0
    %1789 = vmatpush1.msra.mxu0 0.0
    %1790 = vmatprep.subr.mxu0 0.0
    %1791 = vmatpush1.msra.mxu0 0.0
    %1792 = vmatprep.subr.mxu0 0.0
    %1793 = vmatpush1.msra.mxu0 0.0
    %1794 = vmatprep.subr.mxu0 0.0
    %1795 = vmatpush1.msra.mxu0 0.0
    %1796 = vmatprep.subr.mxu0 0.0
    %1797 = vmatpush1.msra.mxu0 0.0
    %1798 = vmatprep.subr.mxu0 0.0
    %1799 = vmatpush1.msra.mxu0 0.0
    %1800 = vmatprep.subr.mxu0 0.0
    %1801 = vmatpush1.msra.mxu0 0.0
    %1802 = vmatprep.subr.mxu0 0.0
    %1803 = vmatpush1.msra.mxu0 0.0
    %1804 = vmatprep.subr.mxu0 0.0
    %1805 = vmatpush1.msra.mxu0 0.0
    %1806 = vmatprep.subr.mxu0 0.0
    %1807 = vmatpush1.msra.mxu0 0.0
    %1808 = vmatprep.subr.mxu0 0.0
    %1809 = vmatpush1.msra.mxu0 0.0
    %1810 = vmatprep.subr.mxu0 0.0
    %1811 = vmatpush1.msra.mxu0 0.0
    %1812 = vmatprep.mubr.f32.mxu0 0.0
    %1813 = vmatmul.mubr.f32.gmra.mrb[0].mxu0 %v1746
    %v1814 = vpop.f32.mrb[0].mxu0
    %v1815 = vadd.f32 0.0, %v1814
    %v1816 = vpop.f32.mrb[0].mxu0
    %v1817 = vadd.f32 0.0, %v1816
    %1818 = vdwg.mxu0
    %v1821 = vcombine.low %v1815, %v1817
    %v1823 = vunpack.c.l.s4 1983009808
    %v1824 = vunpack.c.0.s8 %v1823
    %v1825 = vlaneseq
    %v1826 = vshrl.u32 %v1825, 7
    %v1827 = vsub.s32 %v1824, %v1826
    %v1828 = vrot.slane %v1821, %v1827
    %v1830 = vadd.f32 %v1481, %v1828
    %v1831 = vxor.u32 %v1830, 2147483648
    %v1832 = vmul.f32 %v1831, 1.442695
    %v1833 = vpow.pop %v1832
    %v1834 = vadd.f32 %v1833, 1.0
    %v1835 = vrcp.pop %v1834
    %v1836 = vmul.f32 1.0, %v1835
    %v1838 = vrot.slane %v1830, 2
    %v1840 = vtanh.pop %v1838
    %1841 = vrot.lane.b32.xlu0 %v1830, 64
    %v1842 = vpop.permute.xlu0 %1841
    %v1843 = vrot.slane %v1842, 2
    %v1845 = vxor.u32 %v1843, 2147483648
    %v1846 = vmul.f32 %v1845, 1.442695
    %v1847 = vpow.pop %v1846
    %v1848 = vadd.f32 %v1847, 1.0
    %v1849 = vrcp.pop %v1848
    %v1850 = vmul.f32 1.0, %v1849
    %v1851 = vmul.f32 %v1836, %v1738
    %v1852 = vmul.f32 %v1836, %v1840
    %1854 = vrot.lane.b32.xlu0 %v1852, 64
    %v1855 = vpop.permute.xlu0 %1854
    %v1857 = vadd.f32 %v1851, %v1855
    %v1858 = vtanh.pop %v1857
    %1860 = vrot.lane.b32.xlu0 %v1858, 64
    %v1861 = vpop.permute.xlu0 %1860
    %v1863 = vmul.f32 %v1850, %v1861
    %v1865 = vsel %vm364, %v1863, 0
    %1867 = vmatprep.subr.mxu0 %v131
    %1868 = vmatpush1.msra.mxu0 %v130
    %1869 = vmatprep.subr.mxu0 %v133
    %1870 = vmatpush1.msra.mxu0 %v132
    %1871 = vmatprep.subr.mxu0 %v135
    %1872 = vmatpush1.msra.mxu0 %v134
    %1873 = vmatprep.subr.mxu0 %v137
    %1874 = vmatpush1.msra.mxu0 %v136
    %1875 = vmatprep.subr.mxu0 %v139
    %1876 = vmatpush1.msra.mxu0 %v138
    %1877 = vmatprep.subr.mxu0 %v141
    %1878 = vmatpush1.msra.mxu0 %v140
    %1879 = vmatprep.subr.mxu0 %v143
    %1880 = vmatpush1.msra.mxu0 %v142
    %1881 = vmatprep.subr.mxu0 %v145
    %1882 = vmatpush1.msra.mxu0 %v144
    %1883 = vmatprep.subr.mxu0 0.0
    %1884 = vmatpush1.msra.mxu0 0.0
    %1885 = vmatprep.subr.mxu0 0.0
    %1886 = vmatpush1.msra.mxu0 0.0
    %1887 = vmatprep.subr.mxu0 0.0
    %1888 = vmatpush1.msra.mxu0 0.0
    %1889 = vmatprep.subr.mxu0 0.0
    %1890 = vmatpush1.msra.mxu0 0.0
    %1891 = vmatprep.subr.mxu0 0.0
    %1892 = vmatpush1.msra.mxu0 0.0
    %1893 = vmatprep.subr.mxu0 0.0
    %1894 = vmatpush1.msra.mxu0 0.0
    %1895 = vmatprep.subr.mxu0 0.0
    %1896 = vmatpush1.msra.mxu0 0.0
    %1897 = vmatprep.subr.mxu0 0.0
    %1898 = vmatpush1.msra.mxu0 0.0
    %1899 = vmatprep.subr.mxu0 0.0
    %1900 = vmatpush1.msra.mxu0 0.0
    %1901 = vmatprep.subr.mxu0 0.0
    %1902 = vmatpush1.msra.mxu0 0.0
    %1903 = vmatprep.subr.mxu0 0.0
    %1904 = vmatpush1.msra.mxu0 0.0
    %1905 = vmatprep.subr.mxu0 0.0
    %1906 = vmatpush1.msra.mxu0 0.0
    %1907 = vmatprep.subr.mxu0 0.0
    %1908 = vmatpush1.msra.mxu0 0.0
    %1909 = vmatprep.subr.mxu0 0.0
    %1910 = vmatpush1.msra.mxu0 0.0
    %1911 = vmatprep.subr.mxu0 0.0
    %1912 = vmatpush1.msra.mxu0 0.0
    %1913 = vmatprep.subr.mxu0 0.0
    %1914 = vmatpush1.msra.mxu0 0.0
    %1915 = vmatprep.subr.mxu0 0.0
    %1916 = vmatpush1.msra.mxu0 0.0
    %1917 = vmatprep.subr.mxu0 0.0
    %1918 = vmatpush1.msra.mxu0 0.0
    %1919 = vmatprep.subr.mxu0 0.0
    %1920 = vmatpush1.msra.mxu0 0.0
    %1921 = vmatprep.subr.mxu0 0.0
    %1922 = vmatpush1.msra.mxu0 0.0
    %1923 = vmatprep.subr.mxu0 0.0
    %1924 = vmatpush1.msra.mxu0 0.0
    %1925 = vmatprep.subr.mxu0 0.0
    %1926 = vmatpush1.msra.mxu0 0.0
    %1927 = vmatprep.subr.mxu0 0.0
    %1928 = vmatpush1.msra.mxu0 0.0
    %1929 = vmatprep.subr.mxu0 0.0
    %1930 = vmatpush1.msra.mxu0 0.0
    %1931 = vmatprep.mubr.f32.mxu0 0.0
    %1932 = vmatmul.mubr.f32.gmra.mrb[0].mxu0 %v1865
    %v1933 = vpop.f32.mrb[0].mxu0
    %v1934 = vadd.f32 0.0, %v1933
    %v1935 = vpop.f32.mrb[0].mxu0
    %v1936 = vadd.f32 0.0, %v1935
    %1937 = vdwg.mxu0
    %v1940 = vcombine.low %v1934, %v1936
    %v1942 = vunpack.c.l.s4 1983009808
    %v1943 = vunpack.c.0.s8 %v1942
    %v1944 = vlaneseq
    %v1945 = vshrl.u32 %v1944, 7
    %v1946 = vsub.s32 %v1943, %v1945
    %v1947 = vrot.slane %v1940, %v1946
    %v1949 = vadd.f32 %v1483, %v1947
    %v1950 = vxor.u32 %v1949, 2147483648
    %v1951 = vmul.f32 %v1950, 1.442695
    %v1952 = vpow.pop %v1951
    %v1953 = vadd.f32 %v1952, 1.0
    %v1954 = vrcp.pop %v1953
    %v1955 = vmul.f32 1.0, %v1954
    %v1957 = vrot.slane %v1949, 2
    %v1959 = vtanh.pop %v1957
    %1960 = vrot.lane.b32.xlu0 %v1949, 64
    %v1961 = vpop.permute.xlu0 %1960
    %v1962 = vrot.slane %v1961, 2
    %v1964 = vxor.u32 %v1962, 2147483648
    %v1965 = vmul.f32 %v1964, 1.442695
    %v1966 = vpow.pop %v1965
    %v1967 = vadd.f32 %v1966, 1.0
    %v1968 = vrcp.pop %v1967
    %v1969 = vmul.f32 1.0, %v1968
    %v1970 = vmul.f32 %v1955, %v1857
    %v1971 = vmul.f32 %v1955, %v1959
    %1973 = vrot.lane.b32.xlu0 %v1971, 64
    %v1974 = vpop.permute.xlu0 %1973
    %v1976 = vadd.f32 %v1970, %v1974
    %v1977 = vtanh.pop %v1976
    %1979 = vrot.lane.b32.xlu0 %v1977, 64
    %v1980 = vpop.permute.xlu0 %1979
    %v1982 = vmul.f32 %v1969, %v1980
    %v1984 = vsel %vm364, %v1982, 0
    %1986 = vmatprep.subr.mxu0 %v131
    %1987 = vmatpush1.msra.mxu0 %v130
    %1988 = vmatprep.subr.mxu0 %v133
    %1989 = vmatpush1.msra.mxu0 %v132
    %1990 = vmatprep.subr.mxu0 %v135
    %1991 = vmatpush1.msra.mxu0 %v134
    %1992 = vmatprep.subr.mxu0 %v137
    %1993 = vmatpush1.msra.mxu0 %v136
    %1994 = vmatprep.subr.mxu0 %v139
    %1995 = vmatpush1.msra.mxu0 %v138
    %1996 = vmatprep.subr.mxu0 %v141
    %1997 = vmatpush1.msra.mxu0 %v140
    %1998 = vmatprep.subr.mxu0 %v143
    %1999 = vmatpush1.msra.mxu0 %v142
    %2000 = vmatprep.subr.mxu0 %v145
    %2001 = vmatpush1.msra.mxu0 %v144
    %2002 = vmatprep.subr.mxu0 0.0
    %2003 = vmatpush1.msra.mxu0 0.0
    %2004 = vmatprep.subr.mxu0 0.0
    %2005 = vmatpush1.msra.mxu0 0.0
    %2006 = vmatprep.subr.mxu0 0.0
    %2007 = vmatpush1.msra.mxu0 0.0
    %2008 = vmatprep.subr.mxu0 0.0
    %2009 = vmatpush1.msra.mxu0 0.0
    %2010 = vmatprep.subr.mxu0 0.0
    %2011 = vmatpush1.msra.mxu0 0.0
    %2012 = vmatprep.subr.mxu0 0.0
    %2013 = vmatpush1.msra.mxu0 0.0
    %2014 = vmatprep.subr.mxu0 0.0
    %2015 = vmatpush1.msra.mxu0 0.0
    %2016 = vmatprep.subr.mxu0 0.0
    %2017 = vmatpush1.msra.mxu0 0.0
    %2018 = vmatprep.subr.mxu0 0.0
    %2019 = vmatpush1.msra.mxu0 0.0
    %2020 = vmatprep.subr.mxu0 0.0
    %2021 = vmatpush1.msra.mxu0 0.0
    %2022 = vmatprep.subr.mxu0 0.0
    %2023 = vmatpush1.msra.mxu0 0.0
    %2024 = vmatprep.subr.mxu0 0.0
    %2025 = vmatpush1.msra.mxu0 0.0
    %2026 = vmatprep.subr.mxu0 0.0
    %2027 = vmatpush1.msra.mxu0 0.0
    %2028 = vmatprep.subr.mxu0 0.0
    %2029 = vmatpush1.msra.mxu0 0.0
    %2030 = vmatprep.subr.mxu0 0.0
    %2031 = vmatpush1.msra.mxu0 0.0
    %2032 = vmatprep.subr.mxu0 0.0
    %2033 = vmatpush1.msra.mxu0 0.0
    %2034 = vmatprep.subr.mxu0 0.0
    %2035 = vmatpush1.msra.mxu0 0.0
    %2036 = vmatprep.subr.mxu0 0.0
    %2037 = vmatpush1.msra.mxu0 0.0
    %2038 = vmatprep.subr.mxu0 0.0
    %2039 = vmatpush1.msra.mxu0 0.0
    %2040 = vmatprep.subr.mxu0 0.0
    %2041 = vmatpush1.msra.mxu0 0.0
    %2042 = vmatprep.subr.mxu0 0.0
    %2043 = vmatpush1.msra.mxu0 0.0
    %2044 = vmatprep.subr.mxu0 0.0
    %2045 = vmatpush1.msra.mxu0 0.0
    %2046 = vmatprep.subr.mxu0 0.0
    %2047 = vmatpush1.msra.mxu0 0.0
    %2048 = vmatprep.subr.mxu0 0.0
    %2049 = vmatpush1.msra.mxu0 0.0
    %2050 = vmatprep.mubr.f32.mxu0 0.0
    %2051 = vmatmul.mubr.f32.gmra.mrb[0].mxu0 %v1984
    %v2052 = vpop.f32.mrb[0].mxu0
    %v2053 = vadd.f32 0.0, %v2052
    %v2054 = vpop.f32.mrb[0].mxu0
    %v2055 = vadd.f32 0.0, %v2054
    %2056 = vdwg.mxu0
    %v2059 = vcombine.low %v2053, %v2055
    %v2061 = vunpack.c.l.s4 1983009808
    %v2062 = vunpack.c.0.s8 %v2061
    %v2063 = vlaneseq
    %v2064 = vshrl.u32 %v2063, 7
    %v2065 = vsub.s32 %v2062, %v2064
    %v2066 = vrot.slane %v2059, %v2065
    %v2068 = vadd.f32 %v1492, %v2066
    %v2069 = vxor.u32 %v2068, 2147483648
    %v2070 = vmul.f32 %v2069, 1.442695
    %v2071 = vpow.pop %v2070
    %v2072 = vadd.f32 %v2071, 1.0
    %v2073 = vrcp.pop %v2072
    %v2074 = vmul.f32 1.0, %v2073
    %v2076 = vrot.slane %v2068, 2
    %v2078 = vtanh.pop %v2076
    %2079 = vrot.lane.b32.xlu0 %v2068, 64
    %v2080 = vpop.permute.xlu0 %2079
    %v2081 = vrot.slane %v2080, 2
    %v2083 = vxor.u32 %v2081, 2147483648
    %v2084 = vmul.f32 %v2083, 1.442695
    %v2085 = vpow.pop %v2084
    %v2086 = vadd.f32 %v2085, 1.0
    %v2087 = vrcp.pop %v2086
    %v2088 = vmul.f32 1.0, %v2087
    %v2089 = vmul.f32 %v2074, %v1976
    %v2090 = vmul.f32 %v2074, %v2078
    %2092 = vrot.lane.b32.xlu0 %v2090, 64
    %v2093 = vpop.permute.xlu0 %2092
    %v2095 = vadd.f32 %v2089, %v2093
    %v2096 = vtanh.pop %v2095
    %2098 = vrot.lane.b32.xlu0 %v2096, 64
    %v2099 = vpop.permute.xlu0 %2098
    %v2101 = vmul.f32 %v2088, %v2099
    %v2103 = vsel %vm364, %v2101, 0
    %2105 = vmatprep.subr.mxu0 %v131
    %2106 = vmatpush1.msra.mxu0 %v130
    %2107 = vmatprep.subr.mxu0 %v133
    %2108 = vmatpush1.msra.mxu0 %v132
    %2109 = vmatprep.subr.mxu0 %v135
    %2110 = vmatpush1.msra.mxu0 %v134
    %2111 = vmatprep.subr.mxu0 %v137
    %2112 = vmatpush1.msra.mxu0 %v136
    %2113 = vmatprep.subr.mxu0 %v139
    %2114 = vmatpush1.msra.mxu0 %v138
    %2115 = vmatprep.subr.mxu0 %v141
    %2116 = vmatpush1.msra.mxu0 %v140
    %2117 = vmatprep.subr.mxu0 %v143
    %2118 = vmatpush1.msra.mxu0 %v142
    %2119 = vmatprep.subr.mxu0 %v145
    %2120 = vmatpush1.msra.mxu0 %v144
    %2121 = vmatprep.subr.mxu0 0.0
    %2122 = vmatpush1.msra.mxu0 0.0
    %2123 = vmatprep.subr.mxu0 0.0
    %2124 = vmatpush1.msra.mxu0 0.0
    %2125 = vmatprep.subr.mxu0 0.0
    %2126 = vmatpush1.msra.mxu0 0.0
    %2127 = vmatprep.subr.mxu0 0.0
    %2128 = vmatpush1.msra.mxu0 0.0
    %2129 = vmatprep.subr.mxu0 0.0
    %2130 = vmatpush1.msra.mxu0 0.0
    %2131 = vmatprep.subr.mxu0 0.0
    %2132 = vmatpush1.msra.mxu0 0.0
    %2133 = vmatprep.subr.mxu0 0.0
    %2134 = vmatpush1.msra.mxu0 0.0
    %2135 = vmatprep.subr.mxu0 0.0
    %2136 = vmatpush1.msra.mxu0 0.0
    %2137 = vmatprep.subr.mxu0 0.0
    %2138 = vmatpush1.msra.mxu0 0.0
    %2139 = vmatprep.subr.mxu0 0.0
    %2140 = vmatpush1.msra.mxu0 0.0
    %2141 = vmatprep.subr.mxu0 0.0
    %2142 = vmatpush1.msra.mxu0 0.0
    %2143 = vmatprep.subr.mxu0 0.0
    %2144 = vmatpush1.msra.mxu0 0.0
    %2145 = vmatprep.subr.mxu0 0.0
    %2146 = vmatpush1.msra.mxu0 0.0
    %2147 = vmatprep.subr.mxu0 0.0
    %2148 = vmatpush1.msra.mxu0 0.0
    %2149 = vmatprep.subr.mxu0 0.0
    %2150 = vmatpush1.msra.mxu0 0.0
    %2151 = vmatprep.subr.mxu0 0.0
    %2152 = vmatpush1.msra.mxu0 0.0
    %2153 = vmatprep.subr.mxu0 0.0
    %2154 = vmatpush1.msra.mxu0 0.0
    %2155 = vmatprep.subr.mxu0 0.0
    %2156 = vmatpush1.msra.mxu0 0.0
    %2157 = vmatprep.subr.mxu0 0.0
    %2158 = vmatpush1.msra.mxu0 0.0
    %2159 = vmatprep.subr.mxu0 0.0
    %2160 = vmatpush1.msra.mxu0 0.0
    %2161 = vmatprep.subr.mxu0 0.0
    %2162 = vmatpush1.msra.mxu0 0.0
    %2163 = vmatprep.subr.mxu0 0.0
    %2164 = vmatpush1.msra.mxu0 0.0
    %2165 = vmatprep.subr.mxu0 0.0
    %2166 = vmatpush1.msra.mxu0 0.0
    %2167 = vmatprep.subr.mxu0 0.0
    %2168 = vmatpush1.msra.mxu0 0.0
    %2169 = vmatprep.mubr.f32.mxu0 0.0
    %2170 = vmatmul.mubr.f32.gmra.mrb[0].mxu0 %v2103
    %v2171 = vpop.f32.mrb[0].mxu0
    %v2172 = vadd.f32 0.0, %v2171
    %v2173 = vpop.f32.mrb[0].mxu0
    %v2174 = vadd.f32 0.0, %v2173
    %2175 = vdwg.mxu0
    %v2178 = vcombine.low %v2172, %v2174
    %v2180 = vunpack.c.l.s4 1983009808
    %v2181 = vunpack.c.0.s8 %v2180
    %v2182 = vlaneseq
    %v2183 = vshrl.u32 %v2182, 7
    %v2184 = vsub.s32 %v2181, %v2183
    %v2185 = vrot.slane %v2178, %v2184
    %v2187 = vadd.f32 %v1500, %v2185
    %v2188 = vxor.u32 %v2187, 2147483648
    %v2189 = vmul.f32 %v2188, 1.442695
    %v2190 = vpow.pop %v2189
    %v2191 = vadd.f32 %v2190, 1.0
    %v2192 = vrcp.pop %v2191
    %v2193 = vmul.f32 1.0, %v2192
    %v2195 = vrot.slane %v2187, 2
    %v2197 = vtanh.pop %v2195
    %2198 = vrot.lane.b32.xlu0 %v2187, 64
    %v2199 = vpop.permute.xlu0 %2198
    %v2200 = vrot.slane %v2199, 2
    %v2202 = vxor.u32 %v2200, 2147483648
    %v2203 = vmul.f32 %v2202, 1.442695
    %v2204 = vpow.pop %v2203
    %v2205 = vadd.f32 %v2204, 1.0
    %v2206 = vrcp.pop %v2205
    %v2207 = vmul.f32 1.0, %v2206
    %v2208 = vmul.f32 %v2193, %v2095
    %v2209 = vmul.f32 %v2193, %v2197
    %2211 = vrot.lane.b32.xlu0 %v2209, 64
    %v2212 = vpop.permute.xlu0 %2211
    %v2214 = vadd.f32 %v2208, %v2212
    %v2215 = vtanh.pop %v2214
    %2217 = vrot.lane.b32.xlu0 %v2215, 64
    %v2218 = vpop.permute.xlu0 %2217
    %v2220 = vmul.f32 %v2207, %v2218
    %v2222 = vsel %vm364, %v2220, 0
    %2224 = vmatprep.subr.mxu0 %v131
    %2225 = vmatpush1.msra.mxu0 %v130
    %2226 = vmatprep.subr.mxu0 %v133
    %2227 = vmatpush1.msra.mxu0 %v132
    %2228 = vmatprep.subr.mxu0 %v135
    %2229 = vmatpush1.msra.mxu0 %v134
    %2230 = vmatprep.subr.mxu0 %v137
    %2231 = vmatpush1.msra.mxu0 %v136
    %2232 = vmatprep.subr.mxu0 %v139
    %2233 = vmatpush1.msra.mxu0 %v138
    %2234 = vmatprep.subr.mxu0 %v141
    %2235 = vmatpush1.msra.mxu0 %v140
    %2236 = vmatprep.subr.mxu0 %v143
    %2237 = vmatpush1.msra.mxu0 %v142
    %2238 = vmatprep.subr.mxu0 %v145
    %2239 = vmatpush1.msra.mxu0 %v144
    %2240 = vmatprep.subr.mxu0 0.0
    %2241 = vmatpush1.msra.mxu0 0.0
    %2242 = vmatprep.subr.mxu0 0.0
    %2243 = vmatpush1.msra.mxu0 0.0
    %2244 = vmatprep.subr.mxu0 0.0
    %2245 = vmatpush1.msra.mxu0 0.0
    %2246 = vmatprep.subr.mxu0 0.0
    %2247 = vmatpush1.msra.mxu0 0.0
    %2248 = vmatprep.subr.mxu0 0.0
    %2249 = vmatpush1.msra.mxu0 0.0
    %2250 = vmatprep.subr.mxu0 0.0
    %2251 = vmatpush1.msra.mxu0 0.0
    %2252 = vmatprep.subr.mxu0 0.0
    %2253 = vmatpush1.msra.mxu0 0.0
    %2254 = vmatprep.subr.mxu0 0.0
    %2255 = vmatpush1.msra.mxu0 0.0
    %2256 = vmatprep.subr.mxu0 0.0
    %2257 = vmatpush1.msra.mxu0 0.0
    %2258 = vmatprep.subr.mxu0 0.0
    %2259 = vmatpush1.msra.mxu0 0.0
    %2260 = vmatprep.subr.mxu0 0.0
    %2261 = vmatpush1.msra.mxu0 0.0
    %2262 = vmatprep.subr.mxu0 0.0
    %2263 = vmatpush1.msra.mxu0 0.0
    %2264 = vmatprep.subr.mxu0 0.0
    %2265 = vmatpush1.msra.mxu0 0.0
    %2266 = vmatprep.subr.mxu0 0.0
    %2267 = vmatpush1.msra.mxu0 0.0
    %2268 = vmatprep.subr.mxu0 0.0
    %2269 = vmatpush1.msra.mxu0 0.0
    %2270 = vmatprep.subr.mxu0 0.0
    %2271 = vmatpush1.msra.mxu0 0.0
    %2272 = vmatprep.subr.mxu0 0.0
    %2273 = vmatpush1.msra.mxu0 0.0
    %2274 = vmatprep.subr.mxu0 0.0
    %2275 = vmatpush1.msra.mxu0 0.0
    %2276 = vmatprep.subr.mxu0 0.0
    %2277 = vmatpush1.msra.mxu0 0.0
    %2278 = vmatprep.subr.mxu0 0.0
    %2279 = vmatpush1.msra.mxu0 0.0
    %2280 = vmatprep.subr.mxu0 0.0
    %2281 = vmatpush1.msra.mxu0 0.0
    %2282 = vmatprep.subr.mxu0 0.0
    %2283 = vmatpush1.msra.mxu0 0.0
    %2284 = vmatprep.subr.mxu0 0.0
    %2285 = vmatpush1.msra.mxu0 0.0
    %2286 = vmatprep.subr.mxu0 0.0
    %2287 = vmatpush1.msra.mxu0 0.0
    %2288 = vmatprep.mubr.f32.mxu0 0.0
    %2289 = vmatmul.mubr.f32.gmra.mrb[0].mxu0 %v2222
    %v2290 = vpop.f32.mrb[0].mxu0
    %v2291 = vadd.f32 0.0, %v2290
    %v2292 = vpop.f32.mrb[0].mxu0
    %v2293 = vadd.f32 0.0, %v2292
    %2294 = vdwg.mxu0
    %v2297 = vcombine.low %v2291, %v2293
    %v2299 = vunpack.c.l.s4 1983009808
    %v2300 = vunpack.c.0.s8 %v2299
    %v2301 = vlaneseq
    %v2302 = vshrl.u32 %v2301, 7
    %v2303 = vsub.s32 %v2300, %v2302
    %v2304 = vrot.slane %v2297, %v2303
    %v2306 = vadd.f32 %v1499, %v2304
    %v2307 = vxor.u32 %v2306, 2147483648
    %v2308 = vmul.f32 %v2307, 1.442695
    %v2309 = vpow.pop %v2308
    %v2310 = vadd.f32 %v2309, 1.0
    %v2311 = vrcp.pop %v2310
    %v2312 = vmul.f32 1.0, %v2311
    %v2314 = vrot.slane %v2306, 2
    %v2316 = vtanh.pop %v2314
    %2317 = vrot.lane.b32.xlu0 %v2306, 64
    %v2318 = vpop.permute.xlu0 %2317
    %v2319 = vrot.slane %v2318, 2
    %v2321 = vxor.u32 %v2319, 2147483648
    %v2322 = vmul.f32 %v2321, 1.442695
    %v2323 = vpow.pop %v2322
    %v2324 = vadd.f32 %v2323, 1.0
    %v2325 = vrcp.pop %v2324
    %v2326 = vmul.f32 1.0, %v2325
    %v2327 = vmul.f32 %v2312, %v2214
    %v2328 = vmul.f32 %v2312, %v2316
    %2330 = vrot.lane.b32.xlu0 %v2328, 64
    %v2331 = vpop.permute.xlu0 %2330
    %v2333 = vadd.f32 %v2327, %v2331
    %v2334 = vtanh.pop %v2333
    %2336 = vrot.lane.b32.xlu0 %v2334, 64
    %v2337 = vpop.permute.xlu0 %2336
    %v2339 = vmul.f32 %v2326, %v2337
    %v2341 = vsel %vm364, %v2339, 0
    %2343 = vmatprep.subr.mxu0 %v131
    %2344 = vmatpush1.msra.mxu0 %v130
    %2345 = vmatprep.subr.mxu0 %v133
    %2346 = vmatpush1.msra.mxu0 %v132
    %2347 = vmatprep.subr.mxu0 %v135
    %2348 = vmatpush1.msra.mxu0 %v134
    %2349 = vmatprep.subr.mxu0 %v137
    %2350 = vmatpush1.msra.mxu0 %v136
    %2351 = vmatprep.subr.mxu0 %v139
    %2352 = vmatpush1.msra.mxu0 %v138
    %2353 = vmatprep.subr.mxu0 %v141
    %2354 = vmatpush1.msra.mxu0 %v140
    %2355 = vmatprep.subr.mxu0 %v143
    %2356 = vmatpush1.msra.mxu0 %v142
    %2357 = vmatprep.subr.mxu0 %v145
    %2358 = vmatpush1.msra.mxu0 %v144
    %2359 = vmatprep.subr.mxu0 0.0
    %2360 = vmatpush1.msra.mxu0 0.0
    %2361 = vmatprep.subr.mxu0 0.0
    %2362 = vmatpush1.msra.mxu0 0.0
    %2363 = vmatprep.subr.mxu0 0.0
    %2364 = vmatpush1.msra.mxu0 0.0
    %2365 = vmatprep.subr.mxu0 0.0
    %2366 = vmatpush1.msra.mxu0 0.0
    %2367 = vmatprep.subr.mxu0 0.0
    %2368 = vmatpush1.msra.mxu0 0.0
    %2369 = vmatprep.subr.mxu0 0.0
    %2370 = vmatpush1.msra.mxu0 0.0
    %2371 = vmatprep.subr.mxu0 0.0
    %2372 = vmatpush1.msra.mxu0 0.0
    %2373 = vmatprep.subr.mxu0 0.0
    %2374 = vmatpush1.msra.mxu0 0.0
    %2375 = vmatprep.subr.mxu0 0.0
    %2376 = vmatpush1.msra.mxu0 0.0
    %2377 = vmatprep.subr.mxu0 0.0
    %2378 = vmatpush1.msra.mxu0 0.0
    %2379 = vmatprep.subr.mxu0 0.0
    %2380 = vmatpush1.msra.mxu0 0.0
    %2381 = vmatprep.subr.mxu0 0.0
    %2382 = vmatpush1.msra.mxu0 0.0
    %2383 = vmatprep.subr.mxu0 0.0
    %2384 = vmatpush1.msra.mxu0 0.0
    %2385 = vmatprep.subr.mxu0 0.0
    %2386 = vmatpush1.msra.mxu0 0.0
    %2387 = vmatprep.subr.mxu0 0.0
    %2388 = vmatpush1.msra.mxu0 0.0
    %2389 = vmatprep.subr.mxu0 0.0
    %2390 = vmatpush1.msra.mxu0 0.0
    %2391 = vmatprep.subr.mxu0 0.0
    %2392 = vmatpush1.msra.mxu0 0.0
    %2393 = vmatprep.subr.mxu0 0.0
    %2394 = vmatpush1.msra.mxu0 0.0
    %2395 = vmatprep.subr.mxu0 0.0
    %2396 = vmatpush1.msra.mxu0 0.0
    %2397 = vmatprep.subr.mxu0 0.0
    %2398 = vmatpush1.msra.mxu0 0.0
    %2399 = vmatprep.subr.mxu0 0.0
    %2400 = vmatpush1.msra.mxu0 0.0
    %2401 = vmatprep.subr.mxu0 0.0
    %2402 = vmatpush1.msra.mxu0 0.0
    %2403 = vmatprep.subr.mxu0 0.0
    %2404 = vmatpush1.msra.mxu0 0.0
    %2405 = vmatprep.subr.mxu0 0.0
    %2406 = vmatpush1.msra.mxu0 0.0
    %2407 = vmatprep.mubr.f32.mxu0 0.0
    %2408 = vmatmul.mubr.f32.gmra.mrb[0].mxu0 %v2341
    %v2409 = vpop.f32.mrb[0].mxu0
    %v2410 = vadd.f32 0.0, %v2409
    %v2411 = vpop.f32.mrb[0].mxu0
    %v2412 = vadd.f32 0.0, %v2411
    %2413 = vdwg.mxu0
    %v2416 = vcombine.low %v2410, %v2412
    %v2418 = vunpack.c.l.s4 1983009808
    %v2419 = vunpack.c.0.s8 %v2418
    %v2420 = vlaneseq
    %v2421 = vshrl.u32 %v2420, 7
    %v2422 = vsub.s32 %v2419, %v2421
    %v2423 = vrot.slane %v2416, %v2422
    %v2425 = vadd.f32 %v1501, %v2423
    %v2426 = vxor.u32 %v2425, 2147483648
    %v2427 = vmul.f32 %v2426, 1.442695
    %v2428 = vpow.pop %v2427
    %v2429 = vadd.f32 %v2428, 1.0
    %v2430 = vrcp.pop %v2429
    %v2431 = vmul.f32 1.0, %v2430
    %v2433 = vrot.slane %v2425, 2
    %v2435 = vtanh.pop %v2433
    %2436 = vrot.lane.b32.xlu0 %v2425, 64
    %v2437 = vpop.permute.xlu0 %2436
    %v2438 = vrot.slane %v2437, 2
    %v2440 = vxor.u32 %v2438, 2147483648
    %v2441 = vmul.f32 %v2440, 1.442695
    %v2442 = vpow.pop %v2441
    %v2443 = vadd.f32 %v2442, 1.0
    %v2444 = vrcp.pop %v2443
    %v2445 = vmul.f32 1.0, %v2444
    %v2446 = vmul.f32 %v2431, %v2333
    %v2447 = vmul.f32 %v2431, %v2435
    %2449 = vrot.lane.b32.xlu0 %v2447, 64
    %v2450 = vpop.permute.xlu0 %2449
    %v2452 = vadd.f32 %v2446, %v2450
    %v2453 = vtanh.pop %v2452
    %2455 = vrot.lane.b32.xlu0 %v2453, 64
    %v2456 = vpop.permute.xlu0 %2455
    %v2458 = vmul.f32 %v2445, %v2456
    %v2460 = vlaneseq
    %v2461 = vshrl.u32 %v2460, 7
    %v2462 = vsub.s32 0, %v2461
    %v2463 = vrot.slane %v155, %v2462
    %v2465 = vcombine.low %v1625, %v1744
    %v2466 = vcombine.low %v1863, %v1982
    %v2468 = vunpack.c.l.s4 1983009808
    %v2469 = vunpack.c.0.s8 %v2468
    %v2470 = vlaneseq
    %v2471 = vshrl.u32 %v2470, 7
    %v2472 = vsub.s32 %v2469, %v2471
    %v2473 = vrot.slane %v2465, %v2472
    %v2475 = vunpack.c.l.s4 1983009808
    %v2476 = vunpack.c.0.s8 %v2475
    %v2477 = vlaneseq
    %v2478 = vshrl.u32 %v2477, 7
    %v2479 = vsub.s32 %v2476, %v2478
    %v2480 = vrot.slane %v2466, %v2479
    %v2481 = vcombine.low %v2473, %v2480
    %v2482 = vcombine.low %v2101, %v2220
    %v2483 = vcombine.low %v2339, %v2458
    %v2485 = vunpack.c.l.s4 1983009808
    %v2486 = vunpack.c.0.s8 %v2485
    %v2487 = vlaneseq
    %v2488 = vshrl.u32 %v2487, 7
    %v2489 = vsub.s32 %v2486, %v2488
    %v2490 = vrot.slane %v2482, %v2489
    %v2492 = vunpack.c.l.s4 1983009808
    %v2493 = vunpack.c.0.s8 %v2492
    %v2494 = vlaneseq
    %v2495 = vshrl.u32 %v2494, 7
    %v2496 = vsub.s32 %v2493, %v2495
    %v2497 = vrot.slane %v2483, %v2496
    %v2498 = vcombine.low %v2490, %v2497
    %v2499 = vcombine.low %v2463, %v2463
    %v2501 = vunpack.c.l.s4 1983009808
    %v2502 = vunpack.c.0.s8 %v2501
    %v2503 = vlaneseq
    %v2504 = vshrl.u32 %v2503, 7
    %v2505 = vsub.s32 %v2502, %v2504
    %v2506 = vrot.slane %v2499, %v2505
    %v2507 = vcombine.low %v2506, %v2506
    %v2509 = vsel %vm364, %v2481, 0
    %v2511 = vsel %vm364, %v2498, 0
    %2513 = vmatprep.subr.mxu0 0.0
    %2514 = vmatpush1.msra.mxu0 %v147
    %2515 = vmatprep.subr.mxu0 0.0
    %2516 = vmatpush1.msra.mxu0 %v148
    %2517 = vmatprep.subr.mxu0 0.0
    %2518 = vmatpush1.msra.mxu0 %v149
    %2519 = vmatprep.subr.mxu0 0.0
    %2520 = vmatpush1.msra.mxu0 %v150
    %2521 = vmatprep.subr.mxu0 0.0
    %2522 = vmatpush1.msra.mxu0 %v151
    %2523 = vmatprep.subr.mxu0 0.0
    %2524 = vmatpush1.msra.mxu0 %v152
    %2525 = vmatprep.subr.mxu0 0.0
    %2526 = vmatpush1.msra.mxu0 %v153
    %2527 = vmatprep.subr.mxu0 0.0
    %2528 = vmatpush1.msra.mxu0 %v154
    %2529 = vmatprep.subr.mxu0 0.0
    %2530 = vmatpush1.msra.mxu0 0.0
    %2531 = vmatprep.subr.mxu0 0.0
    %2532 = vmatpush1.msra.mxu0 0.0
    %2533 = vmatprep.subr.mxu0 0.0
    %2534 = vmatpush1.msra.mxu0 0.0
    %2535 = vmatprep.subr.mxu0 0.0
    %2536 = vmatpush1.msra.mxu0 0.0
    %2537 = vmatprep.subr.mxu0 0.0
    %2538 = vmatpush1.msra.mxu0 0.0
    %2539 = vmatprep.subr.mxu0 0.0
    %2540 = vmatpush1.msra.mxu0 0.0
    %2541 = vmatprep.subr.mxu0 0.0
    %2542 = vmatpush1.msra.mxu0 0.0
    %2543 = vmatprep.subr.mxu0 0.0
    %2544 = vmatpush1.msra.mxu0 0.0
    %2545 = vmatprep.subr.mxu0 0.0
    %2546 = vmatpush1.msra.mxu0 0.0
    %2547 = vmatprep.subr.mxu0 0.0
    %2548 = vmatpush1.msra.mxu0 0.0
    %2549 = vmatprep.subr.mxu0 0.0
    %2550 = vmatpush1.msra.mxu0 0.0
    %2551 = vmatprep.subr.mxu0 0.0
    %2552 = vmatpush1.msra.mxu0 0.0
    %2553 = vmatprep.subr.mxu0 0.0
    %2554 = vmatpush1.msra.mxu0 0.0
    %2555 = vmatprep.subr.mxu0 0.0
    %2556 = vmatpush1.msra.mxu0 0.0
    %2557 = vmatprep.subr.mxu0 0.0
    %2558 = vmatpush1.msra.mxu0 0.0
    %2559 = vmatprep.subr.mxu0 0.0
    %2560 = vmatpush1.msra.mxu0 0.0
    %2561 = vmatprep.subr.mxu0 0.0
    %2562 = vmatpush1.msra.mxu0 0.0
    %2563 = vmatprep.subr.mxu0 0.0
    %2564 = vmatpush1.msra.mxu0 0.0
    %2565 = vmatprep.subr.mxu0 0.0
    %2566 = vmatpush1.msra.mxu0 0.0
    %2567 = vmatprep.subr.mxu0 0.0
    %2568 = vmatpush1.msra.mxu0 0.0
    %2569 = vmatprep.subr.mxu0 0.0
    %2570 = vmatpush1.msra.mxu0 0.0
    %2571 = vmatprep.subr.mxu0 0.0
    %2572 = vmatpush1.msra.mxu0 0.0
    %2573 = vmatprep.subr.mxu0 0.0
    %2574 = vmatpush1.msra.mxu0 0.0
    %2575 = vmatprep.subr.mxu0 0.0
    %2576 = vmatpush1.msra.mxu0 0.0
    %2577 = vmatprep.mubr.f32.mxu0 0.0
    %2578 = vmatmul.mubr.f32.gmra.mrb[0].mxu0 %v2509
    %v2579 = vpop.f32.mrb[0].mxu0
    %v2580 = vadd.f32 %v2507, %v2579
    %v2581 = vpop.f32.mrb[0].mxu0
    %2582 = vmatprep.mubr.f32.mxu0 0.0
    %2583 = vmatmul.mubr.f32.gmra.mrb[0].mxu0 %v2511
    %v2584 = vpop.f32.mrb[0].mxu0
    %v2585 = vadd.f32 %v2507, %v2584
    %v2586 = vpop.f32.mrb[0].mxu0
    %2587 = vdwg.mxu0
    %v2590 = vcombine.high %v2580, %v2580
    %v2592 = vunpack.c.l.s4 1983009808
    %v2593 = vunpack.c.0.s8 %v2592
    %v2594 = vlaneseq
    %v2595 = vshrl.u32 %v2594, 7
    %v2596 = vsub.s32 %v2593, %v2595
    %v2597 = vrot.slane %v2580, %v2596
    %v2599 = vunpack.c.l.s4 1983009808
    %v2600 = vunpack.c.0.s8 %v2599
    %v2601 = vlaneseq
    %v2602 = vshrl.u32 %v2601, 7
    %v2603 = vsub.s32 %v2600, %v2602
    %v2604 = vrot.slane %v2590, %v2603
    %v2605 = vcombine.high %v2597, %v2597
    %v2606 = vcombine.high %v2604, %v2604
    %v2607 = vcombine.high %v2585, %v2585
    %v2609 = vunpack.c.l.s4 1983009808
    %v2610 = vunpack.c.0.s8 %v2609
    %v2611 = vlaneseq
    %v2612 = vshrl.u32 %v2611, 7
    %v2613 = vsub.s32 %v2610, %v2612
    %v2614 = vrot.slane %v2585, %v2613
    %v2616 = vunpack.c.l.s4 1983009808
    %v2617 = vunpack.c.0.s8 %v2616
    %v2618 = vlaneseq
    %v2619 = vshrl.u32 %v2618, 7
    %v2620 = vsub.s32 %v2617, %v2619
    %v2621 = vrot.slane %v2607, %v2620
    %v2622 = vcombine.high %v2614, %v2614
    %v2623 = vcombine.high %v2621, %v2621
    %vm2632 = vcmask 1024
    %2633 = vst.msk [vmem:[%s9] sm:$0x3] %vm2632, %v2597
    %2634 = vst.msk [vmem:[%s9 + $0x2] sm:$0x3] %vm2632, %v2605
    %2635 = vst.msk [vmem:[%s9 + $0x4] sm:$0x3] %vm2632, %v2604
    %2636 = vst.msk [vmem:[%s9 + $0x6] sm:$0x3] %vm2632, %v2606
    %2637 = vst.msk [vmem:[%s9 + $0x8] sm:$0x3] %vm2632, %v2614
    %2638 = vst.msk [vmem:[%s9 + $0xa] sm:$0x3] %vm2632, %v2622
    %2639 = vst.msk [vmem:[%s9 + $0xc] sm:$0x3] %vm2632, %v2621
    %2640 = vst.msk [vmem:[%s9 + $0xe] sm:$0x3] %vm2632, %v2623
    // Predicated region
    $region50: #{lstm_model_forward.1} parent=1 // pred_check
      _
    $region51: #{lstm_model_forward.1} parent=1 // pred_check_branch
      %2642 = sbr.rel (0) target = $region53
    $region52: #{lstm_model_forward.1} parent=1 // pred_region
      _
    $region53: #{lstm_model_forward.1} parent=1 // pred_fallthru
      _
    // Predicated region
    $region54: #{lstm_model_forward.1} parent=1 // pred_check
      _
    $region55: #{lstm_model_forward.1} parent=1 // pred_check_branch
      %2644 = sbr.rel (0) target = $region57
    $region56: #{lstm_model_forward.1} parent=1 // pred_region
      _
    $region57: #{lstm_model_forward.1} parent=1 // pred_fallthru
      _
    %2645 = vsyncpa [#allocation4], 1
    %2646 = vsyncpa [#allocation6], 1

</llo_original>
